<compile_context>
chip_gen: v7x
topology: tpu7x:2x2x1
jax: 0.10.0
libtpu: 0.0.40
codegen_flags: <defaults>
</compile_context>

<pallas_src>
import jax
import jax.numpy as jnp
from jax.experimental import pallas as pl
from jax.experimental.pallas import tpu as pltpu

K_IN = 2800          # feature dim (kept unpadded; block == full dim is legal)
N_OUT = 28           # original output dim
N_PAD = 128          # padded output dim (lane-dense last matmul / store)
TM_MAX = 512         # max batch tile (rows per grid step)
SPLIT_MIN_B = 256    # batches larger than this get >= 2 (even) grid blocks


def _round_up(n, m):
    return ((n + m - 1) // m) * m


def _cdiv(a, b):
    return -(-a // b)


def _prelu(x, alpha):
    # PReLU(x) = x if x > 0 else alpha * x
    return jnp.where(x > 0, x, alpha * x)


def encoder_kernel(alpha_ref,                       # SMEM (3,) PReLU alphas (scalar prefetch)
                   x_ref,                           # VMEM (tm, 2800) f32
                   w1_ref, b1_ref,                  # (2800,512) bf16, (1,512) f32
                   w2_ref, b2_ref,                  # (512,256)  bf16, (1,256) f32
                   w3_ref, b3_ref,                  # (256,128)  bf16, (1,128) f32
                   w4_ref, b4_ref,                  # (128,128)  bf16, (1,128) f32
                   o_ref):                          # VMEM (tm, 128) f32
    a0 = alpha_ref[0]
    a1 = alpha_ref[1]
    a2 = alpha_ref[2]

    # Cast inside the kernel (VPU work is free under the HBM/MXU bottleneck).
    x = x_ref[...].astype(jnp.bfloat16)

    h = jnp.dot(x, w1_ref[...], preferred_element_type=jnp.float32)
    h = _prelu(h + b1_ref[...], a0).astype(jnp.bfloat16)

    h = jnp.dot(h, w2_ref[...], preferred_element_type=jnp.float32)
    h = _prelu(h + b2_ref[...], a1).astype(jnp.bfloat16)

    h = jnp.dot(h, w3_ref[...], preferred_element_type=jnp.float32)
    h = _prelu(h + b3_ref[...], a2).astype(jnp.bfloat16)

    h = jnp.dot(h, w4_ref[...], preferred_element_type=jnp.float32)
    o_ref[...] = (h + b4_ref[...]).astype(o_ref.dtype)


def prepare_params(params):
    """Cast weights to bf16; pad only the tiny last layer (done once)."""
    p = {}
    p["w1"] = params["w1"].astype(jnp.bfloat16)               # (2800, 512)
    p["w2"] = params["w2"].astype(jnp.bfloat16)               # (512, 256)
    p["w3"] = params["w3"].astype(jnp.bfloat16)               # (256, 128)
    p["w4"] = jnp.pad(params["w4"].astype(jnp.bfloat16),
                      ((0, 0), (0, N_PAD - N_OUT)))           # (128, 128)
    p["b1"] = params["b1"]                                    # (1, 512) f32
    p["b2"] = params["b2"]                                    # (1, 256) f32
    p["b3"] = params["b3"]                                    # (1, 128) f32
    p["b4"] = jnp.pad(params["b4"], ((0, 0), (0, N_PAD - N_OUT)))  # (1, 128) f32
    p["alphas"] = params["alphas"]                            # (3,) f32
    return p


def _pick_tile(B):
    """Pick (tm, n_blocks).

    Small batches run as a single full-extent block (no padding constraints).
    Larger batches are split into an even number of near-equal blocks so both
    v7x TensorCores get balanced work; tiles are capped at TM_MAX rows.
    The grid uses cdiv, so the last block may be partial (Pallas clips the
    boundary DMA/stores; rows are independent so this is safe).
    """
    if B <= SPLIT_MIN_B:
        return B, 1
    n_blocks = 2 * _cdiv(B, 2 * TM_MAX)            # even, >= 2
    tm = min(TM_MAX, _round_up(_cdiv(B, n_blocks), 8))
    n_blocks = _cdiv(B, tm)
    return tm, n_blocks


def encoder_forward(x, prepared):
    """x: (B, 2800) f32. prepared: output of prepare_params. Returns (B, 28) f32."""
    B, K = x.shape
    assert K == K_IN

    tm, n_blocks = _pick_tile(B)

    const = lambda i, alphas: (0, 0)   # weights/biases stay VMEM-resident

    out = pl.pallas_call(
        encoder_kernel,
        out_shape=jax.ShapeDtypeStruct((B, N_PAD), jnp.float32),
        grid_spec=pltpu.PrefetchScalarGridSpec(
            num_scalar_prefetch=1,                 # alphas -> SMEM
            grid=(n_blocks,),
            in_specs=[
                pl.BlockSpec((tm, K_IN), lambda i, alphas: (i, 0)),    # x (f32)
                pl.BlockSpec((K_IN, 512), const),                       # w1
                pl.BlockSpec((1, 512), const),                          # b1
                pl.BlockSpec((512, 256), const),                        # w2
                pl.BlockSpec((1, 256), const),                          # b2
                pl.BlockSpec((256, 128), const),                        # w3
                pl.BlockSpec((1, 128), const),                          # b3
                pl.BlockSpec((128, N_PAD), const),                      # w4
                pl.BlockSpec((1, N_PAD), const),                        # b4
            ],
            out_specs=pl.BlockSpec((tm, N_PAD), lambda i, alphas: (i, 0)),
        ),
        compiler_params=pltpu.CompilerParams(
            dimension_semantics=("parallel",),     # shard batch blocks across TCs (v7x)
            vmem_limit_bytes=32 << 20,
        ),
    )(prepared["alphas"], x,
      prepared["w1"], prepared["b1"],
      prepared["w2"], prepared["b2"],
      prepared["w3"], prepared["b3"],
      prepared["w4"], prepared["b4"])

    return out[:, :N_OUT]


def init_params(key):
    """Deterministic init mimicking nn.Linear default (uniform +-1/sqrt(fan_in)).

    Weights are stored pre-transposed to (in, out); biases as (1, out).
    PReLU alphas default to 0.25 (one scalar per PReLU layer).
    """
    dims = [(K_IN, 512), (512, 256), (256, 128), (128, N_OUT)]
    params = {}
    keys = jax.random.split(key, 2 * len(dims))
    for i, (fan_in, fan_out) in enumerate(dims):
        bound = 1.0 / jnp.sqrt(jnp.float32(fan_in))
        w = jax.random.uniform(keys[2 * i], (fan_in, fan_out),
                               minval=-bound, maxval=bound, dtype=jnp.float32)
        b = jax.random.uniform(keys[2 * i + 1], (1, fan_out),
                               minval=-bound, maxval=bound, dtype=jnp.float32)
        params[f"w{i + 1}"] = w
        params[f"b{i + 1}"] = b
    params["alphas"] = jnp.full((3,), 0.25, dtype=jnp.float32)
    return params


def encoder_reference(x, params):
    """Pure-JAX reference mirroring the kernel's bf16-weight / f32-accum flow."""
    def q(a):  # round to bf16 values, compute in f32
        return a.astype(jnp.bfloat16).astype(jnp.float32)

    h = q(x) @ q(params["w1"]) + params["b1"]
    h = _prelu(h, params["alphas"][0])
    h = q(h) @ q(params["w2"]) + params["b2"]
    h = _prelu(h, params["alphas"][1])
    h = q(h) @ q(params["w3"]) + params["b3"]
    h = _prelu(h, params["alphas"][2])
    return q(h) @ q(params["w4"]) + params["b4"]


if __name__ == "__main__":
    key = jax.random.PRNGKey(0)
    k_param, k_x1, k_x2 = jax.random.split(key, 3)

    params = init_params(k_param)
    prepared = prepare_params(params)

    # 1) Small-batch path: single full-extent block, no padding anywhere.
    x_small = jax.random.normal(k_x1, (8, K_IN), dtype=jnp.float32)
    out_small = jax.block_until_ready(encoder_forward(x_small, prepared))
    ref_small = encoder_reference(x_small, params)
    assert out_small.shape == (8, N_OUT), out_small.shape
    assert jnp.allclose(out_small, ref_small, atol=5e-3, rtol=5e-3), (
        "small-batch mismatch: max abs diff = %g"
        % float(jnp.max(jnp.abs(out_small - ref_small))))

    # 2) Multi-block path: 2 balanced blocks with a partial last block
    #    (exercises the v7x two-TensorCore split and the cdiv grid).
    x_big = jax.random.normal(k_x2, (300, K_IN), dtype=jnp.float32)
    out_big = jax.block_until_ready(encoder_forward(x_big, prepared))
    ref_big = encoder_reference(x_big, params)
    assert out_big.shape == (300, N_OUT), out_big.shape
    assert jnp.allclose(out_big, ref_big, atol=5e-3, rtol=5e-3), (
        "multi-block mismatch: max abs diff = %g"
        % float(jnp.max(jnp.abs(out_big - ref_big))))

    print("KERNEL_OK")
</pallas_src>

<mosaic_0001>
module attributes {stable_mosaic.version = 11 : i64} {
  func.func @encoder_kernel(%arg0: i32, %arg1: memref<3xf32, #tpu.memory_space<smem>>, %arg2: memref<8x2800xf32, #tpu.memory_space<vmem>>, %arg3: memref<2800x512xbf16, #tpu.memory_space<vmem>>, %arg4: memref<1x512xf32, #tpu.memory_space<vmem>>, %arg5: memref<512x256xbf16, #tpu.memory_space<vmem>>, %arg6: memref<1x256xf32, #tpu.memory_space<vmem>>, %arg7: memref<256x128xbf16, #tpu.memory_space<vmem>>, %arg8: memref<1x128xf32, #tpu.memory_space<vmem>>, %arg9: memref<128x128xbf16, #tpu.memory_space<vmem>>, %arg10: memref<1x128xf32, #tpu.memory_space<vmem>>, %arg11: memref<8x128xf32, #tpu.memory_space<vmem>>) attributes {dimension_semantics = [#tpu.dimension_semantics<parallel>], iteration_bounds = array<i64: 1>, scalar_prefetch = 1 : i64, scratch_operands = 0 : i64, tpu.core_type = #tpu.core_type<tc>, window_params = [{transform_indices = @transform_0, window_bounds = array<i64: 8, 2800>}, {pipeline_mode = #tpu.pipeline_mode<synchronous>, transform_indices = @transform_1, window_bounds = array<i64: 2800, 512>}, {pipeline_mode = #tpu.pipeline_mode<synchronous>, transform_indices = @transform_2, window_bounds = array<i64: 1, 512>}, {pipeline_mode = #tpu.pipeline_mode<synchronous>, transform_indices = @transform_3, window_bounds = array<i64: 512, 256>}, {pipeline_mode = #tpu.pipeline_mode<synchronous>, transform_indices = @transform_4, window_bounds = array<i64: 1, 256>}, {pipeline_mode = #tpu.pipeline_mode<synchronous>, transform_indices = @transform_5, window_bounds = array<i64: 256, 128>}, {pipeline_mode = #tpu.pipeline_mode<synchronous>, transform_indices = @transform_6, window_bounds = array<i64: 1, 128>}, {pipeline_mode = #tpu.pipeline_mode<synchronous>, transform_indices = @transform_7, window_bounds = array<i64: 128, 128>}, {pipeline_mode = #tpu.pipeline_mode<synchronous>, transform_indices = @transform_8, window_bounds = array<i64: 1, 128>}, {transform_indices = @transform_9, window_bounds = array<i64: 8, 128>}]} {
    %c0 = arith.constant 0 : index
    %0 = memref.load %arg1[%c0] : memref<3xf32, #tpu.memory_space<smem>>
    %c1 = arith.constant 1 : index
    %1 = memref.load %arg1[%c1] : memref<3xf32, #tpu.memory_space<smem>>
    %c2 = arith.constant 2 : index
    %2 = memref.load %arg1[%c2] : memref<3xf32, #tpu.memory_space<smem>>
    %c0_0 = arith.constant 0 : index
    %c0_1 = arith.constant 0 : index
    %3 = vector.load %arg2[%c0_0, %c0_1] : memref<8x2800xf32, #tpu.memory_space<vmem>>, vector<8x2800xf32>
    %4 = arith.truncf %3 : vector<8x2800xf32> to vector<8x2800xbf16>
    %c0_2 = arith.constant 0 : index
    %c0_3 = arith.constant 0 : index
    %5 = vector.load %arg3[%c0_2, %c0_3] : memref<2800x512xbf16, #tpu.memory_space<vmem>>, vector<2800x512xbf16>
    %cst = arith.constant dense<0.000000e+00> : vector<8x512xf32>
    %6 = tpu.matmul %4, %5, %cst {dimension_numbers = #tpu.dot_dimension_numbers<[1], [0], [0], [1], [0, 0, 1, 1], [], []>} : vector<8x2800xbf16>, vector<2800x512xbf16>, vector<8x512xf32> -> vector<8x512xf32>
    %c0_4 = arith.constant 0 : index
    %c0_5 = arith.constant 0 : index
    %7 = vector.load %arg4[%c0_4, %c0_5] : memref<1x512xf32, #tpu.memory_space<vmem>>, vector<1x512xf32>
    %8 = vector.broadcast %7 : vector<1x512xf32> to vector<8x512xf32>
    %9 = arith.addf %6, %8 : vector<8x512xf32>
    %cst_6 = arith.constant 0.000000e+00 : f32
    %10 = vector.broadcast %cst_6 : f32 to vector<8x512xf32>
    %11 = arith.cmpf ogt, %9, %10 : vector<8x512xf32>
    %12 = vector.broadcast %0 : f32 to vector<8x512xf32>
    %13 = arith.mulf %12, %9 : vector<8x512xf32>
    %14 = arith.select %11, %9, %13 : vector<8x512xi1>, vector<8x512xf32>
    %15 = arith.truncf %14 : vector<8x512xf32> to vector<8x512xbf16>
    %c0_7 = arith.constant 0 : index
    %c0_8 = arith.constant 0 : index
    %16 = vector.load %arg5[%c0_7, %c0_8] : memref<512x256xbf16, #tpu.memory_space<vmem>>, vector<512x256xbf16>
    %cst_9 = arith.constant dense<0.000000e+00> : vector<8x256xf32>
    %17 = tpu.matmul %15, %16, %cst_9 {dimension_numbers = #tpu.dot_dimension_numbers<[1], [0], [0], [1], [0, 0, 1, 1], [], []>} : vector<8x512xbf16>, vector<512x256xbf16>, vector<8x256xf32> -> vector<8x256xf32>
    %c0_10 = arith.constant 0 : index
    %c0_11 = arith.constant 0 : index
    %18 = vector.load %arg6[%c0_10, %c0_11] : memref<1x256xf32, #tpu.memory_space<vmem>>, vector<1x256xf32>
    %19 = vector.broadcast %18 : vector<1x256xf32> to vector<8x256xf32>
    %20 = arith.addf %17, %19 : vector<8x256xf32>
    %cst_12 = arith.constant 0.000000e+00 : f32
    %21 = vector.broadcast %cst_12 : f32 to vector<8x256xf32>
    %22 = arith.cmpf ogt, %20, %21 : vector<8x256xf32>
    %23 = vector.broadcast %1 : f32 to vector<8x256xf32>
    %24 = arith.mulf %23, %20 : vector<8x256xf32>
    %25 = arith.select %22, %20, %24 : vector<8x256xi1>, vector<8x256xf32>
    %26 = arith.truncf %25 : vector<8x256xf32> to vector<8x256xbf16>
    %c0_13 = arith.constant 0 : index
    %c0_14 = arith.constant 0 : index
    %27 = vector.load %arg7[%c0_13, %c0_14] : memref<256x128xbf16, #tpu.memory_space<vmem>>, vector<256x128xbf16>
    %cst_15 = arith.constant dense<0.000000e+00> : vector<8x128xf32>
    %28 = tpu.matmul %26, %27, %cst_15 {dimension_numbers = #tpu.dot_dimension_numbers<[1], [0], [0], [1], [0, 0, 1, 1], [], []>} : vector<8x256xbf16>, vector<256x128xbf16>, vector<8x128xf32> -> vector<8x128xf32>
    %c0_16 = arith.constant 0 : index
    %c0_17 = arith.constant 0 : index
    %29 = vector.load %arg8[%c0_16, %c0_17] : memref<1x128xf32, #tpu.memory_space<vmem>>, vector<1x128xf32>
    %30 = vector.broadcast %29 : vector<1x128xf32> to vector<8x128xf32>
    %31 = arith.addf %28, %30 : vector<8x128xf32>
    %cst_18 = arith.constant 0.000000e+00 : f32
    %32 = vector.broadcast %cst_18 : f32 to vector<8x128xf32>
    %33 = arith.cmpf ogt, %31, %32 : vector<8x128xf32>
    %34 = vector.broadcast %2 : f32 to vector<8x128xf32>
    %35 = arith.mulf %34, %31 : vector<8x128xf32>
    %36 = arith.select %33, %31, %35 : vector<8x128xi1>, vector<8x128xf32>
    %37 = arith.truncf %36 : vector<8x128xf32> to vector<8x128xbf16>
    %c0_19 = arith.constant 0 : index
    %c0_20 = arith.constant 0 : index
    %38 = vector.load %arg9[%c0_19, %c0_20] : memref<128x128xbf16, #tpu.memory_space<vmem>>, vector<128x128xbf16>
    %cst_21 = arith.constant dense<0.000000e+00> : vector<8x128xf32>
    %39 = tpu.matmul %37, %38, %cst_21 {dimension_numbers = #tpu.dot_dimension_numbers<[1], [0], [0], [1], [0, 0, 1, 1], [], []>} : vector<8x128xbf16>, vector<128x128xbf16>, vector<8x128xf32> -> vector<8x128xf32>
    %c0_22 = arith.constant 0 : index
    %c0_23 = arith.constant 0 : index
    %40 = vector.load %arg10[%c0_22, %c0_23] : memref<1x128xf32, #tpu.memory_space<vmem>>, vector<1x128xf32>
    %41 = vector.broadcast %40 : vector<1x128xf32> to vector<8x128xf32>
    %42 = arith.addf %39, %41 : vector<8x128xf32>
    %c0_24 = arith.constant 0 : index
    %c0_25 = arith.constant 0 : index
    %43 = vector.load %arg11[%c0_24, %c0_25] : memref<8x128xf32, #tpu.memory_space<vmem>>, vector<8x128xf32>
    tpu.vector_store %arg11[%c0_24, %c0_25], %42 {strides = array<i32>} : memref<8x128xf32, #tpu.memory_space<vmem>>, vector<8x128xf32>,
    return
  }
  func.func @transform_0(%arg0: i32, %arg1: memref<3xf32, #tpu.memory_space<smem>>) -> (i32, i32) {
    %c0_i32 = arith.constant 0 : i32
    %c0_i32_0 = arith.constant 0 : i32
    return %arg0, %c0_i32 : i32, i32
  }
  func.func @transform_1(%arg0: i32, %arg1: memref<3xf32, #tpu.memory_space<smem>>) -> (i32, i32) {
    %c0_i32 = arith.constant 0 : i32
    %c0_i32_0 = arith.constant 0 : i32
    %c0_i32_1 = arith.constant 0 : i32
    return %c0_i32, %c0_i32_0 : i32, i32
  }
  func.func @transform_2(%arg0: i32, %arg1: memref<3xf32, #tpu.memory_space<smem>>) -> (i32, i32) {
    %c0_i32 = arith.constant 0 : i32
    %c0_i32_0 = arith.constant 0 : i32
    %c0_i32_1 = arith.constant 0 : i32
    return %c0_i32, %c0_i32_0 : i32, i32
  }
  func.func @transform_3(%arg0: i32, %arg1: memref<3xf32, #tpu.memory_space<smem>>) -> (i32, i32) {
    %c0_i32 = arith.constant 0 : i32
    %c0_i32_0 = arith.constant 0 : i32
    %c0_i32_1 = arith.constant 0 : i32
    return %c0_i32, %c0_i32_0 : i32, i32
  }
  func.func @transform_4(%arg0: i32, %arg1: memref<3xf32, #tpu.memory_space<smem>>) -> (i32, i32) {
    %c0_i32 = arith.constant 0 : i32
    %c0_i32_0 = arith.constant 0 : i32
    %c0_i32_1 = arith.constant 0 : i32
    return %c0_i32, %c0_i32_0 : i32, i32
  }
  func.func @transform_5(%arg0: i32, %arg1: memref<3xf32, #tpu.memory_space<smem>>) -> (i32, i32) {
    %c0_i32 = arith.constant 0 : i32
    %c0_i32_0 = arith.constant 0 : i32
    %c0_i32_1 = arith.constant 0 : i32
    return %c0_i32, %c0_i32_0 : i32, i32
  }
  func.func @transform_6(%arg0: i32, %arg1: memref<3xf32, #tpu.memory_space<smem>>) -> (i32, i32) {
    %c0_i32 = arith.constant 0 : i32
    %c0_i32_0 = arith.constant 0 : i32
    %c0_i32_1 = arith.constant 0 : i32
    return %c0_i32, %c0_i32_0 : i32, i32
  }
  func.func @transform_7(%arg0: i32, %arg1: memref<3xf32, #tpu.memory_space<smem>>) -> (i32, i32) {
    %c0_i32 = arith.constant 0 : i32
    %c0_i32_0 = arith.constant 0 : i32
    %c0_i32_1 = arith.constant 0 : i32
    return %c0_i32, %c0_i32_0 : i32, i32
  }
  func.func @transform_8(%arg0: i32, %arg1: memref<3xf32, #tpu.memory_space<smem>>) -> (i32, i32) {
    %c0_i32 = arith.constant 0 : i32
    %c0_i32_0 = arith.constant 0 : i32
    %c0_i32_1 = arith.constant 0 : i32
    return %c0_i32, %c0_i32_0 : i32, i32
  }
  func.func @transform_9(%arg0: i32, %arg1: memref<3xf32, #tpu.memory_space<smem>>) -> (i32, i32) {
    %c0_i32 = arith.constant 0 : i32
    %c0_i32_0 = arith.constant 0 : i32
    return %arg0, %c0_i32 : i32, i32
  }
}

</mosaic_0001>

<llo_original>
// kernel: tpu_custom_call.1
$region0: #{tpu_custom_call.1}
  #allocation0 [shape = 'u32[]', space=smem, size = 0x4, offset = 0x4, fixed_abs, tag = 'smem constant byte address 0x4 - core index']
  #allocation1 [shape = 'u32[144,128]{1,0:T(1,128)}', space=vmem, size = 0x12000, scoped, tag = 'internal scratch']
  #allocation2 [shape = 's32[1]{0}', space=sflag, size = 0x4, scoped, tag = 'scoped memory for tpu_custom_call.1']
  #allocation3 [shape = 'u8[512]{0}', space=smem, size = 0x200, scoped, tag = 'prefetched SMEM operand 0']
  %s0 = inlined_call_operand.hbm [shape: f32[3], index: 0, kind: input, shape index: {}]
  %s1 = inlined_call_operand.hbm [shape: f32[8,2800], index: 1, kind: input, shape index: {}]
  %s2 = inlined_call_operand.hbm [shape: bf16[2800,512], index: 2, kind: input, shape index: {}]
  %s3 = inlined_call_operand.hbm [shape: f32[1,512], index: 3, kind: input, shape index: {}]
  %s4 = inlined_call_operand.hbm [shape: bf16[512,256], index: 4, kind: input, shape index: {}]
  %s5 = inlined_call_operand.hbm [shape: f32[1,256], index: 5, kind: input, shape index: {}]
  %s6 = inlined_call_operand.hbm [shape: bf16[256,128], index: 6, kind: input, shape index: {}]
  %s7 = inlined_call_operand.hbm [shape: f32[1,128], index: 7, kind: input, shape index: {}]
  %s8 = inlined_call_operand.hbm [shape: bf16[128,128], index: 8, kind: input, shape index: {}]
  %s9 = inlined_call_operand.hbm [shape: f32[1,128], index: 9, kind: input, shape index: {}]
  %s10 = inlined_call_operand.hbm [shape: f32[8,128], index: 10, kind: output, shape index: {}]
  %s11 = sld [smem:[#allocation0]]
  $region82: #{tpu_custom_call.1} parent=0
    _
  %s13 = ssub.s32 1, %s11
  %s14 = scalar_select 0, %s13, %s11
  %16 = dma.hbm_to_smem %s0, 16, [#allocation3], [#allocation2]
  %17 = dma.done [#allocation2], 16
  %18 = sfence
  $region1: #{tpu_custom_call.1} parent=0
    #allocation4 [shape = 'u8[90112]{0}', space=vmem, size = 0x16000, scoped, tag = 'input window, operand 1, single buffered']
    #allocation5 [shape = 's32[1]{0}', space=sflag, size = 0x4, scoped, tag = 'scoped memory for tpu_custom_call.1']
    #allocation6 [shape = 's32[1]{0}', space=sflag, size = 0x4, scoped, tag = 'scoped memory for tpu_custom_call.1']
    #allocation7 [shape = 'u8[2867200]{0}', space=vmem, size = 0x2bc000, scoped, tag = 'input window, operand 2, single buffered']
    #allocation8 [shape = 's32[1]{0}', space=sflag, size = 0x4, scoped, tag = 'scoped memory for tpu_custom_call.1']
    #allocation9 [shape = 'u8[2048]{0}', space=vmem, size = 0x800, scoped, tag = 'input window, operand 3, single buffered']
    #allocation10 [shape = 'u8[262144]{0}', space=vmem, size = 0x40000, scoped, tag = 'input window, operand 4, single buffered']
    #allocation11 [shape = 's32[1]{0}', space=sflag, size = 0x4, scoped, tag = 'scoped memory for tpu_custom_call.1']
    #allocation12 [shape = 'u8[1024]{0}', space=vmem, size = 0x400, scoped, tag = 'input window, operand 5, single buffered']
    #allocation13 [shape = 'u8[65536]{0}', space=vmem, size = 0x10000, scoped, tag = 'input window, operand 6, single buffered']
    #allocation14 [shape = 's32[1]{0}', space=sflag, size = 0x4, scoped, tag = 'scoped memory for tpu_custom_call.1']
    #allocation15 [shape = 'u8[512]{0}', space=vmem, size = 0x400, scoped, tag = 'input window, operand 7, single buffered']
    #allocation16 [shape = 'u8[32768]{0}', space=vmem, size = 0x8000, scoped, tag = 'input window, operand 8, single buffered']
    #allocation17 [shape = 's32[1]{0}', space=sflag, size = 0x4, scoped, tag = 'scoped memory for tpu_custom_call.1']
    #allocation18 [shape = 'u8[512]{0}', space=vmem, size = 0x400, scoped, tag = 'input window, operand 9, single buffered']
    #allocation19 [shape = 'u8[4096]{0}', space=vmem, size = 0x1000, scoped, tag = 'output window, operand 0, single buffered']
    %19 = vsyncpa [#allocation5], 0
    %20 = vsyncpa [#allocation8], 0
    %21 = vsyncpa [#allocation11], 0
    %22 = vsyncpa [#allocation14], 0
    %23 = vsyncpa [#allocation17], 0
    %24 = vsyncpa [#allocation6], 0
    // Predicated region
    $region2: #{tpu_custom_call.1} parent=1 // pred_check
      _
    $region3: #{tpu_custom_call.1} parent=1 // pred_check_branch
      %26 = sbr.rel (0) target = $region5
    $region4: #{tpu_custom_call.1} parent=1 // pred_region
      %s28 = ssub.s32 2816, 2816
      %29 = vsyncadd [#allocation5], %s28
      %s31 = sshll.u32 [#allocation4], 4
      %s32 = int_to_ptr.vmem [resolvable:$true] %s31
      %34 = dma.hbm_to_vmem [thread:$0]  %s1, 2816, %s32, [#allocation5]
    $region5: #{tpu_custom_call.1} parent=1 // pred_fallthru
      _
    // Predicated region
    $region6: #{tpu_custom_call.1} parent=1 // pred_check
      _
    $region7: #{tpu_custom_call.1} parent=1 // pred_check_branch
      %36 = sbr.rel (0) target = $region9
    $region8: #{tpu_custom_call.1} parent=1 // pred_region
      %s38 = ssub.s32 89600, 89600
      %39 = vsyncadd [#allocation8], %s38
      %s40 = sshll.u32 [#allocation7], 4
      %s41 = int_to_ptr.vmem [resolvable:$true] %s40
      %46 = dma.hbm_to_vmem [thread:$0]  %s2, 89600, %s41, [#allocation8], 256, 256, 16
    $region9: #{tpu_custom_call.1} parent=1 // pred_fallthru
      _
    // Predicated region
    $region10: #{tpu_custom_call.1} parent=1 // pred_check
      _
    $region11: #{tpu_custom_call.1} parent=1 // pred_check_branch
      %48 = sbr.rel (0) target = $region13
    $region12: #{tpu_custom_call.1} parent=1 // pred_region
      %s50 = ssub.s32 64, 64
      %51 = vsyncadd [#allocation8], %s50
      %s53 = sshll.u32 [#allocation9], 4
      %s54 = int_to_ptr.vmem [resolvable:$true] %s53
      %56 = dma.hbm_to_vmem [thread:$0]  %s3, 64, %s54, [#allocation8]
    $region13: #{tpu_custom_call.1} parent=1 // pred_fallthru
      _
    // Predicated region
    $region14: #{tpu_custom_call.1} parent=1 // pred_check
      _
    $region15: #{tpu_custom_call.1} parent=1 // pred_check_branch
      %58 = sbr.rel (0) target = $region17
    $region16: #{tpu_custom_call.1} parent=1 // pred_region
      %s60 = ssub.s32 8192, 8192
      %61 = vsyncadd [#allocation11], %s60
      %s62 = sshll.u32 [#allocation10], 4
      %s63 = int_to_ptr.vmem [resolvable:$true] %s62
      %68 = dma.hbm_to_vmem [thread:$0]  %s4, 8192, %s63, [#allocation11], 128, 128, 8
    $region17: #{tpu_custom_call.1} parent=1 // pred_fallthru
      _
    // Predicated region
    $region18: #{tpu_custom_call.1} parent=1 // pred_check
      _
    $region19: #{tpu_custom_call.1} parent=1 // pred_check_branch
      %70 = sbr.rel (0) target = $region21
    $region20: #{tpu_custom_call.1} parent=1 // pred_region
      %s72 = ssub.s32 32, 32
      %73 = vsyncadd [#allocation11], %s72
      %s75 = sshll.u32 [#allocation12], 4
      %s76 = int_to_ptr.vmem [resolvable:$true] %s75
      %78 = dma.hbm_to_vmem [thread:$0]  %s5, 32, %s76, [#allocation11]
    $region21: #{tpu_custom_call.1} parent=1 // pred_fallthru
      _
    // Predicated region
    $region22: #{tpu_custom_call.1} parent=1 // pred_check
      _
    $region23: #{tpu_custom_call.1} parent=1 // pred_check_branch
      %80 = sbr.rel (0) target = $region25
    $region24: #{tpu_custom_call.1} parent=1 // pred_region
      %s82 = ssub.s32 2048, 2048
      %83 = vsyncadd [#allocation14], %s82
      %s84 = sshll.u32 [#allocation13], 4
      %s85 = int_to_ptr.vmem [resolvable:$true] %s84
      %90 = dma.hbm_to_vmem [thread:$0]  %s6, 2048, %s85, [#allocation14], 64, 64, 4
    $region25: #{tpu_custom_call.1} parent=1 // pred_fallthru
      _
    // Predicated region
    $region26: #{tpu_custom_call.1} parent=1 // pred_check
      _
    $region27: #{tpu_custom_call.1} parent=1 // pred_check_branch
      %92 = sbr.rel (0) target = $region29
    $region28: #{tpu_custom_call.1} parent=1 // pred_region
      %s94 = ssub.s32 16, 16
      %95 = vsyncadd [#allocation14], %s94
      %s97 = sshll.u32 [#allocation15], 4
      %s98 = int_to_ptr.vmem [resolvable:$true] %s97
      %100 = dma.hbm_to_vmem [thread:$0]  %s7, 16, %s98, [#allocation14]
    $region29: #{tpu_custom_call.1} parent=1 // pred_fallthru
      _
    // Predicated region
    $region30: #{tpu_custom_call.1} parent=1 // pred_check
      _
    $region31: #{tpu_custom_call.1} parent=1 // pred_check_branch
      %102 = sbr.rel (0) target = $region33
    $region32: #{tpu_custom_call.1} parent=1 // pred_region
      %s104 = ssub.s32 1024, 1024
      %105 = vsyncadd [#allocation17], %s104
      %s106 = sshll.u32 [#allocation16], 4
      %s107 = int_to_ptr.vmem [resolvable:$true] %s106
      %112 = dma.hbm_to_vmem [thread:$0]  %s8, 1024, %s107, [#allocation17], 64, 64, 4
    $region33: #{tpu_custom_call.1} parent=1 // pred_fallthru
      _
    // Predicated region
    $region34: #{tpu_custom_call.1} parent=1 // pred_check
      _
    $region35: #{tpu_custom_call.1} parent=1 // pred_check_branch
      %114 = sbr.rel (0) target = $region37
    $region36: #{tpu_custom_call.1} parent=1 // pred_region
      %s116 = ssub.s32 16, 16
      %117 = vsyncadd [#allocation17], %s116
      %s119 = sshll.u32 [#allocation18], 4
      %s120 = int_to_ptr.vmem [resolvable:$true] %s119
      %122 = dma.hbm_to_vmem [thread:$0]  %s9, 16, %s120, [#allocation17]
    $region37: #{tpu_custom_call.1} parent=1 // pred_fallthru
      _
    // Predicated region
    $region38: #{tpu_custom_call.1} parent=1 // pred_check
      _
    $region39: #{tpu_custom_call.1} parent=1 // pred_check_branch
      %124 = sbr.rel (0) target = $region41
    $region40: #{tpu_custom_call.1} parent=1 // pred_region
      %125 = dma.done [#allocation5], 2816
    $region41: #{tpu_custom_call.1} parent=1 // pred_fallthru
      _
    // Predicated region
    $region42: #{tpu_custom_call.1} parent=1 // pred_check
      _
    $region43: #{tpu_custom_call.1} parent=1 // pred_check_branch
      %127 = sbr.rel (0) target = $region45
    $region44: #{tpu_custom_call.1} parent=1 // pred_region
      %128 = dma.done [#allocation8], 89600
    $region45: #{tpu_custom_call.1} parent=1 // pred_fallthru
      _
    // Predicated region
    $region46: #{tpu_custom_call.1} parent=1 // pred_check
      _
    $region47: #{tpu_custom_call.1} parent=1 // pred_check_branch
      %130 = sbr.rel (0) target = $region49
    $region48: #{tpu_custom_call.1} parent=1 // pred_region
      %131 = dma.done [#allocation8], 64
    $region49: #{tpu_custom_call.1} parent=1 // pred_fallthru
      _
    // Predicated region
    $region50: #{tpu_custom_call.1} parent=1 // pred_check
      _
    $region51: #{tpu_custom_call.1} parent=1 // pred_check_branch
      %133 = sbr.rel (0) target = $region53
    $region52: #{tpu_custom_call.1} parent=1 // pred_region
      %134 = dma.done [#allocation11], 8192
    $region53: #{tpu_custom_call.1} parent=1 // pred_fallthru
      _
    // Predicated region
    $region54: #{tpu_custom_call.1} parent=1 // pred_check
      _
    $region55: #{tpu_custom_call.1} parent=1 // pred_check_branch
      %136 = sbr.rel (0) target = $region57
    $region56: #{tpu_custom_call.1} parent=1 // pred_region
      %137 = dma.done [#allocation11], 32
    $region57: #{tpu_custom_call.1} parent=1 // pred_fallthru
      _
    // Predicated region
    $region58: #{tpu_custom_call.1} parent=1 // pred_check
      _
    $region59: #{tpu_custom_call.1} parent=1 // pred_check_branch
      %139 = sbr.rel (0) target = $region61
    $region60: #{tpu_custom_call.1} parent=1 // pred_region
      %140 = dma.done [#allocation14], 2048
    $region61: #{tpu_custom_call.1} parent=1 // pred_fallthru
      _
    // Predicated region
    $region62: #{tpu_custom_call.1} parent=1 // pred_check
      _
    $region63: #{tpu_custom_call.1} parent=1 // pred_check_branch
      %142 = sbr.rel (0) target = $region65
    $region64: #{tpu_custom_call.1} parent=1 // pred_region
      %143 = dma.done [#allocation14], 16
    $region65: #{tpu_custom_call.1} parent=1 // pred_fallthru
      _
    // Predicated region
    $region66: #{tpu_custom_call.1} parent=1 // pred_check
      _
    $region67: #{tpu_custom_call.1} parent=1 // pred_check_branch
      %145 = sbr.rel (0) target = $region69
    $region68: #{tpu_custom_call.1} parent=1 // pred_region
      %146 = dma.done [#allocation17], 1024
    $region69: #{tpu_custom_call.1} parent=1 // pred_fallthru
      _
    // Predicated region
    $region70: #{tpu_custom_call.1} parent=1 // pred_check
      _
    $region71: #{tpu_custom_call.1} parent=1 // pred_check_branch
      %148 = sbr.rel (0) target = $region73
    $region72: #{tpu_custom_call.1} parent=1 // pred_region
      %149 = dma.done [#allocation17], 16
    $region73: #{tpu_custom_call.1} parent=1 // pred_fallthru
      _
    %s151 = sld [smem:[#allocation3]]
    %s152 = sld [smem:[#allocation3 + $0x1]]
    %s153 = sld [smem:[#allocation3 + $0x2]]
    %v154 = vld [vmem:[#allocation4] sm:$0xff]
    %v155 = vld [vmem:[#allocation4 + $0x8] sm:$0xff]
    %v156 = vld [vmem:[#allocation4 + $0x10] sm:$0xff]
    %v157 = vld [vmem:[#allocation4 + $0x18] sm:$0xff]
    %v158 = vld [vmem:[#allocation4 + $0x20] sm:$0xff]
    %v159 = vld [vmem:[#allocation4 + $0x28] sm:$0xff]
    %v160 = vld [vmem:[#allocation4 + $0x30] sm:$0xff]
    %v161 = vld [vmem:[#allocation4 + $0x38] sm:$0xff]
    %v162 = vld [vmem:[#allocation4 + $0x40] sm:$0xff]
    %v163 = vld [vmem:[#allocation4 + $0x48] sm:$0xff]
    %v164 = vld [vmem:[#allocation4 + $0x50] sm:$0xff]
    %v165 = vld [vmem:[#allocation4 + $0x58] sm:$0xff]
    %v166 = vld [vmem:[#allocation4 + $0x60] sm:$0xff]
    %v167 = vld [vmem:[#allocation4 + $0x68] sm:$0xff]
    %v168 = vld [vmem:[#allocation4 + $0x70] sm:$0xff]
    %v169 = vld [vmem:[#allocation4 + $0x78] sm:$0xff]
    %v170 = vld [vmem:[#allocation4 + $0x80] sm:$0xff]
    %v171 = vld [vmem:[#allocation4 + $0x88] sm:$0xff]
    %v172 = vld [vmem:[#allocation4 + $0x90] sm:$0xff]
    %v173 = vld [vmem:[#allocation4 + $0x98] sm:$0xff]
    %v174 = vld [vmem:[#allocation4 + $0xa0] sm:$0xff]
    %v175 = vld [vmem:[#allocation4 + $0xa8] sm:$0xff]
    %v176 = vpack.c.bf16 %v154, %v154
    %v177 = vpack.c.bf16 %v155, %v155
    %v178 = vpack.c.bf16 %v156, %v156
    %v179 = vpack.c.bf16 %v157, %v157
    %v180 = vpack.c.bf16 %v158, %v158
    %v181 = vpack.c.bf16 %v159, %v159
    %v182 = vpack.c.bf16 %v160, %v160
    %v183 = vpack.c.bf16 %v161, %v161
    %v184 = vpack.c.bf16 %v162, %v162
    %v185 = vpack.c.bf16 %v163, %v163
    %v186 = vpack.c.bf16 %v164, %v164
    %v187 = vpack.c.bf16 %v165, %v165
    %v188 = vpack.c.bf16 %v166, %v166
    %v189 = vpack.c.bf16 %v167, %v167
    %v190 = vpack.c.bf16 %v168, %v168
    %v191 = vpack.c.bf16 %v169, %v169
    %v192 = vpack.c.bf16 %v170, %v170
    %v193 = vpack.c.bf16 %v171, %v171
    %v194 = vpack.c.bf16 %v172, %v172
    %v195 = vpack.c.bf16 %v173, %v173
    %v196 = vpack.c.bf16 %v174, %v174
    %v197 = vpack.c.bf16 %v175, %v175
    %v198 = vld [vmem:[#allocation7] sm:$0xff]
    %v199 = vld [vmem:[#allocation7 + $0x8] sm:$0xff]
    %v200 = vld [vmem:[#allocation7 + $0x10] sm:$0xff]
    %v201 = vld [vmem:[#allocation7 + $0x18] sm:$0xff]
    %v202 = vld [vmem:[#allocation7 + $0x20] sm:$0xff]
    %v203 = vld [vmem:[#allocation7 + $0x28] sm:$0xff]
    %v204 = vld [vmem:[#allocation7 + $0x30] sm:$0xff]
    %v205 = vld [vmem:[#allocation7 + $0x38] sm:$0xff]
    %v206 = vld [vmem:[#allocation7 + $0x40] sm:$0xff]
    %v207 = vld [vmem:[#allocation7 + $0x48] sm:$0xff]
    %v208 = vld [vmem:[#allocation7 + $0x50] sm:$0xff]
    %v209 = vld [vmem:[#allocation7 + $0x58] sm:$0xff]
    %v210 = vld [vmem:[#allocation7 + $0x60] sm:$0xff]
    %v211 = vld [vmem:[#allocation7 + $0x68] sm:$0xff]
    %v212 = vld [vmem:[#allocation7 + $0x70] sm:$0xff]
    %v213 = vld [vmem:[#allocation7 + $0x78] sm:$0xff]
    %v214 = vld [vmem:[#allocation7 + $0x80] sm:$0xff]
    %v215 = vld [vmem:[#allocation7 + $0x88] sm:$0xff]
    %v216 = vld [vmem:[#allocation7 + $0x90] sm:$0xff]
    %v217 = vld [vmem:[#allocation7 + $0x98] sm:$0xff]
    %v218 = vld [vmem:[#allocation7 + $0xa0] sm:$0xff]
    %v219 = vld [vmem:[#allocation7 + $0xa8] sm:$0xff]
    %v220 = vld [vmem:[#allocation7 + $0xb0] sm:$0xff]
    %v221 = vld [vmem:[#allocation7 + $0xb8] sm:$0xff]
    %v222 = vld [vmem:[#allocation7 + $0xc0] sm:$0xff]
    %v223 = vld [vmem:[#allocation7 + $0xc8] sm:$0xff]
    %v224 = vld [vmem:[#allocation7 + $0xd0] sm:$0xff]
    %v225 = vld [vmem:[#allocation7 + $0xd8] sm:$0xff]
    %v226 = vld [vmem:[#allocation7 + $0xe0] sm:$0xff]
    %v227 = vld [vmem:[#allocation7 + $0xe8] sm:$0xff]
    %v228 = vld [vmem:[#allocation7 + $0xf0] sm:$0xff]
    %v229 = vld [vmem:[#allocation7 + $0xf8] sm:$0xff]
    %v230 = vld [vmem:[#allocation7 + $0x100] sm:$0xff]
    %v231 = vld [vmem:[#allocation7 + $0x108] sm:$0xff]
    %v232 = vld [vmem:[#allocation7 + $0x110] sm:$0xff]
    %v233 = vld [vmem:[#allocation7 + $0x118] sm:$0xff]
    %v234 = vld [vmem:[#allocation7 + $0x120] sm:$0xff]
    %v235 = vld [vmem:[#allocation7 + $0x128] sm:$0xff]
    %v236 = vld [vmem:[#allocation7 + $0x130] sm:$0xff]
    %v237 = vld [vmem:[#allocation7 + $0x138] sm:$0xff]
    %v238 = vld [vmem:[#allocation7 + $0x140] sm:$0xff]
    %v239 = vld [vmem:[#allocation7 + $0x148] sm:$0xff]
    %v240 = vld [vmem:[#allocation7 + $0x150] sm:$0xff]
    %v241 = vld [vmem:[#allocation7 + $0x158] sm:$0xff]
    %v242 = vld [vmem:[#allocation7 + $0x160] sm:$0xff]
    %v243 = vld [vmem:[#allocation7 + $0x168] sm:$0xff]
    %v244 = vld [vmem:[#allocation7 + $0x170] sm:$0xff]
    %v245 = vld [vmem:[#allocation7 + $0x178] sm:$0xff]
    %v246 = vld [vmem:[#allocation7 + $0x180] sm:$0xff]
    %v247 = vld [vmem:[#allocation7 + $0x188] sm:$0xff]
    %v248 = vld [vmem:[#allocation7 + $0x190] sm:$0xff]
    %v249 = vld [vmem:[#allocation7 + $0x198] sm:$0xff]
    %v250 = vld [vmem:[#allocation7 + $0x1a0] sm:$0xff]
    %v251 = vld [vmem:[#allocation7 + $0x1a8] sm:$0xff]
    %v252 = vld [vmem:[#allocation7 + $0x1b0] sm:$0xff]
    %v253 = vld [vmem:[#allocation7 + $0x1b8] sm:$0xff]
    %v254 = vld [vmem:[#allocation7 + $0x1c0] sm:$0xff]
    %v255 = vld [vmem:[#allocation7 + $0x1c8] sm:$0xff]
    %v256 = vld [vmem:[#allocation7 + $0x1d0] sm:$0xff]
    %v257 = vld [vmem:[#allocation7 + $0x1d8] sm:$0xff]
    %v258 = vld [vmem:[#allocation7 + $0x1e0] sm:$0xff]
    %v259 = vld [vmem:[#allocation7 + $0x1e8] sm:$0xff]
    %v260 = vld [vmem:[#allocation7 + $0x1f0] sm:$0xff]
    %v261 = vld [vmem:[#allocation7 + $0x1f8] sm:$0xff]
    %v262 = vld [vmem:[#allocation7 + $0x200] sm:$0xff]
    %v263 = vld [vmem:[#allocation7 + $0x208] sm:$0xff]
    %v264 = vld [vmem:[#allocation7 + $0x210] sm:$0xff]
    %v265 = vld [vmem:[#allocation7 + $0x218] sm:$0xff]
    %v266 = vld [vmem:[#allocation7 + $0x220] sm:$0xff]
    %v267 = vld [vmem:[#allocation7 + $0x228] sm:$0xff]
    %v268 = vld [vmem:[#allocation7 + $0x230] sm:$0xff]
    %v269 = vld [vmem:[#allocation7 + $0x238] sm:$0xff]
    %v270 = vld [vmem:[#allocation7 + $0x240] sm:$0xff]
    %v271 = vld [vmem:[#allocation7 + $0x248] sm:$0xff]
    %v272 = vld [vmem:[#allocation7 + $0x250] sm:$0xff]
    %v273 = vld [vmem:[#allocation7 + $0x258] sm:$0xff]
    %v274 = vld [vmem:[#allocation7 + $0x260] sm:$0xff]
    %v275 = vld [vmem:[#allocation7 + $0x268] sm:$0xff]
    %v276 = vld [vmem:[#allocation7 + $0x270] sm:$0xff]
    %v277 = vld [vmem:[#allocation7 + $0x278] sm:$0xff]
    %v278 = vld [vmem:[#allocation7 + $0x280] sm:$0xff]
    %v279 = vld [vmem:[#allocation7 + $0x288] sm:$0xff]
    %v280 = vld [vmem:[#allocation7 + $0x290] sm:$0xff]
    %v281 = vld [vmem:[#allocation7 + $0x298] sm:$0xff]
    %v282 = vld [vmem:[#allocation7 + $0x2a0] sm:$0xff]
    %v283 = vld [vmem:[#allocation7 + $0x2a8] sm:$0xff]
    %v284 = vld [vmem:[#allocation7 + $0x2b0] sm:$0xff]
    %v285 = vld [vmem:[#allocation7 + $0x2b8] sm:$0xff]
    %v286 = vld [vmem:[#allocation7 + $0x2c0] sm:$0xff]
    %v287 = vld [vmem:[#allocation7 + $0x2c8] sm:$0xff]
    %v288 = vld [vmem:[#allocation7 + $0x2d0] sm:$0xff]
    %v289 = vld [vmem:[#allocation7 + $0x2d8] sm:$0xff]
    %v290 = vld [vmem:[#allocation7 + $0x2e0] sm:$0xff]
    %v291 = vld [vmem:[#allocation7 + $0x2e8] sm:$0xff]
    %v292 = vld [vmem:[#allocation7 + $0x2f0] sm:$0xff]
    %v293 = vld [vmem:[#allocation7 + $0x2f8] sm:$0xff]
    %v294 = vld [vmem:[#allocation7 + $0x300] sm:$0xff]
    %v295 = vld [vmem:[#allocation7 + $0x308] sm:$0xff]
    %v296 = vld [vmem:[#allocation7 + $0x310] sm:$0xff]
    %v297 = vld [vmem:[#allocation7 + $0x318] sm:$0xff]
    %v298 = vld [vmem:[#allocation7 + $0x320] sm:$0xff]
    %v299 = vld [vmem:[#allocation7 + $0x328] sm:$0xff]
    %v300 = vld [vmem:[#allocation7 + $0x330] sm:$0xff]
    %v301 = vld [vmem:[#allocation7 + $0x338] sm:$0xff]
    %v302 = vld [vmem:[#allocation7 + $0x340] sm:$0xff]
    %v303 = vld [vmem:[#allocation7 + $0x348] sm:$0xff]
    %v304 = vld [vmem:[#allocation7 + $0x350] sm:$0xff]
    %v305 = vld [vmem:[#allocation7 + $0x358] sm:$0xff]
    %v306 = vld [vmem:[#allocation7 + $0x360] sm:$0xff]
    %v307 = vld [vmem:[#allocation7 + $0x368] sm:$0xff]
    %v308 = vld [vmem:[#allocation7 + $0x370] sm:$0xff]
    %v309 = vld [vmem:[#allocation7 + $0x378] sm:$0xff]
    %v310 = vld [vmem:[#allocation7 + $0x380] sm:$0xff]
    %v311 = vld [vmem:[#allocation7 + $0x388] sm:$0xff]
    %v312 = vld [vmem:[#allocation7 + $0x390] sm:$0xff]
    %v313 = vld [vmem:[#allocation7 + $0x398] sm:$0xff]
    %v314 = vld [vmem:[#allocation7 + $0x3a0] sm:$0xff]
    %v315 = vld [vmem:[#allocation7 + $0x3a8] sm:$0xff]
    %v316 = vld [vmem:[#allocation7 + $0x3b0] sm:$0xff]
    %v317 = vld [vmem:[#allocation7 + $0x3b8] sm:$0xff]
    %v318 = vld [vmem:[#allocation7 + $0x3c0] sm:$0xff]
    %v319 = vld [vmem:[#allocation7 + $0x3c8] sm:$0xff]
    %v320 = vld [vmem:[#allocation7 + $0x3d0] sm:$0xff]
    %v321 = vld [vmem:[#allocation7 + $0x3d8] sm:$0xff]
    %v322 = vld [vmem:[#allocation7 + $0x3e0] sm:$0xff]
    %v323 = vld [vmem:[#allocation7 + $0x3e8] sm:$0xff]
    %v324 = vld [vmem:[#allocation7 + $0x3f0] sm:$0xff]
    %v325 = vld [vmem:[#allocation7 + $0x3f8] sm:$0xff]
    %v326 = vld [vmem:[#allocation7 + $0x400] sm:$0xff]
    %v327 = vld [vmem:[#allocation7 + $0x408] sm:$0xff]
    %v328 = vld [vmem:[#allocation7 + $0x410] sm:$0xff]
    %v329 = vld [vmem:[#allocation7 + $0x418] sm:$0xff]
    %v330 = vld [vmem:[#allocation7 + $0x420] sm:$0xff]
    %v331 = vld [vmem:[#allocation7 + $0x428] sm:$0xff]
    %v332 = vld [vmem:[#allocation7 + $0x430] sm:$0xff]
    %v333 = vld [vmem:[#allocation7 + $0x438] sm:$0xff]
    %v334 = vld [vmem:[#allocation7 + $0x440] sm:$0xff]
    %v335 = vld [vmem:[#allocation7 + $0x448] sm:$0xff]
    %v336 = vld [vmem:[#allocation7 + $0x450] sm:$0xff]
    %v337 = vld [vmem:[#allocation7 + $0x458] sm:$0xff]
    %v338 = vld [vmem:[#allocation7 + $0x460] sm:$0xff]
    %v339 = vld [vmem:[#allocation7 + $0x468] sm:$0xff]
    %v340 = vld [vmem:[#allocation7 + $0x470] sm:$0xff]
    %v341 = vld [vmem:[#allocation7 + $0x478] sm:$0xff]
    %v342 = vld [vmem:[#allocation7 + $0x480] sm:$0xff]
    %v343 = vld [vmem:[#allocation7 + $0x488] sm:$0xff]
    %v344 = vld [vmem:[#allocation7 + $0x490] sm:$0xff]
    %v345 = vld [vmem:[#allocation7 + $0x498] sm:$0xff]
    %v346 = vld [vmem:[#allocation7 + $0x4a0] sm:$0xff]
    %v347 = vld [vmem:[#allocation7 + $0x4a8] sm:$0xff]
    %v348 = vld [vmem:[#allocation7 + $0x4b0] sm:$0xff]
    %v349 = vld [vmem:[#allocation7 + $0x4b8] sm:$0xff]
    %v350 = vld [vmem:[#allocation7 + $0x4c0] sm:$0xff]
    %v351 = vld [vmem:[#allocation7 + $0x4c8] sm:$0xff]
    %v352 = vld [vmem:[#allocation7 + $0x4d0] sm:$0xff]
    %v353 = vld [vmem:[#allocation7 + $0x4d8] sm:$0xff]
    %v354 = vld [vmem:[#allocation7 + $0x4e0] sm:$0xff]
    %v355 = vld [vmem:[#allocation7 + $0x4e8] sm:$0xff]
    %v356 = vld [vmem:[#allocation7 + $0x4f0] sm:$0xff]
    %v357 = vld [vmem:[#allocation7 + $0x4f8] sm:$0xff]
    %v358 = vld [vmem:[#allocation7 + $0x500] sm:$0xff]
    %v359 = vld [vmem:[#allocation7 + $0x508] sm:$0xff]
    %v360 = vld [vmem:[#allocation7 + $0x510] sm:$0xff]
    %v361 = vld [vmem:[#allocation7 + $0x518] sm:$0xff]
    %v362 = vld [vmem:[#allocation7 + $0x520] sm:$0xff]
    %v363 = vld [vmem:[#allocation7 + $0x528] sm:$0xff]
    %v364 = vld [vmem:[#allocation7 + $0x530] sm:$0xff]
    %v365 = vld [vmem:[#allocation7 + $0x538] sm:$0xff]
    %v366 = vld [vmem:[#allocation7 + $0x540] sm:$0xff]
    %v367 = vld [vmem:[#allocation7 + $0x548] sm:$0xff]
    %v368 = vld [vmem:[#allocation7 + $0x550] sm:$0xff]
    %v369 = vld [vmem:[#allocation7 + $0x558] sm:$0xff]
    %v370 = vld [vmem:[#allocation7 + $0x560] sm:$0xff]
    %v371 = vld [vmem:[#allocation7 + $0x568] sm:$0xff]
    %v372 = vld [vmem:[#allocation7 + $0x570] sm:$0xff]
    %v373 = vld [vmem:[#allocation7 + $0x578] sm:$0xff]
    %v374 = vld [vmem:[#allocation7 + $0x580] sm:$0xff]
    %v375 = vld [vmem:[#allocation7 + $0x588] sm:$0xff]
    %v376 = vld [vmem:[#allocation7 + $0x590] sm:$0xff]
    %v377 = vld [vmem:[#allocation7 + $0x598] sm:$0xff]
    %v378 = vld [vmem:[#allocation7 + $0x5a0] sm:$0xff]
    %v379 = vld [vmem:[#allocation7 + $0x5a8] sm:$0xff]
    %v380 = vld [vmem:[#allocation7 + $0x5b0] sm:$0xff]
    %v381 = vld [vmem:[#allocation7 + $0x5b8] sm:$0xff]
    %v382 = vld [vmem:[#allocation7 + $0x5c0] sm:$0xff]
    %v383 = vld [vmem:[#allocation7 + $0x5c8] sm:$0xff]
    %v384 = vld [vmem:[#allocation7 + $0x5d0] sm:$0xff]
    %v385 = vld [vmem:[#allocation7 + $0x5d8] sm:$0xff]
    %v386 = vld [vmem:[#allocation7 + $0x5e0] sm:$0xff]
    %v387 = vld [vmem:[#allocation7 + $0x5e8] sm:$0xff]
    %v388 = vld [vmem:[#allocation7 + $0x5f0] sm:$0xff]
    %v389 = vld [vmem:[#allocation7 + $0x5f8] sm:$0xff]
    %v390 = vld [vmem:[#allocation7 + $0x600] sm:$0xff]
    %v391 = vld [vmem:[#allocation7 + $0x608] sm:$0xff]
    %v392 = vld [vmem:[#allocation7 + $0x610] sm:$0xff]
    %v393 = vld [vmem:[#allocation7 + $0x618] sm:$0xff]
    %v394 = vld [vmem:[#allocation7 + $0x620] sm:$0xff]
    %v395 = vld [vmem:[#allocation7 + $0x628] sm:$0xff]
    %v396 = vld [vmem:[#allocation7 + $0x630] sm:$0xff]
    %v397 = vld [vmem:[#allocation7 + $0x638] sm:$0xff]
    %v398 = vld [vmem:[#allocation7 + $0x640] sm:$0xff]
    %v399 = vld [vmem:[#allocation7 + $0x648] sm:$0xff]
    %v400 = vld [vmem:[#allocation7 + $0x650] sm:$0xff]
    %v401 = vld [vmem:[#allocation7 + $0x658] sm:$0xff]
    %v402 = vld [vmem:[#allocation7 + $0x660] sm:$0xff]
    %v403 = vld [vmem:[#allocation7 + $0x668] sm:$0xff]
    %v404 = vld [vmem:[#allocation7 + $0x670] sm:$0xff]
    %v405 = vld [vmem:[#allocation7 + $0x678] sm:$0xff]
    %v406 = vld [vmem:[#allocation7 + $0x680] sm:$0xff]
    %v407 = vld [vmem:[#allocation7 + $0x688] sm:$0xff]
    %v408 = vld [vmem:[#allocation7 + $0x690] sm:$0xff]
    %v409 = vld [vmem:[#allocation7 + $0x698] sm:$0xff]
    %v410 = vld [vmem:[#allocation7 + $0x6a0] sm:$0xff]
    %v411 = vld [vmem:[#allocation7 + $0x6a8] sm:$0xff]
    %v412 = vld [vmem:[#allocation7 + $0x6b0] sm:$0xff]
    %v413 = vld [vmem:[#allocation7 + $0x6b8] sm:$0xff]
    %v414 = vld [vmem:[#allocation7 + $0x6c0] sm:$0xff]
    %v415 = vld [vmem:[#allocation7 + $0x6c8] sm:$0xff]
    %v416 = vld [vmem:[#allocation7 + $0x6d0] sm:$0xff]
    %v417 = vld [vmem:[#allocation7 + $0x6d8] sm:$0xff]
    %v418 = vld [vmem:[#allocation7 + $0x6e0] sm:$0xff]
    %v419 = vld [vmem:[#allocation7 + $0x6e8] sm:$0xff]
    %v420 = vld [vmem:[#allocation7 + $0x6f0] sm:$0xff]
    %v421 = vld [vmem:[#allocation7 + $0x6f8] sm:$0xff]
    %v422 = vld [vmem:[#allocation7 + $0x700] sm:$0xff]
    %v423 = vld [vmem:[#allocation7 + $0x708] sm:$0xff]
    %v424 = vld [vmem:[#allocation7 + $0x710] sm:$0xff]
    %v425 = vld [vmem:[#allocation7 + $0x718] sm:$0xff]
    %v426 = vld [vmem:[#allocation7 + $0x720] sm:$0xff]
    %v427 = vld [vmem:[#allocation7 + $0x728] sm:$0xff]
    %v428 = vld [vmem:[#allocation7 + $0x730] sm:$0xff]
    %v429 = vld [vmem:[#allocation7 + $0x738] sm:$0xff]
    %v430 = vld [vmem:[#allocation7 + $0x740] sm:$0xff]
    %v431 = vld [vmem:[#allocation7 + $0x748] sm:$0xff]
    %v432 = vld [vmem:[#allocation7 + $0x750] sm:$0xff]
    %v433 = vld [vmem:[#allocation7 + $0x758] sm:$0xff]
    %v434 = vld [vmem:[#allocation7 + $0x760] sm:$0xff]
    %v435 = vld [vmem:[#allocation7 + $0x768] sm:$0xff]
    %v436 = vld [vmem:[#allocation7 + $0x770] sm:$0xff]
    %v437 = vld [vmem:[#allocation7 + $0x778] sm:$0xff]
    %v438 = vld [vmem:[#allocation7 + $0x780] sm:$0xff]
    %v439 = vld [vmem:[#allocation7 + $0x788] sm:$0xff]
    %v440 = vld [vmem:[#allocation7 + $0x790] sm:$0xff]
    %v441 = vld [vmem:[#allocation7 + $0x798] sm:$0xff]
    %v442 = vld [vmem:[#allocation7 + $0x7a0] sm:$0xff]
    %v443 = vld [vmem:[#allocation7 + $0x7a8] sm:$0xff]
    %v444 = vld [vmem:[#allocation7 + $0x7b0] sm:$0xff]
    %v445 = vld [vmem:[#allocation7 + $0x7b8] sm:$0xff]
    %v446 = vld [vmem:[#allocation7 + $0x7c0] sm:$0xff]
    %v447 = vld [vmem:[#allocation7 + $0x7c8] sm:$0xff]
    %v448 = vld [vmem:[#allocation7 + $0x7d0] sm:$0xff]
    %v449 = vld [vmem:[#allocation7 + $0x7d8] sm:$0xff]
    %v450 = vld [vmem:[#allocation7 + $0x7e0] sm:$0xff]
    %v451 = vld [vmem:[#allocation7 + $0x7e8] sm:$0xff]
    %v452 = vld [vmem:[#allocation7 + $0x7f0] sm:$0xff]
    %v453 = vld [vmem:[#allocation7 + $0x7f8] sm:$0xff]
    %v454 = vld [vmem:[#allocation7 + $0x800] sm:$0xff]
    %v455 = vld [vmem:[#allocation7 + $0x808] sm:$0xff]
    %v456 = vld [vmem:[#allocation7 + $0x810] sm:$0xff]
    %v457 = vld [vmem:[#allocation7 + $0x818] sm:$0xff]
    %v458 = vld [vmem:[#allocation7 + $0x820] sm:$0xff]
    %v459 = vld [vmem:[#allocation7 + $0x828] sm:$0xff]
    %v460 = vld [vmem:[#allocation7 + $0x830] sm:$0xff]
    %v461 = vld [vmem:[#allocation7 + $0x838] sm:$0xff]
    %v462 = vld [vmem:[#allocation7 + $0x840] sm:$0xff]
    %v463 = vld [vmem:[#allocation7 + $0x848] sm:$0xff]
    %v464 = vld [vmem:[#allocation7 + $0x850] sm:$0xff]
    %v465 = vld [vmem:[#allocation7 + $0x858] sm:$0xff]
    %v466 = vld [vmem:[#allocation7 + $0x860] sm:$0xff]
    %v467 = vld [vmem:[#allocation7 + $0x868] sm:$0xff]
    %v468 = vld [vmem:[#allocation7 + $0x870] sm:$0xff]
    %v469 = vld [vmem:[#allocation7 + $0x878] sm:$0xff]
    %v470 = vld [vmem:[#allocation7 + $0x880] sm:$0xff]
    %v471 = vld [vmem:[#allocation7 + $0x888] sm:$0xff]
    %v472 = vld [vmem:[#allocation7 + $0x890] sm:$0xff]
    %v473 = vld [vmem:[#allocation7 + $0x898] sm:$0xff]
    %v474 = vld [vmem:[#allocation7 + $0x8a0] sm:$0xff]
    %v475 = vld [vmem:[#allocation7 + $0x8a8] sm:$0xff]
    %v476 = vld [vmem:[#allocation7 + $0x8b0] sm:$0xff]
    %v477 = vld [vmem:[#allocation7 + $0x8b8] sm:$0xff]
    %v478 = vld [vmem:[#allocation7 + $0x8c0] sm:$0xff]
    %v479 = vld [vmem:[#allocation7 + $0x8c8] sm:$0xff]
    %v480 = vld [vmem:[#allocation7 + $0x8d0] sm:$0xff]
    %v481 = vld [vmem:[#allocation7 + $0x8d8] sm:$0xff]
    %v482 = vld [vmem:[#allocation7 + $0x8e0] sm:$0xff]
    %v483 = vld [vmem:[#allocation7 + $0x8e8] sm:$0xff]
    %v484 = vld [vmem:[#allocation7 + $0x8f0] sm:$0xff]
    %v485 = vld [vmem:[#allocation7 + $0x8f8] sm:$0xff]
    %v486 = vld [vmem:[#allocation7 + $0x900] sm:$0xff]
    %v487 = vld [vmem:[#allocation7 + $0x908] sm:$0xff]
    %v488 = vld [vmem:[#allocation7 + $0x910] sm:$0xff]
    %v489 = vld [vmem:[#allocation7 + $0x918] sm:$0xff]
    %v490 = vld [vmem:[#allocation7 + $0x920] sm:$0xff]
    %v491 = vld [vmem:[#allocation7 + $0x928] sm:$0xff]
    %v492 = vld [vmem:[#allocation7 + $0x930] sm:$0xff]
    %v493 = vld [vmem:[#allocation7 + $0x938] sm:$0xff]
    %v494 = vld [vmem:[#allocation7 + $0x940] sm:$0xff]
    %v495 = vld [vmem:[#allocation7 + $0x948] sm:$0xff]
    %v496 = vld [vmem:[#allocation7 + $0x950] sm:$0xff]
    %v497 = vld [vmem:[#allocation7 + $0x958] sm:$0xff]
    %v498 = vld [vmem:[#allocation7 + $0x960] sm:$0xff]
    %v499 = vld [vmem:[#allocation7 + $0x968] sm:$0xff]
    %v500 = vld [vmem:[#allocation7 + $0x970] sm:$0xff]
    %v501 = vld [vmem:[#allocation7 + $0x978] sm:$0xff]
    %v502 = vld [vmem:[#allocation7 + $0x980] sm:$0xff]
    %v503 = vld [vmem:[#allocation7 + $0x988] sm:$0xff]
    %v504 = vld [vmem:[#allocation7 + $0x990] sm:$0xff]
    %v505 = vld [vmem:[#allocation7 + $0x998] sm:$0xff]
    %v506 = vld [vmem:[#allocation7 + $0x9a0] sm:$0xff]
    %v507 = vld [vmem:[#allocation7 + $0x9a8] sm:$0xff]
    %v508 = vld [vmem:[#allocation7 + $0x9b0] sm:$0xff]
    %v509 = vld [vmem:[#allocation7 + $0x9b8] sm:$0xff]
    %v510 = vld [vmem:[#allocation7 + $0x9c0] sm:$0xff]
    %v511 = vld [vmem:[#allocation7 + $0x9c8] sm:$0xff]
    %v512 = vld [vmem:[#allocation7 + $0x9d0] sm:$0xff]
    %v513 = vld [vmem:[#allocation7 + $0x9d8] sm:$0xff]
    %v514 = vld [vmem:[#allocation7 + $0x9e0] sm:$0xff]
    %v515 = vld [vmem:[#allocation7 + $0x9e8] sm:$0xff]
    %v516 = vld [vmem:[#allocation7 + $0x9f0] sm:$0xff]
    %v517 = vld [vmem:[#allocation7 + $0x9f8] sm:$0xff]
    %v518 = vld [vmem:[#allocation7 + $0xa00] sm:$0xff]
    %v519 = vld [vmem:[#allocation7 + $0xa08] sm:$0xff]
    %v520 = vld [vmem:[#allocation7 + $0xa10] sm:$0xff]
    %v521 = vld [vmem:[#allocation7 + $0xa18] sm:$0xff]
    %v522 = vld [vmem:[#allocation7 + $0xa20] sm:$0xff]
    %v523 = vld [vmem:[#allocation7 + $0xa28] sm:$0xff]
    %v524 = vld [vmem:[#allocation7 + $0xa30] sm:$0xff]
    %v525 = vld [vmem:[#allocation7 + $0xa38] sm:$0xff]
    %v526 = vld [vmem:[#allocation7 + $0xa40] sm:$0xff]
    %v527 = vld [vmem:[#allocation7 + $0xa48] sm:$0xff]
    %v528 = vld [vmem:[#allocation7 + $0xa50] sm:$0xff]
    %v529 = vld [vmem:[#allocation7 + $0xa58] sm:$0xff]
    %v530 = vld [vmem:[#allocation7 + $0xa60] sm:$0xff]
    %v531 = vld [vmem:[#allocation7 + $0xa68] sm:$0xff]
    %v532 = vld [vmem:[#allocation7 + $0xa70] sm:$0xff]
    %v533 = vld [vmem:[#allocation7 + $0xa78] sm:$0xff]
    %v534 = vld [vmem:[#allocation7 + $0xa80] sm:$0xff]
    %v535 = vld [vmem:[#allocation7 + $0xa88] sm:$0xff]
    %v536 = vld [vmem:[#allocation7 + $0xa90] sm:$0xff]
    %v537 = vld [vmem:[#allocation7 + $0xa98] sm:$0xff]
    %v538 = vld [vmem:[#allocation7 + $0xaa0] sm:$0xff]
    %v539 = vld [vmem:[#allocation7 + $0xaa8] sm:$0xff]
    %v540 = vld [vmem:[#allocation7 + $0xab0] sm:$0xff]
    %v541 = vld [vmem:[#allocation7 + $0xab8] sm:$0xff]
    %v542 = vld [vmem:[#allocation7 + $0xac0] sm:$0xff]
    %v543 = vld [vmem:[#allocation7 + $0xac8] sm:$0xff]
    %v544 = vld [vmem:[#allocation7 + $0xad0] sm:$0xff]
    %v545 = vld [vmem:[#allocation7 + $0xad8] sm:$0xff]
    %v546 = vld [vmem:[#allocation7 + $0xae0] sm:$0xff]
    %v547 = vld [vmem:[#allocation7 + $0xae8] sm:$0xff]
    %v548 = vld [vmem:[#allocation7 + $0xaf0] sm:$0xff]
    %v549 = vld [vmem:[#allocation7 + $0xaf8] sm:$0xff]
    %v550 = vld [vmem:[#allocation7 + $0xb00] sm:$0xff]
    %v551 = vld [vmem:[#allocation7 + $0xb08] sm:$0xff]
    %v552 = vld [vmem:[#allocation7 + $0xb10] sm:$0xff]
    %v553 = vld [vmem:[#allocation7 + $0xb18] sm:$0xff]
    %v554 = vld [vmem:[#allocation7 + $0xb20] sm:$0xff]
    %v555 = vld [vmem:[#allocation7 + $0xb28] sm:$0xff]
    %v556 = vld [vmem:[#allocation7 + $0xb30] sm:$0xff]
    %v557 = vld [vmem:[#allocation7 + $0xb38] sm:$0xff]
    %v558 = vld [vmem:[#allocation7 + $0xb40] sm:$0xff]
    %v559 = vld [vmem:[#allocation7 + $0xb48] sm:$0xff]
    %v560 = vld [vmem:[#allocation7 + $0xb50] sm:$0xff]
    %v561 = vld [vmem:[#allocation7 + $0xb58] sm:$0xff]
    %v562 = vld [vmem:[#allocation7 + $0xb60] sm:$0xff]
    %v563 = vld [vmem:[#allocation7 + $0xb68] sm:$0xff]
    %v564 = vld [vmem:[#allocation7 + $0xb70] sm:$0xff]
    %v565 = vld [vmem:[#allocation7 + $0xb78] sm:$0xff]
    %v566 = vld [vmem:[#allocation7 + $0xb80] sm:$0xff]
    %v567 = vld [vmem:[#allocation7 + $0xb88] sm:$0xff]
    %v568 = vld [vmem:[#allocation7 + $0xb90] sm:$0xff]
    %v569 = vld [vmem:[#allocation7 + $0xb98] sm:$0xff]
    %v570 = vld [vmem:[#allocation7 + $0xba0] sm:$0xff]
    %v571 = vld [vmem:[#allocation7 + $0xba8] sm:$0xff]
    %v572 = vld [vmem:[#allocation7 + $0xbb0] sm:$0xff]
    %v573 = vld [vmem:[#allocation7 + $0xbb8] sm:$0xff]
    %v574 = vld [vmem:[#allocation7 + $0xbc0] sm:$0xff]
    %v575 = vld [vmem:[#allocation7 + $0xbc8] sm:$0xff]
    %v576 = vld [vmem:[#allocation7 + $0xbd0] sm:$0xff]
    %v577 = vld [vmem:[#allocation7 + $0xbd8] sm:$0xff]
    %v578 = vld [vmem:[#allocation7 + $0xbe0] sm:$0xff]
    %v579 = vld [vmem:[#allocation7 + $0xbe8] sm:$0xff]
    %v580 = vld [vmem:[#allocation7 + $0xbf0] sm:$0xff]
    %v581 = vld [vmem:[#allocation7 + $0xbf8] sm:$0xff]
    %v582 = vld [vmem:[#allocation7 + $0xc00] sm:$0xff]
    %v583 = vld [vmem:[#allocation7 + $0xc08] sm:$0xff]
    %v584 = vld [vmem:[#allocation7 + $0xc10] sm:$0xff]
    %v585 = vld [vmem:[#allocation7 + $0xc18] sm:$0xff]
    %v586 = vld [vmem:[#allocation7 + $0xc20] sm:$0xff]
    %v587 = vld [vmem:[#allocation7 + $0xc28] sm:$0xff]
    %v588 = vld [vmem:[#allocation7 + $0xc30] sm:$0xff]
    %v589 = vld [vmem:[#allocation7 + $0xc38] sm:$0xff]
    %v590 = vld [vmem:[#allocation7 + $0xc40] sm:$0xff]
    %v591 = vld [vmem:[#allocation7 + $0xc48] sm:$0xff]
    %v592 = vld [vmem:[#allocation7 + $0xc50] sm:$0xff]
    %v593 = vld [vmem:[#allocation7 + $0xc58] sm:$0xff]
    %v594 = vld [vmem:[#allocation7 + $0xc60] sm:$0xff]
    %v595 = vld [vmem:[#allocation7 + $0xc68] sm:$0xff]
    %v596 = vld [vmem:[#allocation7 + $0xc70] sm:$0xff]
    %v597 = vld [vmem:[#allocation7 + $0xc78] sm:$0xff]
    %v598 = vld [vmem:[#allocation7 + $0xc80] sm:$0xff]
    %v599 = vld [vmem:[#allocation7 + $0xc88] sm:$0xff]
    %v600 = vld [vmem:[#allocation7 + $0xc90] sm:$0xff]
    %v601 = vld [vmem:[#allocation7 + $0xc98] sm:$0xff]
    %v602 = vld [vmem:[#allocation7 + $0xca0] sm:$0xff]
    %v603 = vld [vmem:[#allocation7 + $0xca8] sm:$0xff]
    %v604 = vld [vmem:[#allocation7 + $0xcb0] sm:$0xff]
    %v605 = vld [vmem:[#allocation7 + $0xcb8] sm:$0xff]
    %v606 = vld [vmem:[#allocation7 + $0xcc0] sm:$0xff]
    %v607 = vld [vmem:[#allocation7 + $0xcc8] sm:$0xff]
    %v608 = vld [vmem:[#allocation7 + $0xcd0] sm:$0xff]
    %v609 = vld [vmem:[#allocation7 + $0xcd8] sm:$0xff]
    %v610 = vld [vmem:[#allocation7 + $0xce0] sm:$0xff]
    %v611 = vld [vmem:[#allocation7 + $0xce8] sm:$0xff]
    %v612 = vld [vmem:[#allocation7 + $0xcf0] sm:$0xff]
    %v613 = vld [vmem:[#allocation7 + $0xcf8] sm:$0xff]
    %v614 = vld [vmem:[#allocation7 + $0xd00] sm:$0xff]
    %v615 = vld [vmem:[#allocation7 + $0xd08] sm:$0xff]
    %v616 = vld [vmem:[#allocation7 + $0xd10] sm:$0xff]
    %v617 = vld [vmem:[#allocation7 + $0xd18] sm:$0xff]
    %v618 = vld [vmem:[#allocation7 + $0xd20] sm:$0xff]
    %v619 = vld [vmem:[#allocation7 + $0xd28] sm:$0xff]
    %v620 = vld [vmem:[#allocation7 + $0xd30] sm:$0xff]
    %v621 = vld [vmem:[#allocation7 + $0xd38] sm:$0xff]
    %v622 = vld [vmem:[#allocation7 + $0xd40] sm:$0xff]
    %v623 = vld [vmem:[#allocation7 + $0xd48] sm:$0xff]
    %v624 = vld [vmem:[#allocation7 + $0xd50] sm:$0xff]
    %v625 = vld [vmem:[#allocation7 + $0xd58] sm:$0xff]
    %v626 = vld [vmem:[#allocation7 + $0xd60] sm:$0xff]
    %v627 = vld [vmem:[#allocation7 + $0xd68] sm:$0xff]
    %v628 = vld [vmem:[#allocation7 + $0xd70] sm:$0xff]
    %v629 = vld [vmem:[#allocation7 + $0xd78] sm:$0xff]
    %v630 = vld [vmem:[#allocation7 + $0xd80] sm:$0xff]
    %v631 = vld [vmem:[#allocation7 + $0xd88] sm:$0xff]
    %v632 = vld [vmem:[#allocation7 + $0xd90] sm:$0xff]
    %v633 = vld [vmem:[#allocation7 + $0xd98] sm:$0xff]
    %v634 = vld [vmem:[#allocation7 + $0xda0] sm:$0xff]
    %v635 = vld [vmem:[#allocation7 + $0xda8] sm:$0xff]
    %v636 = vld [vmem:[#allocation7 + $0xdb0] sm:$0xff]
    %v637 = vld [vmem:[#allocation7 + $0xdb8] sm:$0xff]
    %v638 = vld [vmem:[#allocation7 + $0xdc0] sm:$0xff]
    %v639 = vld [vmem:[#allocation7 + $0xdc8] sm:$0xff]
    %v640 = vld [vmem:[#allocation7 + $0xdd0] sm:$0xff]
    %v641 = vld [vmem:[#allocation7 + $0xdd8] sm:$0xff]
    %v642 = vld [vmem:[#allocation7 + $0xde0] sm:$0xff]
    %v643 = vld [vmem:[#allocation7 + $0xde8] sm:$0xff]
    %v644 = vld [vmem:[#allocation7 + $0xdf0] sm:$0xff]
    %v645 = vld [vmem:[#allocation7 + $0xdf8] sm:$0xff]
    %v646 = vld [vmem:[#allocation7 + $0xe00] sm:$0xff]
    %v647 = vld [vmem:[#allocation7 + $0xe08] sm:$0xff]
    %v648 = vld [vmem:[#allocation7 + $0xe10] sm:$0xff]
    %v649 = vld [vmem:[#allocation7 + $0xe18] sm:$0xff]
    %v650 = vld [vmem:[#allocation7 + $0xe20] sm:$0xff]
    %v651 = vld [vmem:[#allocation7 + $0xe28] sm:$0xff]
    %v652 = vld [vmem:[#allocation7 + $0xe30] sm:$0xff]
    %v653 = vld [vmem:[#allocation7 + $0xe38] sm:$0xff]
    %v654 = vld [vmem:[#allocation7 + $0xe40] sm:$0xff]
    %v655 = vld [vmem:[#allocation7 + $0xe48] sm:$0xff]
    %v656 = vld [vmem:[#allocation7 + $0xe50] sm:$0xff]
    %v657 = vld [vmem:[#allocation7 + $0xe58] sm:$0xff]
    %v658 = vld [vmem:[#allocation7 + $0xe60] sm:$0xff]
    %v659 = vld [vmem:[#allocation7 + $0xe68] sm:$0xff]
    %v660 = vld [vmem:[#allocation7 + $0xe70] sm:$0xff]
    %v661 = vld [vmem:[#allocation7 + $0xe78] sm:$0xff]
    %v662 = vld [vmem:[#allocation7 + $0xe80] sm:$0xff]
    %v663 = vld [vmem:[#allocation7 + $0xe88] sm:$0xff]
    %v664 = vld [vmem:[#allocation7 + $0xe90] sm:$0xff]
    %v665 = vld [vmem:[#allocation7 + $0xe98] sm:$0xff]
    %v666 = vld [vmem:[#allocation7 + $0xea0] sm:$0xff]
    %v667 = vld [vmem:[#allocation7 + $0xea8] sm:$0xff]
    %v668 = vld [vmem:[#allocation7 + $0xeb0] sm:$0xff]
    %v669 = vld [vmem:[#allocation7 + $0xeb8] sm:$0xff]
    %v670 = vld [vmem:[#allocation7 + $0xec0] sm:$0xff]
    %v671 = vld [vmem:[#allocation7 + $0xec8] sm:$0xff]
    %v672 = vld [vmem:[#allocation7 + $0xed0] sm:$0xff]
    %v673 = vld [vmem:[#allocation7 + $0xed8] sm:$0xff]
    %v674 = vld [vmem:[#allocation7 + $0xee0] sm:$0xff]
    %v675 = vld [vmem:[#allocation7 + $0xee8] sm:$0xff]
    %v676 = vld [vmem:[#allocation7 + $0xef0] sm:$0xff]
    %v677 = vld [vmem:[#allocation7 + $0xef8] sm:$0xff]
    %v678 = vld [vmem:[#allocation7 + $0xf00] sm:$0xff]
    %v679 = vld [vmem:[#allocation7 + $0xf08] sm:$0xff]
    %v680 = vld [vmem:[#allocation7 + $0xf10] sm:$0xff]
    %v681 = vld [vmem:[#allocation7 + $0xf18] sm:$0xff]
    %v682 = vld [vmem:[#allocation7 + $0xf20] sm:$0xff]
    %v683 = vld [vmem:[#allocation7 + $0xf28] sm:$0xff]
    %v684 = vld [vmem:[#allocation7 + $0xf30] sm:$0xff]
    %v685 = vld [vmem:[#allocation7 + $0xf38] sm:$0xff]
    %v686 = vld [vmem:[#allocation7 + $0xf40] sm:$0xff]
    %v687 = vld [vmem:[#allocation7 + $0xf48] sm:$0xff]
    %v688 = vld [vmem:[#allocation7 + $0xf50] sm:$0xff]
    %v689 = vld [vmem:[#allocation7 + $0xf58] sm:$0xff]
    %v690 = vld [vmem:[#allocation7 + $0xf60] sm:$0xff]
    %v691 = vld [vmem:[#allocation7 + $0xf68] sm:$0xff]
    %v692 = vld [vmem:[#allocation7 + $0xf70] sm:$0xff]
    %v693 = vld [vmem:[#allocation7 + $0xf78] sm:$0xff]
    %v694 = vld [vmem:[#allocation7 + $0xf80] sm:$0xff]
    %v695 = vld [vmem:[#allocation7 + $0xf88] sm:$0xff]
    %v696 = vld [vmem:[#allocation7 + $0xf90] sm:$0xff]
    %v697 = vld [vmem:[#allocation7 + $0xf98] sm:$0xff]
    %v698 = vld [vmem:[#allocation7 + $0xfa0] sm:$0xff]
    %v699 = vld [vmem:[#allocation7 + $0xfa8] sm:$0xff]
    %v700 = vld [vmem:[#allocation7 + $0xfb0] sm:$0xff]
    %v701 = vld [vmem:[#allocation7 + $0xfb8] sm:$0xff]
    %v702 = vld [vmem:[#allocation7 + $0xfc0] sm:$0xff]
    %v703 = vld [vmem:[#allocation7 + $0xfc8] sm:$0xff]
    %v704 = vld [vmem:[#allocation7 + $0xfd0] sm:$0xff]
    %v705 = vld [vmem:[#allocation7 + $0xfd8] sm:$0xff]
    %v706 = vld [vmem:[#allocation7 + $0xfe0] sm:$0xff]
    %v707 = vld [vmem:[#allocation7 + $0xfe8] sm:$0xff]
    %v708 = vld [vmem:[#allocation7 + $0xff0] sm:$0xff]
    %v709 = vld [vmem:[#allocation7 + $0xff8] sm:$0xff]
    %v710 = vld [vmem:[#allocation7 + $0x1000] sm:$0xff]
    %v711 = vld [vmem:[#allocation7 + $0x1008] sm:$0xff]
    %v712 = vld [vmem:[#allocation7 + $0x1010] sm:$0xff]
    %v713 = vld [vmem:[#allocation7 + $0x1018] sm:$0xff]
    %v714 = vld [vmem:[#allocation7 + $0x1020] sm:$0xff]
    %v715 = vld [vmem:[#allocation7 + $0x1028] sm:$0xff]
    %v716 = vld [vmem:[#allocation7 + $0x1030] sm:$0xff]
    %v717 = vld [vmem:[#allocation7 + $0x1038] sm:$0xff]
    %v718 = vld [vmem:[#allocation7 + $0x1040] sm:$0xff]
    %v719 = vld [vmem:[#allocation7 + $0x1048] sm:$0xff]
    %v720 = vld [vmem:[#allocation7 + $0x1050] sm:$0xff]
    %v721 = vld [vmem:[#allocation7 + $0x1058] sm:$0xff]
    %v722 = vld [vmem:[#allocation7 + $0x1060] sm:$0xff]
    %v723 = vld [vmem:[#allocation7 + $0x1068] sm:$0xff]
    %v724 = vld [vmem:[#allocation7 + $0x1070] sm:$0xff]
    %v725 = vld [vmem:[#allocation7 + $0x1078] sm:$0xff]
    %v726 = vld [vmem:[#allocation7 + $0x1080] sm:$0xff]
    %v727 = vld [vmem:[#allocation7 + $0x1088] sm:$0xff]
    %v728 = vld [vmem:[#allocation7 + $0x1090] sm:$0xff]
    %v729 = vld [vmem:[#allocation7 + $0x1098] sm:$0xff]
    %v730 = vld [vmem:[#allocation7 + $0x10a0] sm:$0xff]
    %v731 = vld [vmem:[#allocation7 + $0x10a8] sm:$0xff]
    %v732 = vld [vmem:[#allocation7 + $0x10b0] sm:$0xff]
    %v733 = vld [vmem:[#allocation7 + $0x10b8] sm:$0xff]
    %v734 = vld [vmem:[#allocation7 + $0x10c0] sm:$0xff]
    %v735 = vld [vmem:[#allocation7 + $0x10c8] sm:$0xff]
    %v736 = vld [vmem:[#allocation7 + $0x10d0] sm:$0xff]
    %v737 = vld [vmem:[#allocation7 + $0x10d8] sm:$0xff]
    %v738 = vld [vmem:[#allocation7 + $0x10e0] sm:$0xff]
    %v739 = vld [vmem:[#allocation7 + $0x10e8] sm:$0xff]
    %v740 = vld [vmem:[#allocation7 + $0x10f0] sm:$0xff]
    %v741 = vld [vmem:[#allocation7 + $0x10f8] sm:$0xff]
    %v742 = vld [vmem:[#allocation7 + $0x1100] sm:$0xff]
    %v743 = vld [vmem:[#allocation7 + $0x1108] sm:$0xff]
    %v744 = vld [vmem:[#allocation7 + $0x1110] sm:$0xff]
    %v745 = vld [vmem:[#allocation7 + $0x1118] sm:$0xff]
    %v746 = vld [vmem:[#allocation7 + $0x1120] sm:$0xff]
    %v747 = vld [vmem:[#allocation7 + $0x1128] sm:$0xff]
    %v748 = vld [vmem:[#allocation7 + $0x1130] sm:$0xff]
    %v749 = vld [vmem:[#allocation7 + $0x1138] sm:$0xff]
    %v750 = vld [vmem:[#allocation7 + $0x1140] sm:$0xff]
    %v751 = vld [vmem:[#allocation7 + $0x1148] sm:$0xff]
    %v752 = vld [vmem:[#allocation7 + $0x1150] sm:$0xff]
    %v753 = vld [vmem:[#allocation7 + $0x1158] sm:$0xff]
    %v754 = vld [vmem:[#allocation7 + $0x1160] sm:$0xff]
    %v755 = vld [vmem:[#allocation7 + $0x1168] sm:$0xff]
    %v756 = vld [vmem:[#allocation7 + $0x1170] sm:$0xff]
    %v757 = vld [vmem:[#allocation7 + $0x1178] sm:$0xff]
    %v758 = vld [vmem:[#allocation7 + $0x1180] sm:$0xff]
    %v759 = vld [vmem:[#allocation7 + $0x1188] sm:$0xff]
    %v760 = vld [vmem:[#allocation7 + $0x1190] sm:$0xff]
    %v761 = vld [vmem:[#allocation7 + $0x1198] sm:$0xff]
    %v762 = vld [vmem:[#allocation7 + $0x11a0] sm:$0xff]
    %v763 = vld [vmem:[#allocation7 + $0x11a8] sm:$0xff]
    %v764 = vld [vmem:[#allocation7 + $0x11b0] sm:$0xff]
    %v765 = vld [vmem:[#allocation7 + $0x11b8] sm:$0xff]
    %v766 = vld [vmem:[#allocation7 + $0x11c0] sm:$0xff]
    %v767 = vld [vmem:[#allocation7 + $0x11c8] sm:$0xff]
    %v768 = vld [vmem:[#allocation7 + $0x11d0] sm:$0xff]
    %v769 = vld [vmem:[#allocation7 + $0x11d8] sm:$0xff]
    %v770 = vld [vmem:[#allocation7 + $0x11e0] sm:$0xff]
    %v771 = vld [vmem:[#allocation7 + $0x11e8] sm:$0xff]
    %v772 = vld [vmem:[#allocation7 + $0x11f0] sm:$0xff]
    %v773 = vld [vmem:[#allocation7 + $0x11f8] sm:$0xff]
    %v774 = vld [vmem:[#allocation7 + $0x1200] sm:$0xff]
    %v775 = vld [vmem:[#allocation7 + $0x1208] sm:$0xff]
    %v776 = vld [vmem:[#allocation7 + $0x1210] sm:$0xff]
    %v777 = vld [vmem:[#allocation7 + $0x1218] sm:$0xff]
    %v778 = vld [vmem:[#allocation7 + $0x1220] sm:$0xff]
    %v779 = vld [vmem:[#allocation7 + $0x1228] sm:$0xff]
    %v780 = vld [vmem:[#allocation7 + $0x1230] sm:$0xff]
    %v781 = vld [vmem:[#allocation7 + $0x1238] sm:$0xff]
    %v782 = vld [vmem:[#allocation7 + $0x1240] sm:$0xff]
    %v783 = vld [vmem:[#allocation7 + $0x1248] sm:$0xff]
    %v784 = vld [vmem:[#allocation7 + $0x1250] sm:$0xff]
    %v785 = vld [vmem:[#allocation7 + $0x1258] sm:$0xff]
    %v786 = vld [vmem:[#allocation7 + $0x1260] sm:$0xff]
    %v787 = vld [vmem:[#allocation7 + $0x1268] sm:$0xff]
    %v788 = vld [vmem:[#allocation7 + $0x1270] sm:$0xff]
    %v789 = vld [vmem:[#allocation7 + $0x1278] sm:$0xff]
    %v790 = vld [vmem:[#allocation7 + $0x1280] sm:$0xff]
    %v791 = vld [vmem:[#allocation7 + $0x1288] sm:$0xff]
    %v792 = vld [vmem:[#allocation7 + $0x1290] sm:$0xff]
    %v793 = vld [vmem:[#allocation7 + $0x1298] sm:$0xff]
    %v794 = vld [vmem:[#allocation7 + $0x12a0] sm:$0xff]
    %v795 = vld [vmem:[#allocation7 + $0x12a8] sm:$0xff]
    %v796 = vld [vmem:[#allocation7 + $0x12b0] sm:$0xff]
    %v797 = vld [vmem:[#allocation7 + $0x12b8] sm:$0xff]
    %v798 = vld [vmem:[#allocation7 + $0x12c0] sm:$0xff]
    %v799 = vld [vmem:[#allocation7 + $0x12c8] sm:$0xff]
    %v800 = vld [vmem:[#allocation7 + $0x12d0] sm:$0xff]
    %v801 = vld [vmem:[#allocation7 + $0x12d8] sm:$0xff]
    %v802 = vld [vmem:[#allocation7 + $0x12e0] sm:$0xff]
    %v803 = vld [vmem:[#allocation7 + $0x12e8] sm:$0xff]
    %v804 = vld [vmem:[#allocation7 + $0x12f0] sm:$0xff]
    %v805 = vld [vmem:[#allocation7 + $0x12f8] sm:$0xff]
    %v806 = vld [vmem:[#allocation7 + $0x1300] sm:$0xff]
    %v807 = vld [vmem:[#allocation7 + $0x1308] sm:$0xff]
    %v808 = vld [vmem:[#allocation7 + $0x1310] sm:$0xff]
    %v809 = vld [vmem:[#allocation7 + $0x1318] sm:$0xff]
    %v810 = vld [vmem:[#allocation7 + $0x1320] sm:$0xff]
    %v811 = vld [vmem:[#allocation7 + $0x1328] sm:$0xff]
    %v812 = vld [vmem:[#allocation7 + $0x1330] sm:$0xff]
    %v813 = vld [vmem:[#allocation7 + $0x1338] sm:$0xff]
    %v814 = vld [vmem:[#allocation7 + $0x1340] sm:$0xff]
    %v815 = vld [vmem:[#allocation7 + $0x1348] sm:$0xff]
    %v816 = vld [vmem:[#allocation7 + $0x1350] sm:$0xff]
    %v817 = vld [vmem:[#allocation7 + $0x1358] sm:$0xff]
    %v818 = vld [vmem:[#allocation7 + $0x1360] sm:$0xff]
    %v819 = vld [vmem:[#allocation7 + $0x1368] sm:$0xff]
    %v820 = vld [vmem:[#allocation7 + $0x1370] sm:$0xff]
    %v821 = vld [vmem:[#allocation7 + $0x1378] sm:$0xff]
    %v822 = vld [vmem:[#allocation7 + $0x1380] sm:$0xff]
    %v823 = vld [vmem:[#allocation7 + $0x1388] sm:$0xff]
    %v824 = vld [vmem:[#allocation7 + $0x1390] sm:$0xff]
    %v825 = vld [vmem:[#allocation7 + $0x1398] sm:$0xff]
    %v826 = vld [vmem:[#allocation7 + $0x13a0] sm:$0xff]
    %v827 = vld [vmem:[#allocation7 + $0x13a8] sm:$0xff]
    %v828 = vld [vmem:[#allocation7 + $0x13b0] sm:$0xff]
    %v829 = vld [vmem:[#allocation7 + $0x13b8] sm:$0xff]
    %v830 = vld [vmem:[#allocation7 + $0x13c0] sm:$0xff]
    %v831 = vld [vmem:[#allocation7 + $0x13c8] sm:$0xff]
    %v832 = vld [vmem:[#allocation7 + $0x13d0] sm:$0xff]
    %v833 = vld [vmem:[#allocation7 + $0x13d8] sm:$0xff]
    %v834 = vld [vmem:[#allocation7 + $0x13e0] sm:$0xff]
    %v835 = vld [vmem:[#allocation7 + $0x13e8] sm:$0xff]
    %v836 = vld [vmem:[#allocation7 + $0x13f0] sm:$0xff]
    %v837 = vld [vmem:[#allocation7 + $0x13f8] sm:$0xff]
    %v838 = vld [vmem:[#allocation7 + $0x1400] sm:$0xff]
    %v839 = vld [vmem:[#allocation7 + $0x1408] sm:$0xff]
    %v840 = vld [vmem:[#allocation7 + $0x1410] sm:$0xff]
    %v841 = vld [vmem:[#allocation7 + $0x1418] sm:$0xff]
    %v842 = vld [vmem:[#allocation7 + $0x1420] sm:$0xff]
    %v843 = vld [vmem:[#allocation7 + $0x1428] sm:$0xff]
    %v844 = vld [vmem:[#allocation7 + $0x1430] sm:$0xff]
    %v845 = vld [vmem:[#allocation7 + $0x1438] sm:$0xff]
    %v846 = vld [vmem:[#allocation7 + $0x1440] sm:$0xff]
    %v847 = vld [vmem:[#allocation7 + $0x1448] sm:$0xff]
    %v848 = vld [vmem:[#allocation7 + $0x1450] sm:$0xff]
    %v849 = vld [vmem:[#allocation7 + $0x1458] sm:$0xff]
    %v850 = vld [vmem:[#allocation7 + $0x1460] sm:$0xff]
    %v851 = vld [vmem:[#allocation7 + $0x1468] sm:$0xff]
    %v852 = vld [vmem:[#allocation7 + $0x1470] sm:$0xff]
    %v853 = vld [vmem:[#allocation7 + $0x1478] sm:$0xff]
    %v854 = vld [vmem:[#allocation7 + $0x1480] sm:$0xff]
    %v855 = vld [vmem:[#allocation7 + $0x1488] sm:$0xff]
    %v856 = vld [vmem:[#allocation7 + $0x1490] sm:$0xff]
    %v857 = vld [vmem:[#allocation7 + $0x1498] sm:$0xff]
    %v858 = vld [vmem:[#allocation7 + $0x14a0] sm:$0xff]
    %v859 = vld [vmem:[#allocation7 + $0x14a8] sm:$0xff]
    %v860 = vld [vmem:[#allocation7 + $0x14b0] sm:$0xff]
    %v861 = vld [vmem:[#allocation7 + $0x14b8] sm:$0xff]
    %v862 = vld [vmem:[#allocation7 + $0x14c0] sm:$0xff]
    %v863 = vld [vmem:[#allocation7 + $0x14c8] sm:$0xff]
    %v864 = vld [vmem:[#allocation7 + $0x14d0] sm:$0xff]
    %v865 = vld [vmem:[#allocation7 + $0x14d8] sm:$0xff]
    %v866 = vld [vmem:[#allocation7 + $0x14e0] sm:$0xff]
    %v867 = vld [vmem:[#allocation7 + $0x14e8] sm:$0xff]
    %v868 = vld [vmem:[#allocation7 + $0x14f0] sm:$0xff]
    %v869 = vld [vmem:[#allocation7 + $0x14f8] sm:$0xff]
    %v870 = vld [vmem:[#allocation7 + $0x1500] sm:$0xff]
    %v871 = vld [vmem:[#allocation7 + $0x1508] sm:$0xff]
    %v872 = vld [vmem:[#allocation7 + $0x1510] sm:$0xff]
    %v873 = vld [vmem:[#allocation7 + $0x1518] sm:$0xff]
    %v874 = vld [vmem:[#allocation7 + $0x1520] sm:$0xff]
    %v875 = vld [vmem:[#allocation7 + $0x1528] sm:$0xff]
    %v876 = vld [vmem:[#allocation7 + $0x1530] sm:$0xff]
    %v877 = vld [vmem:[#allocation7 + $0x1538] sm:$0xff]
    %v878 = vld [vmem:[#allocation7 + $0x1540] sm:$0xff]
    %v879 = vld [vmem:[#allocation7 + $0x1548] sm:$0xff]
    %v880 = vld [vmem:[#allocation7 + $0x1550] sm:$0xff]
    %v881 = vld [vmem:[#allocation7 + $0x1558] sm:$0xff]
    %v882 = vld [vmem:[#allocation7 + $0x1560] sm:$0xff]
    %v883 = vld [vmem:[#allocation7 + $0x1568] sm:$0xff]
    %v884 = vld [vmem:[#allocation7 + $0x1570] sm:$0xff]
    %v885 = vld [vmem:[#allocation7 + $0x1578] sm:$0xff]
    %v886 = vld [vmem:[#allocation7 + $0x1580] sm:$0xff]
    %v887 = vld [vmem:[#allocation7 + $0x1588] sm:$0xff]
    %v888 = vld [vmem:[#allocation7 + $0x1590] sm:$0xff]
    %v889 = vld [vmem:[#allocation7 + $0x1598] sm:$0xff]
    %v890 = vld [vmem:[#allocation7 + $0x15a0] sm:$0xff]
    %v891 = vld [vmem:[#allocation7 + $0x15a8] sm:$0xff]
    %v892 = vld [vmem:[#allocation7 + $0x15b0] sm:$0xff]
    %v893 = vld [vmem:[#allocation7 + $0x15b8] sm:$0xff]
    %v894 = vld [vmem:[#allocation7 + $0x15c0] sm:$0xff]
    %v895 = vld [vmem:[#allocation7 + $0x15c8] sm:$0xff]
    %v896 = vld [vmem:[#allocation7 + $0x15d0] sm:$0xff]
    %v897 = vld [vmem:[#allocation7 + $0x15d8] sm:$0xff]
    %v898 = vld [vmem:[#allocation9] sm:$0xf]
    %v900 = vlaneseq
    %v901 = vshrl.u32 %v900, 7
    %v902 = vsub.s32 0, %v901
    %v903 = vrot.slane %v898, %v902
    %v904 = vlaneseq
    %v905 = vshrl.u32 %v904, 7
    %v906 = vsub.s32 1, %v905
    %v907 = vrot.slane %v898, %v906
    %v908 = vlaneseq
    %v909 = vshrl.u32 %v908, 7
    %v910 = vsub.s32 2, %v909
    %v911 = vrot.slane %v898, %v910
    %v912 = vlaneseq
    %v913 = vshrl.u32 %v912, 7
    %v914 = vsub.s32 3, %v913
    %v915 = vrot.slane %v898, %v914
    %v1620 = vunpack.c.l.b16 %v198
    %v1621 = vunpack.c.h.b16 %v198
    %v1622 = vunpack.c.l.b16 %v199
    %v1623 = vunpack.c.h.b16 %v199
    %v1624 = vunpack.c.l.b16 %v200
    %v1625 = vunpack.c.h.b16 %v200
    %v1626 = vunpack.c.l.b16 %v201
    %v1627 = vunpack.c.h.b16 %v201
    %v1628 = vunpack.c.l.b16 %v202
    %v1629 = vunpack.c.h.b16 %v202
    %v1630 = vunpack.c.l.b16 %v203
    %v1631 = vunpack.c.h.b16 %v203
    %v1632 = vunpack.c.l.b16 %v204
    %v1633 = vunpack.c.h.b16 %v204
    %v1634 = vunpack.c.l.b16 %v205
    %v1635 = vunpack.c.h.b16 %v205
    %v1636 = vunpack.c.l.b16 %v206
    %v1637 = vunpack.c.h.b16 %v206
    %v1638 = vunpack.c.l.b16 %v207
    %v1639 = vunpack.c.h.b16 %v207
    %v1640 = vunpack.c.l.b16 %v208
    %v1641 = vunpack.c.h.b16 %v208
    %v1642 = vunpack.c.l.b16 %v209
    %v1643 = vunpack.c.h.b16 %v209
    %v1644 = vunpack.c.l.b16 %v210
    %v1645 = vunpack.c.h.b16 %v210
    %v1646 = vunpack.c.l.b16 %v211
    %v1647 = vunpack.c.h.b16 %v211
    %v1648 = vunpack.c.l.b16 %v212
    %v1649 = vunpack.c.h.b16 %v212
    %v1650 = vunpack.c.l.b16 %v213
    %v1651 = vunpack.c.h.b16 %v213
    %v1652 = vunpack.c.l.b16 %v214
    %v1653 = vunpack.c.h.b16 %v214
    %v1654 = vunpack.c.l.b16 %v215
    %v1655 = vunpack.c.h.b16 %v215
    %v1656 = vunpack.c.l.b16 %v216
    %v1657 = vunpack.c.h.b16 %v216
    %v1658 = vunpack.c.l.b16 %v217
    %v1659 = vunpack.c.h.b16 %v217
    %v1660 = vunpack.c.l.b16 %v218
    %v1661 = vunpack.c.h.b16 %v218
    %v1662 = vunpack.c.l.b16 %v219
    %v1663 = vunpack.c.h.b16 %v219
    %v1664 = vunpack.c.l.b16 %v220
    %v1665 = vunpack.c.h.b16 %v220
    %v1666 = vunpack.c.l.b16 %v221
    %v1667 = vunpack.c.h.b16 %v221
    %v1668 = vunpack.c.l.b16 %v222
    %v1669 = vunpack.c.h.b16 %v222
    %v1670 = vunpack.c.l.b16 %v223
    %v1671 = vunpack.c.h.b16 %v223
    %v1672 = vunpack.c.l.b16 %v224
    %v1673 = vunpack.c.h.b16 %v224
    %v1674 = vunpack.c.l.b16 %v225
    %v1675 = vunpack.c.h.b16 %v225
    %v1676 = vunpack.c.l.b16 %v226
    %v1677 = vunpack.c.h.b16 %v226
    %v1678 = vunpack.c.l.b16 %v227
    %v1679 = vunpack.c.h.b16 %v227
    %v1680 = vunpack.c.l.b16 %v228
    %v1681 = vunpack.c.h.b16 %v228
    %v1682 = vunpack.c.l.b16 %v229
    %v1683 = vunpack.c.h.b16 %v229
    %v1684 = vunpack.c.l.b16 %v230
    %v1685 = vunpack.c.h.b16 %v230
    %v1686 = vunpack.c.l.b16 %v231
    %v1687 = vunpack.c.h.b16 %v231
    %v1688 = vunpack.c.l.b16 %v232
    %v1689 = vunpack.c.h.b16 %v232
    %v1690 = vunpack.c.l.b16 %v233
    %v1691 = vunpack.c.h.b16 %v233
    %v1692 = vunpack.c.l.b16 %v234
    %v1693 = vunpack.c.h.b16 %v234
    %v1694 = vunpack.c.l.b16 %v235
    %v1695 = vunpack.c.h.b16 %v235
    %v1696 = vunpack.c.l.b16 %v236
    %v1697 = vunpack.c.h.b16 %v236
    %v1698 = vunpack.c.l.b16 %v237
    %v1699 = vunpack.c.h.b16 %v237
    %v1700 = vunpack.c.l.b16 %v238
    %v1701 = vunpack.c.h.b16 %v238
    %v1702 = vunpack.c.l.b16 %v239
    %v1703 = vunpack.c.h.b16 %v239
    %v1704 = vunpack.c.l.b16 %v240
    %v1705 = vunpack.c.h.b16 %v240
    %v1706 = vunpack.c.l.b16 %v241
    %v1707 = vunpack.c.h.b16 %v241
    %v1708 = vunpack.c.l.b16 %v242
    %v1709 = vunpack.c.h.b16 %v242
    %v1710 = vunpack.c.l.b16 %v243
    %v1711 = vunpack.c.h.b16 %v243
    %v1712 = vunpack.c.l.b16 %v244
    %v1713 = vunpack.c.h.b16 %v244
    %v1714 = vunpack.c.l.b16 %v245
    %v1715 = vunpack.c.h.b16 %v245
    %v1716 = vunpack.c.l.b16 %v246
    %v1717 = vunpack.c.h.b16 %v246
    %v1718 = vunpack.c.l.b16 %v247
    %v1719 = vunpack.c.h.b16 %v247
    %v1720 = vunpack.c.l.b16 %v248
    %v1721 = vunpack.c.h.b16 %v248
    %v1722 = vunpack.c.l.b16 %v249
    %v1723 = vunpack.c.h.b16 %v249
    %v1724 = vunpack.c.l.b16 %v250
    %v1725 = vunpack.c.h.b16 %v250
    %v1726 = vunpack.c.l.b16 %v251
    %v1727 = vunpack.c.h.b16 %v251
    %v1728 = vunpack.c.l.b16 %v252
    %v1729 = vunpack.c.h.b16 %v252
    %v1730 = vunpack.c.l.b16 %v253
    %v1731 = vunpack.c.h.b16 %v253
    %v1732 = vunpack.c.l.b16 %v254
    %v1733 = vunpack.c.h.b16 %v254
    %v1734 = vunpack.c.l.b16 %v255
    %v1735 = vunpack.c.h.b16 %v255
    %v1736 = vunpack.c.l.b16 %v256
    %v1737 = vunpack.c.h.b16 %v256
    %v1738 = vunpack.c.l.b16 %v257
    %v1739 = vunpack.c.h.b16 %v257
    %v1740 = vunpack.c.l.b16 %v258
    %v1741 = vunpack.c.h.b16 %v258
    %v1742 = vunpack.c.l.b16 %v259
    %v1743 = vunpack.c.h.b16 %v259
    %v1744 = vunpack.c.l.b16 %v260
    %v1745 = vunpack.c.h.b16 %v260
    %v1746 = vunpack.c.l.b16 %v261
    %v1747 = vunpack.c.h.b16 %v261
    %v1748 = vunpack.c.l.b16 %v262
    %v1749 = vunpack.c.h.b16 %v262
    %v1750 = vunpack.c.l.b16 %v263
    %v1751 = vunpack.c.h.b16 %v263
    %v1752 = vunpack.c.l.b16 %v264
    %v1753 = vunpack.c.h.b16 %v264
    %v1754 = vunpack.c.l.b16 %v265
    %v1755 = vunpack.c.h.b16 %v265
    %v1756 = vunpack.c.l.b16 %v266
    %v1757 = vunpack.c.h.b16 %v266
    %v1758 = vunpack.c.l.b16 %v267
    %v1759 = vunpack.c.h.b16 %v267
    %v1760 = vunpack.c.l.b16 %v268
    %v1761 = vunpack.c.h.b16 %v268
    %v1762 = vunpack.c.l.b16 %v269
    %v1763 = vunpack.c.h.b16 %v269
    %v1764 = vunpack.c.l.b16 %v270
    %v1765 = vunpack.c.h.b16 %v270
    %v1766 = vunpack.c.l.b16 %v271
    %v1767 = vunpack.c.h.b16 %v271
    %v1768 = vunpack.c.l.b16 %v272
    %v1769 = vunpack.c.h.b16 %v272
    %v1770 = vunpack.c.l.b16 %v273
    %v1771 = vunpack.c.h.b16 %v273
    %v1772 = vunpack.c.l.b16 %v274
    %v1773 = vunpack.c.h.b16 %v274
    %v1774 = vunpack.c.l.b16 %v275
    %v1775 = vunpack.c.h.b16 %v275
    %v1776 = vunpack.c.l.b16 %v276
    %v1777 = vunpack.c.h.b16 %v276
    %v1778 = vunpack.c.l.b16 %v277
    %v1779 = vunpack.c.h.b16 %v277
    %v1780 = vunpack.c.l.b16 %v278
    %v1781 = vunpack.c.h.b16 %v278
    %v1782 = vunpack.c.l.b16 %v279
    %v1783 = vunpack.c.h.b16 %v279
    %v1784 = vunpack.c.l.b16 %v280
    %v1785 = vunpack.c.h.b16 %v280
    %v1786 = vunpack.c.l.b16 %v281
    %v1787 = vunpack.c.h.b16 %v281
    %v1788 = vunpack.c.l.b16 %v282
    %v1789 = vunpack.c.h.b16 %v282
    %v1790 = vunpack.c.l.b16 %v283
    %v1791 = vunpack.c.h.b16 %v283
    %v1792 = vunpack.c.l.b16 %v284
    %v1793 = vunpack.c.h.b16 %v284
    %v1794 = vunpack.c.l.b16 %v285
    %v1795 = vunpack.c.h.b16 %v285
    %v1796 = vunpack.c.l.b16 %v286
    %v1797 = vunpack.c.h.b16 %v286
    %v1798 = vunpack.c.l.b16 %v287
    %v1799 = vunpack.c.h.b16 %v287
    %v1800 = vunpack.c.l.b16 %v288
    %v1801 = vunpack.c.h.b16 %v288
    %v1802 = vunpack.c.l.b16 %v289
    %v1803 = vunpack.c.h.b16 %v289
    %v1804 = vunpack.c.l.b16 %v290
    %v1805 = vunpack.c.h.b16 %v290
    %v1806 = vunpack.c.l.b16 %v291
    %v1807 = vunpack.c.h.b16 %v291
    %v1808 = vunpack.c.l.b16 %v292
    %v1809 = vunpack.c.h.b16 %v292
    %v1810 = vunpack.c.l.b16 %v293
    %v1811 = vunpack.c.h.b16 %v293
    %v1812 = vunpack.c.l.b16 %v294
    %v1813 = vunpack.c.h.b16 %v294
    %v1814 = vunpack.c.l.b16 %v295
    %v1815 = vunpack.c.h.b16 %v295
    %v1816 = vunpack.c.l.b16 %v296
    %v1817 = vunpack.c.h.b16 %v296
    %v1818 = vunpack.c.l.b16 %v297
    %v1819 = vunpack.c.h.b16 %v297
    %v1820 = vunpack.c.l.b16 %v298
    %v1821 = vunpack.c.h.b16 %v298
    %v1822 = vunpack.c.l.b16 %v299
    %v1823 = vunpack.c.h.b16 %v299
    %v1824 = vunpack.c.l.b16 %v300
    %v1825 = vunpack.c.h.b16 %v300
    %v1826 = vunpack.c.l.b16 %v301
    %v1827 = vunpack.c.h.b16 %v301
    %v1828 = vunpack.c.l.b16 %v302
    %v1829 = vunpack.c.h.b16 %v302
    %v1830 = vunpack.c.l.b16 %v303
    %v1831 = vunpack.c.h.b16 %v303
    %v1832 = vunpack.c.l.b16 %v304
    %v1833 = vunpack.c.h.b16 %v304
    %v1834 = vunpack.c.l.b16 %v305
    %v1835 = vunpack.c.h.b16 %v305
    %v1836 = vunpack.c.l.b16 %v306
    %v1837 = vunpack.c.h.b16 %v306
    %v1838 = vunpack.c.l.b16 %v307
    %v1839 = vunpack.c.h.b16 %v307
    %v1840 = vunpack.c.l.b16 %v308
    %v1841 = vunpack.c.h.b16 %v308
    %v1842 = vunpack.c.l.b16 %v309
    %v1843 = vunpack.c.h.b16 %v309
    %v1844 = vunpack.c.l.b16 %v310
    %v1845 = vunpack.c.h.b16 %v310
    %v1846 = vunpack.c.l.b16 %v311
    %v1847 = vunpack.c.h.b16 %v311
    %v1848 = vunpack.c.l.b16 %v312
    %v1849 = vunpack.c.h.b16 %v312
    %v1850 = vunpack.c.l.b16 %v313
    %v1851 = vunpack.c.h.b16 %v313
    %v1852 = vunpack.c.l.b16 %v314
    %v1853 = vunpack.c.h.b16 %v314
    %v1854 = vunpack.c.l.b16 %v315
    %v1855 = vunpack.c.h.b16 %v315
    %v1856 = vunpack.c.l.b16 %v316
    %v1857 = vunpack.c.h.b16 %v316
    %v1858 = vunpack.c.l.b16 %v317
    %v1859 = vunpack.c.h.b16 %v317
    %v1860 = vunpack.c.l.b16 %v318
    %v1861 = vunpack.c.h.b16 %v318
    %v1862 = vunpack.c.l.b16 %v319
    %v1863 = vunpack.c.h.b16 %v319
    %v1864 = vunpack.c.l.b16 %v320
    %v1865 = vunpack.c.h.b16 %v320
    %v1866 = vunpack.c.l.b16 %v321
    %v1867 = vunpack.c.h.b16 %v321
    %v1868 = vunpack.c.l.b16 %v322
    %v1869 = vunpack.c.h.b16 %v322
    %v1870 = vunpack.c.l.b16 %v323
    %v1871 = vunpack.c.h.b16 %v323
    %v1872 = vunpack.c.l.b16 %v324
    %v1873 = vunpack.c.h.b16 %v324
    %v1874 = vunpack.c.l.b16 %v325
    %v1875 = vunpack.c.h.b16 %v325
    %v1876 = vunpack.c.l.b16 %v326
    %v1877 = vunpack.c.h.b16 %v326
    %v1878 = vunpack.c.l.b16 %v327
    %v1879 = vunpack.c.h.b16 %v327
    %v1880 = vunpack.c.l.b16 %v328
    %v1881 = vunpack.c.h.b16 %v328
    %v1882 = vunpack.c.l.b16 %v329
    %v1883 = vunpack.c.h.b16 %v329
    %v1884 = vunpack.c.l.b16 %v330
    %v1885 = vunpack.c.h.b16 %v330
    %v1886 = vunpack.c.l.b16 %v331
    %v1887 = vunpack.c.h.b16 %v331
    %v1888 = vunpack.c.l.b16 %v332
    %v1889 = vunpack.c.h.b16 %v332
    %v1890 = vunpack.c.l.b16 %v333
    %v1891 = vunpack.c.h.b16 %v333
    %v1892 = vunpack.c.l.b16 %v334
    %v1893 = vunpack.c.h.b16 %v334
    %v1894 = vunpack.c.l.b16 %v335
    %v1895 = vunpack.c.h.b16 %v335
    %v1896 = vunpack.c.l.b16 %v336
    %v1897 = vunpack.c.h.b16 %v336
    %v1898 = vunpack.c.l.b16 %v337
    %v1899 = vunpack.c.h.b16 %v337
    %v1900 = vunpack.c.l.b16 %v338
    %v1901 = vunpack.c.h.b16 %v338
    %v1902 = vunpack.c.l.b16 %v339
    %v1903 = vunpack.c.h.b16 %v339
    %v1904 = vunpack.c.l.b16 %v340
    %v1905 = vunpack.c.h.b16 %v340
    %v1906 = vunpack.c.l.b16 %v341
    %v1907 = vunpack.c.h.b16 %v341
    %v1908 = vunpack.c.l.b16 %v342
    %v1909 = vunpack.c.h.b16 %v342
    %v1910 = vunpack.c.l.b16 %v343
    %v1911 = vunpack.c.h.b16 %v343
    %v1912 = vunpack.c.l.b16 %v344
    %v1913 = vunpack.c.h.b16 %v344
    %v1914 = vunpack.c.l.b16 %v345
    %v1915 = vunpack.c.h.b16 %v345
    %v1916 = vunpack.c.l.b16 %v346
    %v1917 = vunpack.c.h.b16 %v346
    %v1918 = vunpack.c.l.b16 %v347
    %v1919 = vunpack.c.h.b16 %v347
    %v1920 = vunpack.c.l.b16 %v348
    %v1921 = vunpack.c.h.b16 %v348
    %v1922 = vunpack.c.l.b16 %v349
    %v1923 = vunpack.c.h.b16 %v349
    %v1924 = vunpack.c.l.b16 %v350
    %v1925 = vunpack.c.h.b16 %v350
    %v1926 = vunpack.c.l.b16 %v351
    %v1927 = vunpack.c.h.b16 %v351
    %v1928 = vunpack.c.l.b16 %v352
    %v1929 = vunpack.c.h.b16 %v352
    %v1930 = vunpack.c.l.b16 %v353
    %v1931 = vunpack.c.h.b16 %v353
    %v1932 = vunpack.c.l.b16 %v354
    %v1933 = vunpack.c.h.b16 %v354
    %v1934 = vunpack.c.l.b16 %v355
    %v1935 = vunpack.c.h.b16 %v355
    %v1936 = vunpack.c.l.b16 %v356
    %v1937 = vunpack.c.h.b16 %v356
    %v1938 = vunpack.c.l.b16 %v357
    %v1939 = vunpack.c.h.b16 %v357
    %v1940 = vunpack.c.l.b16 %v358
    %v1941 = vunpack.c.h.b16 %v358
    %v1942 = vunpack.c.l.b16 %v359
    %v1943 = vunpack.c.h.b16 %v359
    %v1944 = vunpack.c.l.b16 %v360
    %v1945 = vunpack.c.h.b16 %v360
    %v1946 = vunpack.c.l.b16 %v361
    %v1947 = vunpack.c.h.b16 %v361
    %v1948 = vunpack.c.l.b16 %v362
    %v1949 = vunpack.c.h.b16 %v362
    %v1950 = vunpack.c.l.b16 %v363
    %v1951 = vunpack.c.h.b16 %v363
    %v1952 = vunpack.c.l.b16 %v364
    %v1953 = vunpack.c.h.b16 %v364
    %v1954 = vunpack.c.l.b16 %v365
    %v1955 = vunpack.c.h.b16 %v365
    %v1956 = vunpack.c.l.b16 %v366
    %v1957 = vunpack.c.h.b16 %v366
    %v1958 = vunpack.c.l.b16 %v367
    %v1959 = vunpack.c.h.b16 %v367
    %v1960 = vunpack.c.l.b16 %v368
    %v1961 = vunpack.c.h.b16 %v368
    %v1962 = vunpack.c.l.b16 %v369
    %v1963 = vunpack.c.h.b16 %v369
    %v1964 = vunpack.c.l.b16 %v370
    %v1965 = vunpack.c.h.b16 %v370
    %v1966 = vunpack.c.l.b16 %v371
    %v1967 = vunpack.c.h.b16 %v371
    %v1968 = vunpack.c.l.b16 %v372
    %v1969 = vunpack.c.h.b16 %v372
    %v1970 = vunpack.c.l.b16 %v373
    %v1971 = vunpack.c.h.b16 %v373
    %v1972 = vunpack.c.l.b16 %v374
    %v1973 = vunpack.c.h.b16 %v374
    %v1974 = vunpack.c.l.b16 %v375
    %v1975 = vunpack.c.h.b16 %v375
    %v1976 = vunpack.c.l.b16 %v376
    %v1977 = vunpack.c.h.b16 %v376
    %v1978 = vunpack.c.l.b16 %v377
    %v1979 = vunpack.c.h.b16 %v377
    %v1980 = vunpack.c.l.b16 %v378
    %v1981 = vunpack.c.h.b16 %v378
    %v1982 = vunpack.c.l.b16 %v379
    %v1983 = vunpack.c.h.b16 %v379
    %v1984 = vunpack.c.l.b16 %v380
    %v1985 = vunpack.c.h.b16 %v380
    %v1986 = vunpack.c.l.b16 %v381
    %v1987 = vunpack.c.h.b16 %v381
    %v1988 = vunpack.c.l.b16 %v382
    %v1989 = vunpack.c.h.b16 %v382
    %v1990 = vunpack.c.l.b16 %v383
    %v1991 = vunpack.c.h.b16 %v383
    %v1992 = vunpack.c.l.b16 %v384
    %v1993 = vunpack.c.h.b16 %v384
    %v1994 = vunpack.c.l.b16 %v385
    %v1995 = vunpack.c.h.b16 %v385
    %v1996 = vunpack.c.l.b16 %v386
    %v1997 = vunpack.c.h.b16 %v386
    %v1998 = vunpack.c.l.b16 %v387
    %v1999 = vunpack.c.h.b16 %v387
    %v2000 = vunpack.c.l.b16 %v388
    %v2001 = vunpack.c.h.b16 %v388
    %v2002 = vunpack.c.l.b16 %v389
    %v2003 = vunpack.c.h.b16 %v389
    %v2004 = vunpack.c.l.b16 %v390
    %v2005 = vunpack.c.h.b16 %v390
    %v2006 = vunpack.c.l.b16 %v391
    %v2007 = vunpack.c.h.b16 %v391
    %v2008 = vunpack.c.l.b16 %v392
    %v2009 = vunpack.c.h.b16 %v392
    %v2010 = vunpack.c.l.b16 %v393
    %v2011 = vunpack.c.h.b16 %v393
    %v2012 = vunpack.c.l.b16 %v394
    %v2013 = vunpack.c.h.b16 %v394
    %v2014 = vunpack.c.l.b16 %v395
    %v2015 = vunpack.c.h.b16 %v395
    %v2016 = vunpack.c.l.b16 %v396
    %v2017 = vunpack.c.h.b16 %v396
    %v2018 = vunpack.c.l.b16 %v397
    %v2019 = vunpack.c.h.b16 %v397
    %v2020 = vunpack.c.l.b16 %v398
    %v2021 = vunpack.c.h.b16 %v398
    %v2022 = vunpack.c.l.b16 %v399
    %v2023 = vunpack.c.h.b16 %v399
    %v2024 = vunpack.c.l.b16 %v400
    %v2025 = vunpack.c.h.b16 %v400
    %v2026 = vunpack.c.l.b16 %v401
    %v2027 = vunpack.c.h.b16 %v401
    %v2028 = vunpack.c.l.b16 %v402
    %v2029 = vunpack.c.h.b16 %v402
    %v2030 = vunpack.c.l.b16 %v403
    %v2031 = vunpack.c.h.b16 %v403
    %v2032 = vunpack.c.l.b16 %v404
    %v2033 = vunpack.c.h.b16 %v404
    %v2034 = vunpack.c.l.b16 %v405
    %v2035 = vunpack.c.h.b16 %v405
    %v2036 = vunpack.c.l.b16 %v406
    %v2037 = vunpack.c.h.b16 %v406
    %v2038 = vunpack.c.l.b16 %v407
    %v2039 = vunpack.c.h.b16 %v407
    %v2040 = vunpack.c.l.b16 %v408
    %v2041 = vunpack.c.h.b16 %v408
    %v2042 = vunpack.c.l.b16 %v409
    %v2043 = vunpack.c.h.b16 %v409
    %v2044 = vunpack.c.l.b16 %v410
    %v2045 = vunpack.c.h.b16 %v410
    %v2046 = vunpack.c.l.b16 %v411
    %v2047 = vunpack.c.h.b16 %v411
    %v2048 = vunpack.c.l.b16 %v412
    %v2049 = vunpack.c.h.b16 %v412
    %v2050 = vunpack.c.l.b16 %v413
    %v2051 = vunpack.c.h.b16 %v413
    %v2052 = vunpack.c.l.b16 %v414
    %v2053 = vunpack.c.h.b16 %v414
    %v2054 = vunpack.c.l.b16 %v415
    %v2055 = vunpack.c.h.b16 %v415
    %v2056 = vunpack.c.l.b16 %v416
    %v2057 = vunpack.c.h.b16 %v416
    %v2058 = vunpack.c.l.b16 %v417
    %v2059 = vunpack.c.h.b16 %v417
    %v2060 = vunpack.c.l.b16 %v418
    %v2061 = vunpack.c.h.b16 %v418
    %v2062 = vunpack.c.l.b16 %v419
    %v2063 = vunpack.c.h.b16 %v419
    %v2064 = vunpack.c.l.b16 %v420
    %v2065 = vunpack.c.h.b16 %v420
    %v2066 = vunpack.c.l.b16 %v421
    %v2067 = vunpack.c.h.b16 %v421
    %v2068 = vunpack.c.l.b16 %v422
    %v2069 = vunpack.c.h.b16 %v422
    %v2070 = vunpack.c.l.b16 %v423
    %v2071 = vunpack.c.h.b16 %v423
    %v2072 = vunpack.c.l.b16 %v424
    %v2073 = vunpack.c.h.b16 %v424
    %v2074 = vunpack.c.l.b16 %v425
    %v2075 = vunpack.c.h.b16 %v425
    %v2076 = vunpack.c.l.b16 %v426
    %v2077 = vunpack.c.h.b16 %v426
    %v2078 = vunpack.c.l.b16 %v427
    %v2079 = vunpack.c.h.b16 %v427
    %v2080 = vunpack.c.l.b16 %v428
    %v2081 = vunpack.c.h.b16 %v428
    %v2082 = vunpack.c.l.b16 %v429
    %v2083 = vunpack.c.h.b16 %v429
    %v2084 = vunpack.c.l.b16 %v430
    %v2085 = vunpack.c.h.b16 %v430
    %v2086 = vunpack.c.l.b16 %v431
    %v2087 = vunpack.c.h.b16 %v431
    %v2088 = vunpack.c.l.b16 %v432
    %v2089 = vunpack.c.h.b16 %v432
    %v2090 = vunpack.c.l.b16 %v433
    %v2091 = vunpack.c.h.b16 %v433
    %v2092 = vunpack.c.l.b16 %v434
    %v2093 = vunpack.c.h.b16 %v434
    %v2094 = vunpack.c.l.b16 %v435
    %v2095 = vunpack.c.h.b16 %v435
    %v2096 = vunpack.c.l.b16 %v436
    %v2097 = vunpack.c.h.b16 %v436
    %v2098 = vunpack.c.l.b16 %v437
    %v2099 = vunpack.c.h.b16 %v437
    %v2100 = vunpack.c.l.b16 %v438
    %v2101 = vunpack.c.h.b16 %v438
    %v2102 = vunpack.c.l.b16 %v439
    %v2103 = vunpack.c.h.b16 %v439
    %v2104 = vunpack.c.l.b16 %v440
    %v2105 = vunpack.c.h.b16 %v440
    %v2106 = vunpack.c.l.b16 %v441
    %v2107 = vunpack.c.h.b16 %v441
    %v2108 = vunpack.c.l.b16 %v442
    %v2109 = vunpack.c.h.b16 %v442
    %v2110 = vunpack.c.l.b16 %v443
    %v2111 = vunpack.c.h.b16 %v443
    %v2112 = vunpack.c.l.b16 %v444
    %v2113 = vunpack.c.h.b16 %v444
    %v2114 = vunpack.c.l.b16 %v445
    %v2115 = vunpack.c.h.b16 %v445
    %v2116 = vunpack.c.l.b16 %v446
    %v2117 = vunpack.c.h.b16 %v446
    %v2118 = vunpack.c.l.b16 %v447
    %v2119 = vunpack.c.h.b16 %v447
    %v2120 = vunpack.c.l.b16 %v448
    %v2121 = vunpack.c.h.b16 %v448
    %v2122 = vunpack.c.l.b16 %v449
    %v2123 = vunpack.c.h.b16 %v449
    %v2124 = vunpack.c.l.b16 %v450
    %v2125 = vunpack.c.h.b16 %v450
    %v2126 = vunpack.c.l.b16 %v451
    %v2127 = vunpack.c.h.b16 %v451
    %v2128 = vunpack.c.l.b16 %v452
    %v2129 = vunpack.c.h.b16 %v452
    %v2130 = vunpack.c.l.b16 %v453
    %v2131 = vunpack.c.h.b16 %v453
    %v2132 = vunpack.c.l.b16 %v454
    %v2133 = vunpack.c.h.b16 %v454
    %v2134 = vunpack.c.l.b16 %v455
    %v2135 = vunpack.c.h.b16 %v455
    %v2136 = vunpack.c.l.b16 %v456
    %v2137 = vunpack.c.h.b16 %v456
    %v2138 = vunpack.c.l.b16 %v457
    %v2139 = vunpack.c.h.b16 %v457
    %v2140 = vunpack.c.l.b16 %v458
    %v2141 = vunpack.c.h.b16 %v458
    %v2142 = vunpack.c.l.b16 %v459
    %v2143 = vunpack.c.h.b16 %v459
    %v2144 = vunpack.c.l.b16 %v460
    %v2145 = vunpack.c.h.b16 %v460
    %v2146 = vunpack.c.l.b16 %v461
    %v2147 = vunpack.c.h.b16 %v461
    %v2148 = vunpack.c.l.b16 %v462
    %v2149 = vunpack.c.h.b16 %v462
    %v2150 = vunpack.c.l.b16 %v463
    %v2151 = vunpack.c.h.b16 %v463
    %v2152 = vunpack.c.l.b16 %v464
    %v2153 = vunpack.c.h.b16 %v464
    %v2154 = vunpack.c.l.b16 %v465
    %v2155 = vunpack.c.h.b16 %v465
    %v2156 = vunpack.c.l.b16 %v466
    %v2157 = vunpack.c.h.b16 %v466
    %v2158 = vunpack.c.l.b16 %v467
    %v2159 = vunpack.c.h.b16 %v467
    %v2160 = vunpack.c.l.b16 %v468
    %v2161 = vunpack.c.h.b16 %v468
    %v2162 = vunpack.c.l.b16 %v469
    %v2163 = vunpack.c.h.b16 %v469
    %v2164 = vunpack.c.l.b16 %v470
    %v2165 = vunpack.c.h.b16 %v470
    %v2166 = vunpack.c.l.b16 %v471
    %v2167 = vunpack.c.h.b16 %v471
    %v2168 = vunpack.c.l.b16 %v472
    %v2169 = vunpack.c.h.b16 %v472
    %v2170 = vunpack.c.l.b16 %v473
    %v2171 = vunpack.c.h.b16 %v473
    %v2172 = vunpack.c.l.b16 %v474
    %v2173 = vunpack.c.h.b16 %v474
    %v2174 = vunpack.c.l.b16 %v475
    %v2175 = vunpack.c.h.b16 %v475
    %v2176 = vunpack.c.l.b16 %v476
    %v2177 = vunpack.c.h.b16 %v476
    %v2178 = vunpack.c.l.b16 %v477
    %v2179 = vunpack.c.h.b16 %v477
    %v2180 = vunpack.c.l.b16 %v478
    %v2181 = vunpack.c.h.b16 %v478
    %v2182 = vunpack.c.l.b16 %v479
    %v2183 = vunpack.c.h.b16 %v479
    %v2184 = vunpack.c.l.b16 %v480
    %v2185 = vunpack.c.h.b16 %v480
    %v2186 = vunpack.c.l.b16 %v481
    %v2187 = vunpack.c.h.b16 %v481
    %v2188 = vunpack.c.l.b16 %v482
    %v2189 = vunpack.c.h.b16 %v482
    %v2190 = vunpack.c.l.b16 %v483
    %v2191 = vunpack.c.h.b16 %v483
    %v2192 = vunpack.c.l.b16 %v484
    %v2193 = vunpack.c.h.b16 %v484
    %v2194 = vunpack.c.l.b16 %v485
    %v2195 = vunpack.c.h.b16 %v485
    %v2196 = vunpack.c.l.b16 %v486
    %v2197 = vunpack.c.h.b16 %v486
    %v2198 = vunpack.c.l.b16 %v487
    %v2199 = vunpack.c.h.b16 %v487
    %v2200 = vunpack.c.l.b16 %v488
    %v2201 = vunpack.c.h.b16 %v488
    %v2202 = vunpack.c.l.b16 %v489
    %v2203 = vunpack.c.h.b16 %v489
    %v2204 = vunpack.c.l.b16 %v490
    %v2205 = vunpack.c.h.b16 %v490
    %v2206 = vunpack.c.l.b16 %v491
    %v2207 = vunpack.c.h.b16 %v491
    %v2208 = vunpack.c.l.b16 %v492
    %v2209 = vunpack.c.h.b16 %v492
    %v2210 = vunpack.c.l.b16 %v493
    %v2211 = vunpack.c.h.b16 %v493
    %v2212 = vunpack.c.l.b16 %v494
    %v2213 = vunpack.c.h.b16 %v494
    %v2214 = vunpack.c.l.b16 %v495
    %v2215 = vunpack.c.h.b16 %v495
    %v2216 = vunpack.c.l.b16 %v496
    %v2217 = vunpack.c.h.b16 %v496
    %v2218 = vunpack.c.l.b16 %v497
    %v2219 = vunpack.c.h.b16 %v497
    %v2220 = vunpack.c.l.b16 %v498
    %v2221 = vunpack.c.h.b16 %v498
    %v2222 = vunpack.c.l.b16 %v499
    %v2223 = vunpack.c.h.b16 %v499
    %v2224 = vunpack.c.l.b16 %v500
    %v2225 = vunpack.c.h.b16 %v500
    %v2226 = vunpack.c.l.b16 %v501
    %v2227 = vunpack.c.h.b16 %v501
    %v2228 = vunpack.c.l.b16 %v502
    %v2229 = vunpack.c.h.b16 %v502
    %v2230 = vunpack.c.l.b16 %v503
    %v2231 = vunpack.c.h.b16 %v503
    %v2232 = vunpack.c.l.b16 %v504
    %v2233 = vunpack.c.h.b16 %v504
    %v2234 = vunpack.c.l.b16 %v505
    %v2235 = vunpack.c.h.b16 %v505
    %v2236 = vunpack.c.l.b16 %v506
    %v2237 = vunpack.c.h.b16 %v506
    %v2238 = vunpack.c.l.b16 %v507
    %v2239 = vunpack.c.h.b16 %v507
    %v2240 = vunpack.c.l.b16 %v508
    %v2241 = vunpack.c.h.b16 %v508
    %v2242 = vunpack.c.l.b16 %v509
    %v2243 = vunpack.c.h.b16 %v509
    %v2244 = vunpack.c.l.b16 %v510
    %v2245 = vunpack.c.h.b16 %v510
    %v2246 = vunpack.c.l.b16 %v511
    %v2247 = vunpack.c.h.b16 %v511
    %v2248 = vunpack.c.l.b16 %v512
    %v2249 = vunpack.c.h.b16 %v512
    %v2250 = vunpack.c.l.b16 %v513
    %v2251 = vunpack.c.h.b16 %v513
    %v2252 = vunpack.c.l.b16 %v514
    %v2253 = vunpack.c.h.b16 %v514
    %v2254 = vunpack.c.l.b16 %v515
    %v2255 = vunpack.c.h.b16 %v515
    %v2256 = vunpack.c.l.b16 %v516
    %v2257 = vunpack.c.h.b16 %v516
    %v2258 = vunpack.c.l.b16 %v517
    %v2259 = vunpack.c.h.b16 %v517
    %v2260 = vunpack.c.l.b16 %v518
    %v2261 = vunpack.c.h.b16 %v518
    %v2262 = vunpack.c.l.b16 %v519
    %v2263 = vunpack.c.h.b16 %v519
    %v2264 = vunpack.c.l.b16 %v520
    %v2265 = vunpack.c.h.b16 %v520
    %v2266 = vunpack.c.l.b16 %v521
    %v2267 = vunpack.c.h.b16 %v521
    %v2268 = vunpack.c.l.b16 %v522
    %v2269 = vunpack.c.h.b16 %v522
    %v2270 = vunpack.c.l.b16 %v523
    %v2271 = vunpack.c.h.b16 %v523
    %v2272 = vunpack.c.l.b16 %v524
    %v2273 = vunpack.c.h.b16 %v524
    %v2274 = vunpack.c.l.b16 %v525
    %v2275 = vunpack.c.h.b16 %v525
    %v2276 = vunpack.c.l.b16 %v526
    %v2277 = vunpack.c.h.b16 %v526
    %v2278 = vunpack.c.l.b16 %v527
    %v2279 = vunpack.c.h.b16 %v527
    %v2280 = vunpack.c.l.b16 %v528
    %v2281 = vunpack.c.h.b16 %v528
    %v2282 = vunpack.c.l.b16 %v529
    %v2283 = vunpack.c.h.b16 %v529
    %v2284 = vunpack.c.l.b16 %v530
    %v2285 = vunpack.c.h.b16 %v530
    %v2286 = vunpack.c.l.b16 %v531
    %v2287 = vunpack.c.h.b16 %v531
    %v2288 = vunpack.c.l.b16 %v532
    %v2289 = vunpack.c.h.b16 %v532
    %v2290 = vunpack.c.l.b16 %v533
    %v2291 = vunpack.c.h.b16 %v533
    %v2292 = vunpack.c.l.b16 %v534
    %v2293 = vunpack.c.h.b16 %v534
    %v2294 = vunpack.c.l.b16 %v535
    %v2295 = vunpack.c.h.b16 %v535
    %v2296 = vunpack.c.l.b16 %v536
    %v2297 = vunpack.c.h.b16 %v536
    %v2298 = vunpack.c.l.b16 %v537
    %v2299 = vunpack.c.h.b16 %v537
    %v2300 = vunpack.c.l.b16 %v538
    %v2301 = vunpack.c.h.b16 %v538
    %v2302 = vunpack.c.l.b16 %v539
    %v2303 = vunpack.c.h.b16 %v539
    %v2304 = vunpack.c.l.b16 %v540
    %v2305 = vunpack.c.h.b16 %v540
    %v2306 = vunpack.c.l.b16 %v541
    %v2307 = vunpack.c.h.b16 %v541
    %v2308 = vunpack.c.l.b16 %v542
    %v2309 = vunpack.c.h.b16 %v542
    %v2310 = vunpack.c.l.b16 %v543
    %v2311 = vunpack.c.h.b16 %v543
    %v2312 = vunpack.c.l.b16 %v544
    %v2313 = vunpack.c.h.b16 %v544
    %v2314 = vunpack.c.l.b16 %v545
    %v2315 = vunpack.c.h.b16 %v545
    %v2316 = vunpack.c.l.b16 %v546
    %v2317 = vunpack.c.h.b16 %v546
    %v2318 = vunpack.c.l.b16 %v547
    %v2319 = vunpack.c.h.b16 %v547
    %v2320 = vunpack.c.l.b16 %v548
    %v2321 = vunpack.c.h.b16 %v548
    %v2322 = vunpack.c.l.b16 %v549
    %v2323 = vunpack.c.h.b16 %v549
    %v2324 = vunpack.c.l.b16 %v550
    %v2325 = vunpack.c.h.b16 %v550
    %v2326 = vunpack.c.l.b16 %v551
    %v2327 = vunpack.c.h.b16 %v551
    %v2328 = vunpack.c.l.b16 %v552
    %v2329 = vunpack.c.h.b16 %v552
    %v2330 = vunpack.c.l.b16 %v553
    %v2331 = vunpack.c.h.b16 %v553
    %v2332 = vunpack.c.l.b16 %v554
    %v2333 = vunpack.c.h.b16 %v554
    %v2334 = vunpack.c.l.b16 %v555
    %v2335 = vunpack.c.h.b16 %v555
    %v2336 = vunpack.c.l.b16 %v556
    %v2337 = vunpack.c.h.b16 %v556
    %v2338 = vunpack.c.l.b16 %v557
    %v2339 = vunpack.c.h.b16 %v557
    %v2340 = vunpack.c.l.b16 %v558
    %v2341 = vunpack.c.h.b16 %v558
    %v2342 = vunpack.c.l.b16 %v559
    %v2343 = vunpack.c.h.b16 %v559
    %v2344 = vunpack.c.l.b16 %v560
    %v2345 = vunpack.c.h.b16 %v560
    %v2346 = vunpack.c.l.b16 %v561
    %v2347 = vunpack.c.h.b16 %v561
    %v2348 = vunpack.c.l.b16 %v562
    %v2349 = vunpack.c.h.b16 %v562
    %v2350 = vunpack.c.l.b16 %v563
    %v2351 = vunpack.c.h.b16 %v563
    %v2352 = vunpack.c.l.b16 %v564
    %v2353 = vunpack.c.h.b16 %v564
    %v2354 = vunpack.c.l.b16 %v565
    %v2355 = vunpack.c.h.b16 %v565
    %v2356 = vunpack.c.l.b16 %v566
    %v2357 = vunpack.c.h.b16 %v566
    %v2358 = vunpack.c.l.b16 %v567
    %v2359 = vunpack.c.h.b16 %v567
    %v2360 = vunpack.c.l.b16 %v568
    %v2361 = vunpack.c.h.b16 %v568
    %v2362 = vunpack.c.l.b16 %v569
    %v2363 = vunpack.c.h.b16 %v569
    %v2364 = vunpack.c.l.b16 %v570
    %v2365 = vunpack.c.h.b16 %v570
    %v2366 = vunpack.c.l.b16 %v571
    %v2367 = vunpack.c.h.b16 %v571
    %v2368 = vunpack.c.l.b16 %v572
    %v2369 = vunpack.c.h.b16 %v572
    %v2370 = vunpack.c.l.b16 %v573
    %v2371 = vunpack.c.h.b16 %v573
    %v2372 = vunpack.c.l.b16 %v574
    %v2373 = vunpack.c.h.b16 %v574
    %v2374 = vunpack.c.l.b16 %v575
    %v2375 = vunpack.c.h.b16 %v575
    %v2376 = vunpack.c.l.b16 %v576
    %v2377 = vunpack.c.h.b16 %v576
    %v2378 = vunpack.c.l.b16 %v577
    %v2379 = vunpack.c.h.b16 %v577
    %v2380 = vunpack.c.l.b16 %v578
    %v2381 = vunpack.c.h.b16 %v578
    %v2382 = vunpack.c.l.b16 %v579
    %v2383 = vunpack.c.h.b16 %v579
    %v2384 = vunpack.c.l.b16 %v580
    %v2385 = vunpack.c.h.b16 %v580
    %v2386 = vunpack.c.l.b16 %v581
    %v2387 = vunpack.c.h.b16 %v581
    %v2388 = vunpack.c.l.b16 %v582
    %v2389 = vunpack.c.h.b16 %v582
    %v2390 = vunpack.c.l.b16 %v583
    %v2391 = vunpack.c.h.b16 %v583
    %v2392 = vunpack.c.l.b16 %v584
    %v2393 = vunpack.c.h.b16 %v584
    %v2394 = vunpack.c.l.b16 %v585
    %v2395 = vunpack.c.h.b16 %v585
    %v2396 = vunpack.c.l.b16 %v586
    %v2397 = vunpack.c.h.b16 %v586
    %v2398 = vunpack.c.l.b16 %v587
    %v2399 = vunpack.c.h.b16 %v587
    %v2400 = vunpack.c.l.b16 %v588
    %v2401 = vunpack.c.h.b16 %v588
    %v2402 = vunpack.c.l.b16 %v589
    %v2403 = vunpack.c.h.b16 %v589
    %v2404 = vunpack.c.l.b16 %v590
    %v2405 = vunpack.c.h.b16 %v590
    %v2406 = vunpack.c.l.b16 %v591
    %v2407 = vunpack.c.h.b16 %v591
    %v2408 = vunpack.c.l.b16 %v592
    %v2409 = vunpack.c.h.b16 %v592
    %v2410 = vunpack.c.l.b16 %v593
    %v2411 = vunpack.c.h.b16 %v593
    %v2412 = vunpack.c.l.b16 %v594
    %v2413 = vunpack.c.h.b16 %v594
    %v2414 = vunpack.c.l.b16 %v595
    %v2415 = vunpack.c.h.b16 %v595
    %v2416 = vunpack.c.l.b16 %v596
    %v2417 = vunpack.c.h.b16 %v596
    %v2418 = vunpack.c.l.b16 %v597
    %v2419 = vunpack.c.h.b16 %v597
    %v2420 = vunpack.c.l.b16 %v598
    %v2421 = vunpack.c.h.b16 %v598
    %v2422 = vunpack.c.l.b16 %v599
    %v2423 = vunpack.c.h.b16 %v599
    %v2424 = vunpack.c.l.b16 %v600
    %v2425 = vunpack.c.h.b16 %v600
    %v2426 = vunpack.c.l.b16 %v601
    %v2427 = vunpack.c.h.b16 %v601
    %v2428 = vunpack.c.l.b16 %v602
    %v2429 = vunpack.c.h.b16 %v602
    %v2430 = vunpack.c.l.b16 %v603
    %v2431 = vunpack.c.h.b16 %v603
    %v2432 = vunpack.c.l.b16 %v604
    %v2433 = vunpack.c.h.b16 %v604
    %v2434 = vunpack.c.l.b16 %v605
    %v2435 = vunpack.c.h.b16 %v605
    %v2436 = vunpack.c.l.b16 %v606
    %v2437 = vunpack.c.h.b16 %v606
    %v2438 = vunpack.c.l.b16 %v607
    %v2439 = vunpack.c.h.b16 %v607
    %v2440 = vunpack.c.l.b16 %v608
    %v2441 = vunpack.c.h.b16 %v608
    %v2442 = vunpack.c.l.b16 %v609
    %v2443 = vunpack.c.h.b16 %v609
    %v2444 = vunpack.c.l.b16 %v610
    %v2445 = vunpack.c.h.b16 %v610
    %v2446 = vunpack.c.l.b16 %v611
    %v2447 = vunpack.c.h.b16 %v611
    %v2448 = vunpack.c.l.b16 %v612
    %v2449 = vunpack.c.h.b16 %v612
    %v2450 = vunpack.c.l.b16 %v613
    %v2451 = vunpack.c.h.b16 %v613
    %v2452 = vunpack.c.l.b16 %v614
    %v2453 = vunpack.c.h.b16 %v614
    %v2454 = vunpack.c.l.b16 %v615
    %v2455 = vunpack.c.h.b16 %v615
    %v2456 = vunpack.c.l.b16 %v616
    %v2457 = vunpack.c.h.b16 %v616
    %v2458 = vunpack.c.l.b16 %v617
    %v2459 = vunpack.c.h.b16 %v617
    %v2460 = vunpack.c.l.b16 %v618
    %v2461 = vunpack.c.h.b16 %v618
    %v2462 = vunpack.c.l.b16 %v619
    %v2463 = vunpack.c.h.b16 %v619
    %v2464 = vunpack.c.l.b16 %v620
    %v2465 = vunpack.c.h.b16 %v620
    %v2466 = vunpack.c.l.b16 %v621
    %v2467 = vunpack.c.h.b16 %v621
    %v2468 = vunpack.c.l.b16 %v622
    %v2469 = vunpack.c.h.b16 %v622
    %v2470 = vunpack.c.l.b16 %v623
    %v2471 = vunpack.c.h.b16 %v623
    %v2472 = vunpack.c.l.b16 %v624
    %v2473 = vunpack.c.h.b16 %v624
    %v2474 = vunpack.c.l.b16 %v625
    %v2475 = vunpack.c.h.b16 %v625
    %v2476 = vunpack.c.l.b16 %v626
    %v2477 = vunpack.c.h.b16 %v626
    %v2478 = vunpack.c.l.b16 %v627
    %v2479 = vunpack.c.h.b16 %v627
    %v2480 = vunpack.c.l.b16 %v628
    %v2481 = vunpack.c.h.b16 %v628
    %v2482 = vunpack.c.l.b16 %v629
    %v2483 = vunpack.c.h.b16 %v629
    %v2484 = vunpack.c.l.b16 %v630
    %v2485 = vunpack.c.h.b16 %v630
    %v2486 = vunpack.c.l.b16 %v631
    %v2487 = vunpack.c.h.b16 %v631
    %v2488 = vunpack.c.l.b16 %v632
    %v2489 = vunpack.c.h.b16 %v632
    %v2490 = vunpack.c.l.b16 %v633
    %v2491 = vunpack.c.h.b16 %v633
    %v2492 = vunpack.c.l.b16 %v634
    %v2493 = vunpack.c.h.b16 %v634
    %v2494 = vunpack.c.l.b16 %v635
    %v2495 = vunpack.c.h.b16 %v635
    %v2496 = vunpack.c.l.b16 %v636
    %v2497 = vunpack.c.h.b16 %v636
    %v2498 = vunpack.c.l.b16 %v637
    %v2499 = vunpack.c.h.b16 %v637
    %v2500 = vunpack.c.l.b16 %v638
    %v2501 = vunpack.c.h.b16 %v638
    %v2502 = vunpack.c.l.b16 %v639
    %v2503 = vunpack.c.h.b16 %v639
    %v2504 = vunpack.c.l.b16 %v640
    %v2505 = vunpack.c.h.b16 %v640
    %v2506 = vunpack.c.l.b16 %v641
    %v2507 = vunpack.c.h.b16 %v641
    %v2508 = vunpack.c.l.b16 %v642
    %v2509 = vunpack.c.h.b16 %v642
    %v2510 = vunpack.c.l.b16 %v643
    %v2511 = vunpack.c.h.b16 %v643
    %v2512 = vunpack.c.l.b16 %v644
    %v2513 = vunpack.c.h.b16 %v644
    %v2514 = vunpack.c.l.b16 %v645
    %v2515 = vunpack.c.h.b16 %v645
    %v2516 = vunpack.c.l.b16 %v646
    %v2517 = vunpack.c.h.b16 %v646
    %v2518 = vunpack.c.l.b16 %v647
    %v2519 = vunpack.c.h.b16 %v647
    %v2520 = vunpack.c.l.b16 %v648
    %v2521 = vunpack.c.h.b16 %v648
    %v2522 = vunpack.c.l.b16 %v649
    %v2523 = vunpack.c.h.b16 %v649
    %v2524 = vunpack.c.l.b16 %v650
    %v2525 = vunpack.c.h.b16 %v650
    %v2526 = vunpack.c.l.b16 %v651
    %v2527 = vunpack.c.h.b16 %v651
    %v2528 = vunpack.c.l.b16 %v652
    %v2529 = vunpack.c.h.b16 %v652
    %v2530 = vunpack.c.l.b16 %v653
    %v2531 = vunpack.c.h.b16 %v653
    %v2532 = vunpack.c.l.b16 %v654
    %v2533 = vunpack.c.h.b16 %v654
    %v2534 = vunpack.c.l.b16 %v655
    %v2535 = vunpack.c.h.b16 %v655
    %v2536 = vunpack.c.l.b16 %v656
    %v2537 = vunpack.c.h.b16 %v656
    %v2538 = vunpack.c.l.b16 %v657
    %v2539 = vunpack.c.h.b16 %v657
    %v2540 = vunpack.c.l.b16 %v658
    %v2541 = vunpack.c.h.b16 %v658
    %v2542 = vunpack.c.l.b16 %v659
    %v2543 = vunpack.c.h.b16 %v659
    %v2544 = vunpack.c.l.b16 %v660
    %v2545 = vunpack.c.h.b16 %v660
    %v2546 = vunpack.c.l.b16 %v661
    %v2547 = vunpack.c.h.b16 %v661
    %v2548 = vunpack.c.l.b16 %v662
    %v2549 = vunpack.c.h.b16 %v662
    %v2550 = vunpack.c.l.b16 %v663
    %v2551 = vunpack.c.h.b16 %v663
    %v2552 = vunpack.c.l.b16 %v664
    %v2553 = vunpack.c.h.b16 %v664
    %v2554 = vunpack.c.l.b16 %v665
    %v2555 = vunpack.c.h.b16 %v665
    %v2556 = vunpack.c.l.b16 %v666
    %v2557 = vunpack.c.h.b16 %v666
    %v2558 = vunpack.c.l.b16 %v667
    %v2559 = vunpack.c.h.b16 %v667
    %v2560 = vunpack.c.l.b16 %v668
    %v2561 = vunpack.c.h.b16 %v668
    %v2562 = vunpack.c.l.b16 %v669
    %v2563 = vunpack.c.h.b16 %v669
    %v2564 = vunpack.c.l.b16 %v670
    %v2565 = vunpack.c.h.b16 %v670
    %v2566 = vunpack.c.l.b16 %v671
    %v2567 = vunpack.c.h.b16 %v671
    %v2568 = vunpack.c.l.b16 %v672
    %v2569 = vunpack.c.h.b16 %v672
    %v2570 = vunpack.c.l.b16 %v673
    %v2571 = vunpack.c.h.b16 %v673
    %v2572 = vunpack.c.l.b16 %v674
    %v2573 = vunpack.c.h.b16 %v674
    %v2574 = vunpack.c.l.b16 %v675
    %v2575 = vunpack.c.h.b16 %v675
    %v2576 = vunpack.c.l.b16 %v676
    %v2577 = vunpack.c.h.b16 %v676
    %v2578 = vunpack.c.l.b16 %v677
    %v2579 = vunpack.c.h.b16 %v677
    %v2580 = vunpack.c.l.b16 %v678
    %v2581 = vunpack.c.h.b16 %v678
    %v2582 = vunpack.c.l.b16 %v679
    %v2583 = vunpack.c.h.b16 %v679
    %v2584 = vunpack.c.l.b16 %v680
    %v2585 = vunpack.c.h.b16 %v680
    %v2586 = vunpack.c.l.b16 %v681
    %v2587 = vunpack.c.h.b16 %v681
    %v2588 = vunpack.c.l.b16 %v682
    %v2589 = vunpack.c.h.b16 %v682
    %v2590 = vunpack.c.l.b16 %v683
    %v2591 = vunpack.c.h.b16 %v683
    %v2592 = vunpack.c.l.b16 %v684
    %v2593 = vunpack.c.h.b16 %v684
    %v2594 = vunpack.c.l.b16 %v685
    %v2595 = vunpack.c.h.b16 %v685
    %v2596 = vunpack.c.l.b16 %v686
    %v2597 = vunpack.c.h.b16 %v686
    %v2598 = vunpack.c.l.b16 %v687
    %v2599 = vunpack.c.h.b16 %v687
    %v2600 = vunpack.c.l.b16 %v688
    %v2601 = vunpack.c.h.b16 %v688
    %v2602 = vunpack.c.l.b16 %v689
    %v2603 = vunpack.c.h.b16 %v689
    %v2604 = vunpack.c.l.b16 %v690
    %v2605 = vunpack.c.h.b16 %v690
    %v2606 = vunpack.c.l.b16 %v691
    %v2607 = vunpack.c.h.b16 %v691
    %v2608 = vunpack.c.l.b16 %v692
    %v2609 = vunpack.c.h.b16 %v692
    %v2610 = vunpack.c.l.b16 %v693
    %v2611 = vunpack.c.h.b16 %v693
    %v2612 = vunpack.c.l.b16 %v694
    %v2613 = vunpack.c.h.b16 %v694
    %v2614 = vunpack.c.l.b16 %v695
    %v2615 = vunpack.c.h.b16 %v695
    %v2616 = vunpack.c.l.b16 %v696
    %v2617 = vunpack.c.h.b16 %v696
    %v2618 = vunpack.c.l.b16 %v697
    %v2619 = vunpack.c.h.b16 %v697
    %v2620 = vunpack.c.l.b16 %v698
    %v2621 = vunpack.c.h.b16 %v698
    %v2622 = vunpack.c.l.b16 %v699
    %v2623 = vunpack.c.h.b16 %v699
    %v2624 = vunpack.c.l.b16 %v700
    %v2625 = vunpack.c.h.b16 %v700
    %v2626 = vunpack.c.l.b16 %v701
    %v2627 = vunpack.c.h.b16 %v701
    %v2628 = vunpack.c.l.b16 %v702
    %v2629 = vunpack.c.h.b16 %v702
    %v2630 = vunpack.c.l.b16 %v703
    %v2631 = vunpack.c.h.b16 %v703
    %v2632 = vunpack.c.l.b16 %v704
    %v2633 = vunpack.c.h.b16 %v704
    %v2634 = vunpack.c.l.b16 %v705
    %v2635 = vunpack.c.h.b16 %v705
    %v2636 = vunpack.c.l.b16 %v706
    %v2637 = vunpack.c.h.b16 %v706
    %v2638 = vunpack.c.l.b16 %v707
    %v2639 = vunpack.c.h.b16 %v707
    %v2640 = vunpack.c.l.b16 %v708
    %v2641 = vunpack.c.h.b16 %v708
    %v2642 = vunpack.c.l.b16 %v709
    %v2643 = vunpack.c.h.b16 %v709
    %v2644 = vunpack.c.l.b16 %v710
    %v2645 = vunpack.c.h.b16 %v710
    %v2646 = vunpack.c.l.b16 %v711
    %v2647 = vunpack.c.h.b16 %v711
    %v2648 = vunpack.c.l.b16 %v712
    %v2649 = vunpack.c.h.b16 %v712
    %v2650 = vunpack.c.l.b16 %v713
    %v2651 = vunpack.c.h.b16 %v713
    %v2652 = vunpack.c.l.b16 %v714
    %v2653 = vunpack.c.h.b16 %v714
    %v2654 = vunpack.c.l.b16 %v715
    %v2655 = vunpack.c.h.b16 %v715
    %v2656 = vunpack.c.l.b16 %v716
    %v2657 = vunpack.c.h.b16 %v716
    %v2658 = vunpack.c.l.b16 %v717
    %v2659 = vunpack.c.h.b16 %v717
    %v2660 = vunpack.c.l.b16 %v718
    %v2661 = vunpack.c.h.b16 %v718
    %v2662 = vunpack.c.l.b16 %v719
    %v2663 = vunpack.c.h.b16 %v719
    %v2664 = vunpack.c.l.b16 %v720
    %v2665 = vunpack.c.h.b16 %v720
    %v2666 = vunpack.c.l.b16 %v721
    %v2667 = vunpack.c.h.b16 %v721
    %v2668 = vunpack.c.l.b16 %v722
    %v2669 = vunpack.c.h.b16 %v722
    %v2670 = vunpack.c.l.b16 %v723
    %v2671 = vunpack.c.h.b16 %v723
    %v2672 = vunpack.c.l.b16 %v724
    %v2673 = vunpack.c.h.b16 %v724
    %v2674 = vunpack.c.l.b16 %v725
    %v2675 = vunpack.c.h.b16 %v725
    %v2676 = vunpack.c.l.b16 %v726
    %v2677 = vunpack.c.h.b16 %v726
    %v2678 = vunpack.c.l.b16 %v727
    %v2679 = vunpack.c.h.b16 %v727
    %v2680 = vunpack.c.l.b16 %v728
    %v2681 = vunpack.c.h.b16 %v728
    %v2682 = vunpack.c.l.b16 %v729
    %v2683 = vunpack.c.h.b16 %v729
    %v2684 = vunpack.c.l.b16 %v730
    %v2685 = vunpack.c.h.b16 %v730
    %v2686 = vunpack.c.l.b16 %v731
    %v2687 = vunpack.c.h.b16 %v731
    %v2688 = vunpack.c.l.b16 %v732
    %v2689 = vunpack.c.h.b16 %v732
    %v2690 = vunpack.c.l.b16 %v733
    %v2691 = vunpack.c.h.b16 %v733
    %v2692 = vunpack.c.l.b16 %v734
    %v2693 = vunpack.c.h.b16 %v734
    %v2694 = vunpack.c.l.b16 %v735
    %v2695 = vunpack.c.h.b16 %v735
    %v2696 = vunpack.c.l.b16 %v736
    %v2697 = vunpack.c.h.b16 %v736
    %v2698 = vunpack.c.l.b16 %v737
    %v2699 = vunpack.c.h.b16 %v737
    %v2700 = vunpack.c.l.b16 %v738
    %v2701 = vunpack.c.h.b16 %v738
    %v2702 = vunpack.c.l.b16 %v739
    %v2703 = vunpack.c.h.b16 %v739
    %v2704 = vunpack.c.l.b16 %v740
    %v2705 = vunpack.c.h.b16 %v740
    %v2706 = vunpack.c.l.b16 %v741
    %v2707 = vunpack.c.h.b16 %v741
    %v2708 = vunpack.c.l.b16 %v742
    %v2709 = vunpack.c.h.b16 %v742
    %v2710 = vunpack.c.l.b16 %v743
    %v2711 = vunpack.c.h.b16 %v743
    %v2712 = vunpack.c.l.b16 %v744
    %v2713 = vunpack.c.h.b16 %v744
    %v2714 = vunpack.c.l.b16 %v745
    %v2715 = vunpack.c.h.b16 %v745
    %v2716 = vunpack.c.l.b16 %v746
    %v2717 = vunpack.c.h.b16 %v746
    %v2718 = vunpack.c.l.b16 %v747
    %v2719 = vunpack.c.h.b16 %v747
    %v2720 = vunpack.c.l.b16 %v748
    %v2721 = vunpack.c.h.b16 %v748
    %v2722 = vunpack.c.l.b16 %v749
    %v2723 = vunpack.c.h.b16 %v749
    %v2724 = vunpack.c.l.b16 %v750
    %v2725 = vunpack.c.h.b16 %v750
    %v2726 = vunpack.c.l.b16 %v751
    %v2727 = vunpack.c.h.b16 %v751
    %v2728 = vunpack.c.l.b16 %v752
    %v2729 = vunpack.c.h.b16 %v752
    %v2730 = vunpack.c.l.b16 %v753
    %v2731 = vunpack.c.h.b16 %v753
    %v2732 = vunpack.c.l.b16 %v754
    %v2733 = vunpack.c.h.b16 %v754
    %v2734 = vunpack.c.l.b16 %v755
    %v2735 = vunpack.c.h.b16 %v755
    %v2736 = vunpack.c.l.b16 %v756
    %v2737 = vunpack.c.h.b16 %v756
    %v2738 = vunpack.c.l.b16 %v757
    %v2739 = vunpack.c.h.b16 %v757
    %v2740 = vunpack.c.l.b16 %v758
    %v2741 = vunpack.c.h.b16 %v758
    %v2742 = vunpack.c.l.b16 %v759
    %v2743 = vunpack.c.h.b16 %v759
    %v2744 = vunpack.c.l.b16 %v760
    %v2745 = vunpack.c.h.b16 %v760
    %v2746 = vunpack.c.l.b16 %v761
    %v2747 = vunpack.c.h.b16 %v761
    %v2748 = vunpack.c.l.b16 %v762
    %v2749 = vunpack.c.h.b16 %v762
    %v2750 = vunpack.c.l.b16 %v763
    %v2751 = vunpack.c.h.b16 %v763
    %v2752 = vunpack.c.l.b16 %v764
    %v2753 = vunpack.c.h.b16 %v764
    %v2754 = vunpack.c.l.b16 %v765
    %v2755 = vunpack.c.h.b16 %v765
    %v2756 = vunpack.c.l.b16 %v766
    %v2757 = vunpack.c.h.b16 %v766
    %v2758 = vunpack.c.l.b16 %v767
    %v2759 = vunpack.c.h.b16 %v767
    %v2760 = vunpack.c.l.b16 %v768
    %v2761 = vunpack.c.h.b16 %v768
    %v2762 = vunpack.c.l.b16 %v769
    %v2763 = vunpack.c.h.b16 %v769
    %v2764 = vunpack.c.l.b16 %v770
    %v2765 = vunpack.c.h.b16 %v770
    %v2766 = vunpack.c.l.b16 %v771
    %v2767 = vunpack.c.h.b16 %v771
    %v2768 = vunpack.c.l.b16 %v772
    %v2769 = vunpack.c.h.b16 %v772
    %v2770 = vunpack.c.l.b16 %v773
    %v2771 = vunpack.c.h.b16 %v773
    %v2772 = vunpack.c.l.b16 %v774
    %v2773 = vunpack.c.h.b16 %v774
    %v2774 = vunpack.c.l.b16 %v775
    %v2775 = vunpack.c.h.b16 %v775
    %v2776 = vunpack.c.l.b16 %v776
    %v2777 = vunpack.c.h.b16 %v776
    %v2778 = vunpack.c.l.b16 %v777
    %v2779 = vunpack.c.h.b16 %v777
    %v2780 = vunpack.c.l.b16 %v778
    %v2781 = vunpack.c.h.b16 %v778
    %v2782 = vunpack.c.l.b16 %v779
    %v2783 = vunpack.c.h.b16 %v779
    %v2784 = vunpack.c.l.b16 %v780
    %v2785 = vunpack.c.h.b16 %v780
    %v2786 = vunpack.c.l.b16 %v781
    %v2787 = vunpack.c.h.b16 %v781
    %v2788 = vunpack.c.l.b16 %v782
    %v2789 = vunpack.c.h.b16 %v782
    %v2790 = vunpack.c.l.b16 %v783
    %v2791 = vunpack.c.h.b16 %v783
    %v2792 = vunpack.c.l.b16 %v784
    %v2793 = vunpack.c.h.b16 %v784
    %v2794 = vunpack.c.l.b16 %v785
    %v2795 = vunpack.c.h.b16 %v785
    %v2796 = vunpack.c.l.b16 %v786
    %v2797 = vunpack.c.h.b16 %v786
    %v2798 = vunpack.c.l.b16 %v787
    %v2799 = vunpack.c.h.b16 %v787
    %v2800 = vunpack.c.l.b16 %v788
    %v2801 = vunpack.c.h.b16 %v788
    %v2802 = vunpack.c.l.b16 %v789
    %v2803 = vunpack.c.h.b16 %v789
    %v2804 = vunpack.c.l.b16 %v790
    %v2805 = vunpack.c.h.b16 %v790
    %v2806 = vunpack.c.l.b16 %v791
    %v2807 = vunpack.c.h.b16 %v791
    %v2808 = vunpack.c.l.b16 %v792
    %v2809 = vunpack.c.h.b16 %v792
    %v2810 = vunpack.c.l.b16 %v793
    %v2811 = vunpack.c.h.b16 %v793
    %v2812 = vunpack.c.l.b16 %v794
    %v2813 = vunpack.c.h.b16 %v794
    %v2814 = vunpack.c.l.b16 %v795
    %v2815 = vunpack.c.h.b16 %v795
    %v2816 = vunpack.c.l.b16 %v796
    %v2817 = vunpack.c.h.b16 %v796
    %v2818 = vunpack.c.l.b16 %v797
    %v2819 = vunpack.c.h.b16 %v797
    %v2820 = vunpack.c.l.b16 %v798
    %v2821 = vunpack.c.h.b16 %v798
    %v2822 = vunpack.c.l.b16 %v799
    %v2823 = vunpack.c.h.b16 %v799
    %v2824 = vunpack.c.l.b16 %v800
    %v2825 = vunpack.c.h.b16 %v800
    %v2826 = vunpack.c.l.b16 %v801
    %v2827 = vunpack.c.h.b16 %v801
    %v2828 = vunpack.c.l.b16 %v802
    %v2829 = vunpack.c.h.b16 %v802
    %v2830 = vunpack.c.l.b16 %v803
    %v2831 = vunpack.c.h.b16 %v803
    %v2832 = vunpack.c.l.b16 %v804
    %v2833 = vunpack.c.h.b16 %v804
    %v2834 = vunpack.c.l.b16 %v805
    %v2835 = vunpack.c.h.b16 %v805
    %v2836 = vunpack.c.l.b16 %v806
    %v2837 = vunpack.c.h.b16 %v806
    %v2838 = vunpack.c.l.b16 %v807
    %v2839 = vunpack.c.h.b16 %v807
    %v2840 = vunpack.c.l.b16 %v808
    %v2841 = vunpack.c.h.b16 %v808
    %v2842 = vunpack.c.l.b16 %v809
    %v2843 = vunpack.c.h.b16 %v809
    %v2844 = vunpack.c.l.b16 %v810
    %v2845 = vunpack.c.h.b16 %v810
    %v2846 = vunpack.c.l.b16 %v811
    %v2847 = vunpack.c.h.b16 %v811
    %v2848 = vunpack.c.l.b16 %v812
    %v2849 = vunpack.c.h.b16 %v812
    %v2850 = vunpack.c.l.b16 %v813
    %v2851 = vunpack.c.h.b16 %v813
    %v2852 = vunpack.c.l.b16 %v814
    %v2853 = vunpack.c.h.b16 %v814
    %v2854 = vunpack.c.l.b16 %v815
    %v2855 = vunpack.c.h.b16 %v815
    %v2856 = vunpack.c.l.b16 %v816
    %v2857 = vunpack.c.h.b16 %v816
    %v2858 = vunpack.c.l.b16 %v817
    %v2859 = vunpack.c.h.b16 %v817
    %v2860 = vunpack.c.l.b16 %v818
    %v2861 = vunpack.c.h.b16 %v818
    %v2862 = vunpack.c.l.b16 %v819
    %v2863 = vunpack.c.h.b16 %v819
    %v2864 = vunpack.c.l.b16 %v820
    %v2865 = vunpack.c.h.b16 %v820
    %v2866 = vunpack.c.l.b16 %v821
    %v2867 = vunpack.c.h.b16 %v821
    %v2868 = vunpack.c.l.b16 %v822
    %v2869 = vunpack.c.h.b16 %v822
    %v2870 = vunpack.c.l.b16 %v823
    %v2871 = vunpack.c.h.b16 %v823
    %v2872 = vunpack.c.l.b16 %v824
    %v2873 = vunpack.c.h.b16 %v824
    %v2874 = vunpack.c.l.b16 %v825
    %v2875 = vunpack.c.h.b16 %v825
    %v2876 = vunpack.c.l.b16 %v826
    %v2877 = vunpack.c.h.b16 %v826
    %v2878 = vunpack.c.l.b16 %v827
    %v2879 = vunpack.c.h.b16 %v827
    %v2880 = vunpack.c.l.b16 %v828
    %v2881 = vunpack.c.h.b16 %v828
    %v2882 = vunpack.c.l.b16 %v829
    %v2883 = vunpack.c.h.b16 %v829
    %v2884 = vunpack.c.l.b16 %v830
    %v2885 = vunpack.c.h.b16 %v830
    %v2886 = vunpack.c.l.b16 %v831
    %v2887 = vunpack.c.h.b16 %v831
    %v2888 = vunpack.c.l.b16 %v832
    %v2889 = vunpack.c.h.b16 %v832
    %v2890 = vunpack.c.l.b16 %v833
    %v2891 = vunpack.c.h.b16 %v833
    %v2892 = vunpack.c.l.b16 %v834
    %v2893 = vunpack.c.h.b16 %v834
    %v2894 = vunpack.c.l.b16 %v835
    %v2895 = vunpack.c.h.b16 %v835
    %v2896 = vunpack.c.l.b16 %v836
    %v2897 = vunpack.c.h.b16 %v836
    %v2898 = vunpack.c.l.b16 %v837
    %v2899 = vunpack.c.h.b16 %v837
    %v2900 = vunpack.c.l.b16 %v838
    %v2901 = vunpack.c.h.b16 %v838
    %v2902 = vunpack.c.l.b16 %v839
    %v2903 = vunpack.c.h.b16 %v839
    %v2904 = vunpack.c.l.b16 %v840
    %v2905 = vunpack.c.h.b16 %v840
    %v2906 = vunpack.c.l.b16 %v841
    %v2907 = vunpack.c.h.b16 %v841
    %v2908 = vunpack.c.l.b16 %v842
    %v2909 = vunpack.c.h.b16 %v842
    %v2910 = vunpack.c.l.b16 %v843
    %v2911 = vunpack.c.h.b16 %v843
    %v2912 = vunpack.c.l.b16 %v844
    %v2913 = vunpack.c.h.b16 %v844
    %v2914 = vunpack.c.l.b16 %v845
    %v2915 = vunpack.c.h.b16 %v845
    %v2916 = vunpack.c.l.b16 %v846
    %v2917 = vunpack.c.h.b16 %v846
    %v2918 = vunpack.c.l.b16 %v847
    %v2919 = vunpack.c.h.b16 %v847
    %v2920 = vunpack.c.l.b16 %v848
    %v2921 = vunpack.c.h.b16 %v848
    %v2922 = vunpack.c.l.b16 %v849
    %v2923 = vunpack.c.h.b16 %v849
    %v2924 = vunpack.c.l.b16 %v850
    %v2925 = vunpack.c.h.b16 %v850
    %v2926 = vunpack.c.l.b16 %v851
    %v2927 = vunpack.c.h.b16 %v851
    %v2928 = vunpack.c.l.b16 %v852
    %v2929 = vunpack.c.h.b16 %v852
    %v2930 = vunpack.c.l.b16 %v853
    %v2931 = vunpack.c.h.b16 %v853
    %v2932 = vunpack.c.l.b16 %v854
    %v2933 = vunpack.c.h.b16 %v854
    %v2934 = vunpack.c.l.b16 %v855
    %v2935 = vunpack.c.h.b16 %v855
    %v2936 = vunpack.c.l.b16 %v856
    %v2937 = vunpack.c.h.b16 %v856
    %v2938 = vunpack.c.l.b16 %v857
    %v2939 = vunpack.c.h.b16 %v857
    %v2940 = vunpack.c.l.b16 %v858
    %v2941 = vunpack.c.h.b16 %v858
    %v2942 = vunpack.c.l.b16 %v859
    %v2943 = vunpack.c.h.b16 %v859
    %v2944 = vunpack.c.l.b16 %v860
    %v2945 = vunpack.c.h.b16 %v860
    %v2946 = vunpack.c.l.b16 %v861
    %v2947 = vunpack.c.h.b16 %v861
    %v2948 = vunpack.c.l.b16 %v862
    %v2949 = vunpack.c.h.b16 %v862
    %v2950 = vunpack.c.l.b16 %v863
    %v2951 = vunpack.c.h.b16 %v863
    %v2952 = vunpack.c.l.b16 %v864
    %v2953 = vunpack.c.h.b16 %v864
    %v2954 = vunpack.c.l.b16 %v865
    %v2955 = vunpack.c.h.b16 %v865
    %v2956 = vunpack.c.l.b16 %v866
    %v2957 = vunpack.c.h.b16 %v866
    %v2958 = vunpack.c.l.b16 %v867
    %v2959 = vunpack.c.h.b16 %v867
    %v2960 = vunpack.c.l.b16 %v868
    %v2961 = vunpack.c.h.b16 %v868
    %v2962 = vunpack.c.l.b16 %v869
    %v2963 = vunpack.c.h.b16 %v869
    %v2964 = vunpack.c.l.b16 %v870
    %v2965 = vunpack.c.h.b16 %v870
    %v2966 = vunpack.c.l.b16 %v871
    %v2967 = vunpack.c.h.b16 %v871
    %v2968 = vunpack.c.l.b16 %v872
    %v2969 = vunpack.c.h.b16 %v872
    %v2970 = vunpack.c.l.b16 %v873
    %v2971 = vunpack.c.h.b16 %v873
    %v2972 = vunpack.c.l.b16 %v874
    %v2973 = vunpack.c.h.b16 %v874
    %v2974 = vunpack.c.l.b16 %v875
    %v2975 = vunpack.c.h.b16 %v875
    %v2976 = vunpack.c.l.b16 %v876
    %v2977 = vunpack.c.h.b16 %v876
    %v2978 = vunpack.c.l.b16 %v877
    %v2979 = vunpack.c.h.b16 %v877
    %v2980 = vunpack.c.l.b16 %v878
    %v2981 = vunpack.c.h.b16 %v878
    %v2982 = vunpack.c.l.b16 %v879
    %v2983 = vunpack.c.h.b16 %v879
    %v2984 = vunpack.c.l.b16 %v880
    %v2985 = vunpack.c.h.b16 %v880
    %v2986 = vunpack.c.l.b16 %v881
    %v2987 = vunpack.c.h.b16 %v881
    %v2988 = vunpack.c.l.b16 %v882
    %v2989 = vunpack.c.h.b16 %v882
    %v2990 = vunpack.c.l.b16 %v883
    %v2991 = vunpack.c.h.b16 %v883
    %v2992 = vunpack.c.l.b16 %v884
    %v2993 = vunpack.c.h.b16 %v884
    %v2994 = vunpack.c.l.b16 %v885
    %v2995 = vunpack.c.h.b16 %v885
    %v2996 = vunpack.c.l.b16 %v886
    %v2997 = vunpack.c.h.b16 %v886
    %v2998 = vunpack.c.l.b16 %v887
    %v2999 = vunpack.c.h.b16 %v887
    %v3000 = vunpack.c.l.b16 %v888
    %v3001 = vunpack.c.h.b16 %v888
    %v3002 = vunpack.c.l.b16 %v889
    %v3003 = vunpack.c.h.b16 %v889
    %v3004 = vunpack.c.l.b16 %v890
    %v3005 = vunpack.c.h.b16 %v890
    %v3006 = vunpack.c.l.b16 %v891
    %v3007 = vunpack.c.h.b16 %v891
    %v3008 = vunpack.c.l.b16 %v892
    %v3009 = vunpack.c.h.b16 %v892
    %v3010 = vunpack.c.l.b16 %v893
    %v3011 = vunpack.c.h.b16 %v893
    %v3012 = vunpack.c.l.b16 %v894
    %v3013 = vunpack.c.h.b16 %v894
    %v3014 = vunpack.c.l.b16 %v895
    %v3015 = vunpack.c.h.b16 %v895
    %v3016 = vunpack.c.l.b16 %v896
    %v3017 = vunpack.c.h.b16 %v896
    %v3018 = vunpack.c.l.b16 %v897
    %v3019 = vunpack.c.h.b16 %v897
    %v3020 = vpack.c.b16 %v1624, %v1620
    %v3021 = vpack.c.b16 %v1625, %v1621
    %v3022 = vpack.c.b16 %v1626, %v1622
    %v3023 = vpack.c.b16 %v1627, %v1623
    %v3024 = vpack.c.b16 %v1632, %v1628
    %v3025 = vpack.c.b16 %v1633, %v1629
    %v3026 = vpack.c.b16 %v1634, %v1630
    %v3027 = vpack.c.b16 %v1635, %v1631
    %v3028 = vpack.c.b16 %v1640, %v1636
    %v3029 = vpack.c.b16 %v1641, %v1637
    %v3030 = vpack.c.b16 %v1642, %v1638
    %v3031 = vpack.c.b16 %v1643, %v1639
    %v3032 = vpack.c.b16 %v1648, %v1644
    %v3033 = vpack.c.b16 %v1649, %v1645
    %v3034 = vpack.c.b16 %v1650, %v1646
    %v3035 = vpack.c.b16 %v1651, %v1647
    %v3036 = vpack.c.b16 %v1656, %v1652
    %v3037 = vpack.c.b16 %v1657, %v1653
    %v3038 = vpack.c.b16 %v1658, %v1654
    %v3039 = vpack.c.b16 %v1659, %v1655
    %v3040 = vpack.c.b16 %v1664, %v1660
    %v3041 = vpack.c.b16 %v1665, %v1661
    %v3042 = vpack.c.b16 %v1666, %v1662
    %v3043 = vpack.c.b16 %v1667, %v1663
    %v3044 = vpack.c.b16 %v1672, %v1668
    %v3045 = vpack.c.b16 %v1673, %v1669
    %v3046 = vpack.c.b16 %v1674, %v1670
    %v3047 = vpack.c.b16 %v1675, %v1671
    %v3048 = vpack.c.b16 %v1680, %v1676
    %v3049 = vpack.c.b16 %v1681, %v1677
    %v3050 = vpack.c.b16 %v1682, %v1678
    %v3051 = vpack.c.b16 %v1683, %v1679
    %v3052 = vpack.c.b16 %v1688, %v1684
    %v3053 = vpack.c.b16 %v1689, %v1685
    %v3054 = vpack.c.b16 %v1690, %v1686
    %v3055 = vpack.c.b16 %v1691, %v1687
    %v3056 = vpack.c.b16 %v1696, %v1692
    %v3057 = vpack.c.b16 %v1697, %v1693
    %v3058 = vpack.c.b16 %v1698, %v1694
    %v3059 = vpack.c.b16 %v1699, %v1695
    %v3060 = vpack.c.b16 %v1704, %v1700
    %v3061 = vpack.c.b16 %v1705, %v1701
    %v3062 = vpack.c.b16 %v1706, %v1702
    %v3063 = vpack.c.b16 %v1707, %v1703
    %v3064 = vpack.c.b16 %v1712, %v1708
    %v3065 = vpack.c.b16 %v1713, %v1709
    %v3066 = vpack.c.b16 %v1714, %v1710
    %v3067 = vpack.c.b16 %v1715, %v1711
    %v3068 = vpack.c.b16 %v1720, %v1716
    %v3069 = vpack.c.b16 %v1721, %v1717
    %v3070 = vpack.c.b16 %v1722, %v1718
    %v3071 = vpack.c.b16 %v1723, %v1719
    %v3072 = vpack.c.b16 %v1728, %v1724
    %v3073 = vpack.c.b16 %v1729, %v1725
    %v3074 = vpack.c.b16 %v1730, %v1726
    %v3075 = vpack.c.b16 %v1731, %v1727
    %v3076 = vpack.c.b16 %v1736, %v1732
    %v3077 = vpack.c.b16 %v1737, %v1733
    %v3078 = vpack.c.b16 %v1738, %v1734
    %v3079 = vpack.c.b16 %v1739, %v1735
    %v3080 = vpack.c.b16 %v1744, %v1740
    %v3081 = vpack.c.b16 %v1745, %v1741
    %v3082 = vpack.c.b16 %v1746, %v1742
    %v3083 = vpack.c.b16 %v1747, %v1743
    %v3084 = vpack.c.b16 %v1752, %v1748
    %v3085 = vpack.c.b16 %v1753, %v1749
    %v3086 = vpack.c.b16 %v1754, %v1750
    %v3087 = vpack.c.b16 %v1755, %v1751
    %v3088 = vpack.c.b16 %v1760, %v1756
    %v3089 = vpack.c.b16 %v1761, %v1757
    %v3090 = vpack.c.b16 %v1762, %v1758
    %v3091 = vpack.c.b16 %v1763, %v1759
    %v3092 = vpack.c.b16 %v1768, %v1764
    %v3093 = vpack.c.b16 %v1769, %v1765
    %v3094 = vpack.c.b16 %v1770, %v1766
    %v3095 = vpack.c.b16 %v1771, %v1767
    %v3096 = vpack.c.b16 %v1776, %v1772
    %v3097 = vpack.c.b16 %v1777, %v1773
    %v3098 = vpack.c.b16 %v1778, %v1774
    %v3099 = vpack.c.b16 %v1779, %v1775
    %v3100 = vpack.c.b16 %v1784, %v1780
    %v3101 = vpack.c.b16 %v1785, %v1781
    %v3102 = vpack.c.b16 %v1786, %v1782
    %v3103 = vpack.c.b16 %v1787, %v1783
    %v3104 = vpack.c.b16 %v1792, %v1788
    %v3105 = vpack.c.b16 %v1793, %v1789
    %v3106 = vpack.c.b16 %v1794, %v1790
    %v3107 = vpack.c.b16 %v1795, %v1791
    %v3108 = vpack.c.b16 %v1800, %v1796
    %v3109 = vpack.c.b16 %v1801, %v1797
    %v3110 = vpack.c.b16 %v1802, %v1798
    %v3111 = vpack.c.b16 %v1803, %v1799
    %v3112 = vpack.c.b16 %v1808, %v1804
    %v3113 = vpack.c.b16 %v1809, %v1805
    %v3114 = vpack.c.b16 %v1810, %v1806
    %v3115 = vpack.c.b16 %v1811, %v1807
    %v3116 = vpack.c.b16 %v1816, %v1812
    %v3117 = vpack.c.b16 %v1817, %v1813
    %v3118 = vpack.c.b16 %v1818, %v1814
    %v3119 = vpack.c.b16 %v1819, %v1815
    %v3120 = vpack.c.b16 %v1824, %v1820
    %v3121 = vpack.c.b16 %v1825, %v1821
    %v3122 = vpack.c.b16 %v1826, %v1822
    %v3123 = vpack.c.b16 %v1827, %v1823
    %v3124 = vpack.c.b16 %v1832, %v1828
    %v3125 = vpack.c.b16 %v1833, %v1829
    %v3126 = vpack.c.b16 %v1834, %v1830
    %v3127 = vpack.c.b16 %v1835, %v1831
    %v3128 = vpack.c.b16 %v1840, %v1836
    %v3129 = vpack.c.b16 %v1841, %v1837
    %v3130 = vpack.c.b16 %v1842, %v1838
    %v3131 = vpack.c.b16 %v1843, %v1839
    %v3132 = vpack.c.b16 %v1848, %v1844
    %v3133 = vpack.c.b16 %v1849, %v1845
    %v3134 = vpack.c.b16 %v1850, %v1846
    %v3135 = vpack.c.b16 %v1851, %v1847
    %v3136 = vpack.c.b16 %v1856, %v1852
    %v3137 = vpack.c.b16 %v1857, %v1853
    %v3138 = vpack.c.b16 %v1858, %v1854
    %v3139 = vpack.c.b16 %v1859, %v1855
    %v3140 = vpack.c.b16 %v1864, %v1860
    %v3141 = vpack.c.b16 %v1865, %v1861
    %v3142 = vpack.c.b16 %v1866, %v1862
    %v3143 = vpack.c.b16 %v1867, %v1863
    %v3144 = vpack.c.b16 %v1872, %v1868
    %v3145 = vpack.c.b16 %v1873, %v1869
    %v3146 = vpack.c.b16 %v1874, %v1870
    %v3147 = vpack.c.b16 %v1875, %v1871
    %v3148 = vpack.c.b16 %v1880, %v1876
    %v3149 = vpack.c.b16 %v1881, %v1877
    %v3150 = vpack.c.b16 %v1882, %v1878
    %v3151 = vpack.c.b16 %v1883, %v1879
    %v3152 = vpack.c.b16 %v1888, %v1884
    %v3153 = vpack.c.b16 %v1889, %v1885
    %v3154 = vpack.c.b16 %v1890, %v1886
    %v3155 = vpack.c.b16 %v1891, %v1887
    %v3156 = vpack.c.b16 %v1896, %v1892
    %v3157 = vpack.c.b16 %v1897, %v1893
    %v3158 = vpack.c.b16 %v1898, %v1894
    %v3159 = vpack.c.b16 %v1899, %v1895
    %v3160 = vpack.c.b16 %v1904, %v1900
    %v3161 = vpack.c.b16 %v1905, %v1901
    %v3162 = vpack.c.b16 %v1906, %v1902
    %v3163 = vpack.c.b16 %v1907, %v1903
    %v3164 = vpack.c.b16 %v1912, %v1908
    %v3165 = vpack.c.b16 %v1913, %v1909
    %v3166 = vpack.c.b16 %v1914, %v1910
    %v3167 = vpack.c.b16 %v1915, %v1911
    %v3168 = vpack.c.b16 %v1920, %v1916
    %v3169 = vpack.c.b16 %v1921, %v1917
    %v3170 = vpack.c.b16 %v1922, %v1918
    %v3171 = vpack.c.b16 %v1923, %v1919
    %v3172 = vpack.c.b16 %v1928, %v1924
    %v3173 = vpack.c.b16 %v1929, %v1925
    %v3174 = vpack.c.b16 %v1930, %v1926
    %v3175 = vpack.c.b16 %v1931, %v1927
    %v3176 = vpack.c.b16 %v1936, %v1932
    %v3177 = vpack.c.b16 %v1937, %v1933
    %v3178 = vpack.c.b16 %v1938, %v1934
    %v3179 = vpack.c.b16 %v1939, %v1935
    %v3180 = vpack.c.b16 %v1944, %v1940
    %v3181 = vpack.c.b16 %v1945, %v1941
    %v3182 = vpack.c.b16 %v1946, %v1942
    %v3183 = vpack.c.b16 %v1947, %v1943
    %v3184 = vpack.c.b16 %v1952, %v1948
    %v3185 = vpack.c.b16 %v1953, %v1949
    %v3186 = vpack.c.b16 %v1954, %v1950
    %v3187 = vpack.c.b16 %v1955, %v1951
    %v3188 = vpack.c.b16 %v1960, %v1956
    %v3189 = vpack.c.b16 %v1961, %v1957
    %v3190 = vpack.c.b16 %v1962, %v1958
    %v3191 = vpack.c.b16 %v1963, %v1959
    %v3192 = vpack.c.b16 %v1968, %v1964
    %v3193 = vpack.c.b16 %v1969, %v1965
    %v3194 = vpack.c.b16 %v1970, %v1966
    %v3195 = vpack.c.b16 %v1971, %v1967
    %v3196 = vpack.c.b16 %v1976, %v1972
    %v3197 = vpack.c.b16 %v1977, %v1973
    %v3198 = vpack.c.b16 %v1978, %v1974
    %v3199 = vpack.c.b16 %v1979, %v1975
    %v3200 = vpack.c.b16 %v1984, %v1980
    %v3201 = vpack.c.b16 %v1985, %v1981
    %v3202 = vpack.c.b16 %v1986, %v1982
    %v3203 = vpack.c.b16 %v1987, %v1983
    %v3204 = vpack.c.b16 %v1992, %v1988
    %v3205 = vpack.c.b16 %v1993, %v1989
    %v3206 = vpack.c.b16 %v1994, %v1990
    %v3207 = vpack.c.b16 %v1995, %v1991
    %v3208 = vpack.c.b16 %v2000, %v1996
    %v3209 = vpack.c.b16 %v2001, %v1997
    %v3210 = vpack.c.b16 %v2002, %v1998
    %v3211 = vpack.c.b16 %v2003, %v1999
    %v3212 = vpack.c.b16 %v2008, %v2004
    %v3213 = vpack.c.b16 %v2009, %v2005
    %v3214 = vpack.c.b16 %v2010, %v2006
    %v3215 = vpack.c.b16 %v2011, %v2007
    %v3216 = vpack.c.b16 %v2016, %v2012
    %v3217 = vpack.c.b16 %v2017, %v2013
    %v3218 = vpack.c.b16 %v2018, %v2014
    %v3219 = vpack.c.b16 %v2019, %v2015
    %v3220 = vpack.c.b16 %v2024, %v2020
    %v3221 = vpack.c.b16 %v2025, %v2021
    %v3222 = vpack.c.b16 %v2026, %v2022
    %v3223 = vpack.c.b16 %v2027, %v2023
    %v3224 = vpack.c.b16 %v2032, %v2028
    %v3225 = vpack.c.b16 %v2033, %v2029
    %v3226 = vpack.c.b16 %v2034, %v2030
    %v3227 = vpack.c.b16 %v2035, %v2031
    %v3228 = vpack.c.b16 %v2040, %v2036
    %v3229 = vpack.c.b16 %v2041, %v2037
    %v3230 = vpack.c.b16 %v2042, %v2038
    %v3231 = vpack.c.b16 %v2043, %v2039
    %v3232 = vpack.c.b16 %v2048, %v2044
    %v3233 = vpack.c.b16 %v2049, %v2045
    %v3234 = vpack.c.b16 %v2050, %v2046
    %v3235 = vpack.c.b16 %v2051, %v2047
    %v3236 = vpack.c.b16 %v2056, %v2052
    %v3237 = vpack.c.b16 %v2057, %v2053
    %v3238 = vpack.c.b16 %v2058, %v2054
    %v3239 = vpack.c.b16 %v2059, %v2055
    %v3240 = vpack.c.b16 %v2064, %v2060
    %v3241 = vpack.c.b16 %v2065, %v2061
    %v3242 = vpack.c.b16 %v2066, %v2062
    %v3243 = vpack.c.b16 %v2067, %v2063
    %v3244 = vpack.c.b16 %v2072, %v2068
    %v3245 = vpack.c.b16 %v2073, %v2069
    %v3246 = vpack.c.b16 %v2074, %v2070
    %v3247 = vpack.c.b16 %v2075, %v2071
    %v3248 = vpack.c.b16 %v2080, %v2076
    %v3249 = vpack.c.b16 %v2081, %v2077
    %v3250 = vpack.c.b16 %v2082, %v2078
    %v3251 = vpack.c.b16 %v2083, %v2079
    %v3252 = vpack.c.b16 %v2088, %v2084
    %v3253 = vpack.c.b16 %v2089, %v2085
    %v3254 = vpack.c.b16 %v2090, %v2086
    %v3255 = vpack.c.b16 %v2091, %v2087
    %v3256 = vpack.c.b16 %v2096, %v2092
    %v3257 = vpack.c.b16 %v2097, %v2093
    %v3258 = vpack.c.b16 %v2098, %v2094
    %v3259 = vpack.c.b16 %v2099, %v2095
    %v3260 = vpack.c.b16 %v2104, %v2100
    %v3261 = vpack.c.b16 %v2105, %v2101
    %v3262 = vpack.c.b16 %v2106, %v2102
    %v3263 = vpack.c.b16 %v2107, %v2103
    %v3264 = vpack.c.b16 %v2112, %v2108
    %v3265 = vpack.c.b16 %v2113, %v2109
    %v3266 = vpack.c.b16 %v2114, %v2110
    %v3267 = vpack.c.b16 %v2115, %v2111
    %v3268 = vpack.c.b16 %v2120, %v2116
    %v3269 = vpack.c.b16 %v2121, %v2117
    %v3270 = vpack.c.b16 %v2122, %v2118
    %v3271 = vpack.c.b16 %v2123, %v2119
    %v3272 = vpack.c.b16 %v2128, %v2124
    %v3273 = vpack.c.b16 %v2129, %v2125
    %v3274 = vpack.c.b16 %v2130, %v2126
    %v3275 = vpack.c.b16 %v2131, %v2127
    %v3276 = vpack.c.b16 %v2136, %v2132
    %v3277 = vpack.c.b16 %v2137, %v2133
    %v3278 = vpack.c.b16 %v2138, %v2134
    %v3279 = vpack.c.b16 %v2139, %v2135
    %v3280 = vpack.c.b16 %v2144, %v2140
    %v3281 = vpack.c.b16 %v2145, %v2141
    %v3282 = vpack.c.b16 %v2146, %v2142
    %v3283 = vpack.c.b16 %v2147, %v2143
    %v3284 = vpack.c.b16 %v2152, %v2148
    %v3285 = vpack.c.b16 %v2153, %v2149
    %v3286 = vpack.c.b16 %v2154, %v2150
    %v3287 = vpack.c.b16 %v2155, %v2151
    %v3288 = vpack.c.b16 %v2160, %v2156
    %v3289 = vpack.c.b16 %v2161, %v2157
    %v3290 = vpack.c.b16 %v2162, %v2158
    %v3291 = vpack.c.b16 %v2163, %v2159
    %v3292 = vpack.c.b16 %v2168, %v2164
    %v3293 = vpack.c.b16 %v2169, %v2165
    %v3294 = vpack.c.b16 %v2170, %v2166
    %v3295 = vpack.c.b16 %v2171, %v2167
    %v3296 = vpack.c.b16 %v2176, %v2172
    %v3297 = vpack.c.b16 %v2177, %v2173
    %v3298 = vpack.c.b16 %v2178, %v2174
    %v3299 = vpack.c.b16 %v2179, %v2175
    %v3300 = vpack.c.b16 %v2184, %v2180
    %v3301 = vpack.c.b16 %v2185, %v2181
    %v3302 = vpack.c.b16 %v2186, %v2182
    %v3303 = vpack.c.b16 %v2187, %v2183
    %v3304 = vpack.c.b16 %v2192, %v2188
    %v3305 = vpack.c.b16 %v2193, %v2189
    %v3306 = vpack.c.b16 %v2194, %v2190
    %v3307 = vpack.c.b16 %v2195, %v2191
    %v3308 = vpack.c.b16 %v2200, %v2196
    %v3309 = vpack.c.b16 %v2201, %v2197
    %v3310 = vpack.c.b16 %v2202, %v2198
    %v3311 = vpack.c.b16 %v2203, %v2199
    %v3312 = vpack.c.b16 %v2208, %v2204
    %v3313 = vpack.c.b16 %v2209, %v2205
    %v3314 = vpack.c.b16 %v2210, %v2206
    %v3315 = vpack.c.b16 %v2211, %v2207
    %v3316 = vpack.c.b16 %v2216, %v2212
    %v3317 = vpack.c.b16 %v2217, %v2213
    %v3318 = vpack.c.b16 %v2218, %v2214
    %v3319 = vpack.c.b16 %v2219, %v2215
    %v3320 = vpack.c.b16 %v2224, %v2220
    %v3321 = vpack.c.b16 %v2225, %v2221
    %v3322 = vpack.c.b16 %v2226, %v2222
    %v3323 = vpack.c.b16 %v2227, %v2223
    %v3324 = vpack.c.b16 %v2232, %v2228
    %v3325 = vpack.c.b16 %v2233, %v2229
    %v3326 = vpack.c.b16 %v2234, %v2230
    %v3327 = vpack.c.b16 %v2235, %v2231
    %v3328 = vpack.c.b16 %v2240, %v2236
    %v3329 = vpack.c.b16 %v2241, %v2237
    %v3330 = vpack.c.b16 %v2242, %v2238
    %v3331 = vpack.c.b16 %v2243, %v2239
    %v3332 = vpack.c.b16 %v2248, %v2244
    %v3333 = vpack.c.b16 %v2249, %v2245
    %v3334 = vpack.c.b16 %v2250, %v2246
    %v3335 = vpack.c.b16 %v2251, %v2247
    %v3336 = vpack.c.b16 %v2256, %v2252
    %v3337 = vpack.c.b16 %v2257, %v2253
    %v3338 = vpack.c.b16 %v2258, %v2254
    %v3339 = vpack.c.b16 %v2259, %v2255
    %v3340 = vpack.c.b16 %v2264, %v2260
    %v3341 = vpack.c.b16 %v2265, %v2261
    %v3342 = vpack.c.b16 %v2266, %v2262
    %v3343 = vpack.c.b16 %v2267, %v2263
    %v3344 = vpack.c.b16 %v2272, %v2268
    %v3345 = vpack.c.b16 %v2273, %v2269
    %v3346 = vpack.c.b16 %v2274, %v2270
    %v3347 = vpack.c.b16 %v2275, %v2271
    %v3348 = vpack.c.b16 %v2280, %v2276
    %v3349 = vpack.c.b16 %v2281, %v2277
    %v3350 = vpack.c.b16 %v2282, %v2278
    %v3351 = vpack.c.b16 %v2283, %v2279
    %v3352 = vpack.c.b16 %v2288, %v2284
    %v3353 = vpack.c.b16 %v2289, %v2285
    %v3354 = vpack.c.b16 %v2290, %v2286
    %v3355 = vpack.c.b16 %v2291, %v2287
    %v3356 = vpack.c.b16 %v2296, %v2292
    %v3357 = vpack.c.b16 %v2297, %v2293
    %v3358 = vpack.c.b16 %v2298, %v2294
    %v3359 = vpack.c.b16 %v2299, %v2295
    %v3360 = vpack.c.b16 %v2304, %v2300
    %v3361 = vpack.c.b16 %v2305, %v2301
    %v3362 = vpack.c.b16 %v2306, %v2302
    %v3363 = vpack.c.b16 %v2307, %v2303
    %v3364 = vpack.c.b16 %v2312, %v2308
    %v3365 = vpack.c.b16 %v2313, %v2309
    %v3366 = vpack.c.b16 %v2314, %v2310
    %v3367 = vpack.c.b16 %v2315, %v2311
    %v3368 = vpack.c.b16 %v2320, %v2316
    %v3369 = vpack.c.b16 %v2321, %v2317
    %v3370 = vpack.c.b16 %v2322, %v2318
    %v3371 = vpack.c.b16 %v2323, %v2319
    %v3372 = vpack.c.b16 %v2328, %v2324
    %v3373 = vpack.c.b16 %v2329, %v2325
    %v3374 = vpack.c.b16 %v2330, %v2326
    %v3375 = vpack.c.b16 %v2331, %v2327
    %v3376 = vpack.c.b16 %v2336, %v2332
    %v3377 = vpack.c.b16 %v2337, %v2333
    %v3378 = vpack.c.b16 %v2338, %v2334
    %v3379 = vpack.c.b16 %v2339, %v2335
    %v3380 = vpack.c.b16 %v2344, %v2340
    %v3381 = vpack.c.b16 %v2345, %v2341
    %v3382 = vpack.c.b16 %v2346, %v2342
    %v3383 = vpack.c.b16 %v2347, %v2343
    %v3384 = vpack.c.b16 %v2352, %v2348
    %v3385 = vpack.c.b16 %v2353, %v2349
    %v3386 = vpack.c.b16 %v2354, %v2350
    %v3387 = vpack.c.b16 %v2355, %v2351
    %v3388 = vpack.c.b16 %v2360, %v2356
    %v3389 = vpack.c.b16 %v2361, %v2357
    %v3390 = vpack.c.b16 %v2362, %v2358
    %v3391 = vpack.c.b16 %v2363, %v2359
    %v3392 = vpack.c.b16 %v2368, %v2364
    %v3393 = vpack.c.b16 %v2369, %v2365
    %v3394 = vpack.c.b16 %v2370, %v2366
    %v3395 = vpack.c.b16 %v2371, %v2367
    %v3396 = vpack.c.b16 %v2376, %v2372
    %v3397 = vpack.c.b16 %v2377, %v2373
    %v3398 = vpack.c.b16 %v2378, %v2374
    %v3399 = vpack.c.b16 %v2379, %v2375
    %v3400 = vpack.c.b16 %v2384, %v2380
    %v3401 = vpack.c.b16 %v2385, %v2381
    %v3402 = vpack.c.b16 %v2386, %v2382
    %v3403 = vpack.c.b16 %v2387, %v2383
    %v3404 = vpack.c.b16 %v2392, %v2388
    %v3405 = vpack.c.b16 %v2393, %v2389
    %v3406 = vpack.c.b16 %v2394, %v2390
    %v3407 = vpack.c.b16 %v2395, %v2391
    %v3408 = vpack.c.b16 %v2400, %v2396
    %v3409 = vpack.c.b16 %v2401, %v2397
    %v3410 = vpack.c.b16 %v2402, %v2398
    %v3411 = vpack.c.b16 %v2403, %v2399
    %v3412 = vpack.c.b16 %v2408, %v2404
    %v3413 = vpack.c.b16 %v2409, %v2405
    %v3414 = vpack.c.b16 %v2410, %v2406
    %v3415 = vpack.c.b16 %v2411, %v2407
    %v3416 = vpack.c.b16 %v2416, %v2412
    %v3417 = vpack.c.b16 %v2417, %v2413
    %v3418 = vpack.c.b16 %v2418, %v2414
    %v3419 = vpack.c.b16 %v2419, %v2415
    %v3420 = vpack.c.b16 %v2424, %v2420
    %v3421 = vpack.c.b16 %v2425, %v2421
    %v3422 = vpack.c.b16 %v2426, %v2422
    %v3423 = vpack.c.b16 %v2427, %v2423
    %v3424 = vpack.c.b16 %v2432, %v2428
    %v3425 = vpack.c.b16 %v2433, %v2429
    %v3426 = vpack.c.b16 %v2434, %v2430
    %v3427 = vpack.c.b16 %v2435, %v2431
    %v3428 = vpack.c.b16 %v2440, %v2436
    %v3429 = vpack.c.b16 %v2441, %v2437
    %v3430 = vpack.c.b16 %v2442, %v2438
    %v3431 = vpack.c.b16 %v2443, %v2439
    %v3432 = vpack.c.b16 %v2448, %v2444
    %v3433 = vpack.c.b16 %v2449, %v2445
    %v3434 = vpack.c.b16 %v2450, %v2446
    %v3435 = vpack.c.b16 %v2451, %v2447
    %v3436 = vpack.c.b16 %v2456, %v2452
    %v3437 = vpack.c.b16 %v2457, %v2453
    %v3438 = vpack.c.b16 %v2458, %v2454
    %v3439 = vpack.c.b16 %v2459, %v2455
    %v3440 = vpack.c.b16 %v2464, %v2460
    %v3441 = vpack.c.b16 %v2465, %v2461
    %v3442 = vpack.c.b16 %v2466, %v2462
    %v3443 = vpack.c.b16 %v2467, %v2463
    %v3444 = vpack.c.b16 %v2472, %v2468
    %v3445 = vpack.c.b16 %v2473, %v2469
    %v3446 = vpack.c.b16 %v2474, %v2470
    %v3447 = vpack.c.b16 %v2475, %v2471
    %v3448 = vpack.c.b16 %v2480, %v2476
    %v3449 = vpack.c.b16 %v2481, %v2477
    %v3450 = vpack.c.b16 %v2482, %v2478
    %v3451 = vpack.c.b16 %v2483, %v2479
    %v3452 = vpack.c.b16 %v2488, %v2484
    %v3453 = vpack.c.b16 %v2489, %v2485
    %v3454 = vpack.c.b16 %v2490, %v2486
    %v3455 = vpack.c.b16 %v2491, %v2487
    %v3456 = vpack.c.b16 %v2496, %v2492
    %v3457 = vpack.c.b16 %v2497, %v2493
    %v3458 = vpack.c.b16 %v2498, %v2494
    %v3459 = vpack.c.b16 %v2499, %v2495
    %v3460 = vpack.c.b16 %v2504, %v2500
    %v3461 = vpack.c.b16 %v2505, %v2501
    %v3462 = vpack.c.b16 %v2506, %v2502
    %v3463 = vpack.c.b16 %v2507, %v2503
    %v3464 = vpack.c.b16 %v2512, %v2508
    %v3465 = vpack.c.b16 %v2513, %v2509
    %v3466 = vpack.c.b16 %v2514, %v2510
    %v3467 = vpack.c.b16 %v2515, %v2511
    %v3468 = vpack.c.b16 %v2520, %v2516
    %v3469 = vpack.c.b16 %v2521, %v2517
    %v3470 = vpack.c.b16 %v2522, %v2518
    %v3471 = vpack.c.b16 %v2523, %v2519
    %v3472 = vpack.c.b16 %v2528, %v2524
    %v3473 = vpack.c.b16 %v2529, %v2525
    %v3474 = vpack.c.b16 %v2530, %v2526
    %v3475 = vpack.c.b16 %v2531, %v2527
    %v3476 = vpack.c.b16 %v2536, %v2532
    %v3477 = vpack.c.b16 %v2537, %v2533
    %v3478 = vpack.c.b16 %v2538, %v2534
    %v3479 = vpack.c.b16 %v2539, %v2535
    %v3480 = vpack.c.b16 %v2544, %v2540
    %v3481 = vpack.c.b16 %v2545, %v2541
    %v3482 = vpack.c.b16 %v2546, %v2542
    %v3483 = vpack.c.b16 %v2547, %v2543
    %v3484 = vpack.c.b16 %v2552, %v2548
    %v3485 = vpack.c.b16 %v2553, %v2549
    %v3486 = vpack.c.b16 %v2554, %v2550
    %v3487 = vpack.c.b16 %v2555, %v2551
    %v3488 = vpack.c.b16 %v2560, %v2556
    %v3489 = vpack.c.b16 %v2561, %v2557
    %v3490 = vpack.c.b16 %v2562, %v2558
    %v3491 = vpack.c.b16 %v2563, %v2559
    %v3492 = vpack.c.b16 %v2568, %v2564
    %v3493 = vpack.c.b16 %v2569, %v2565
    %v3494 = vpack.c.b16 %v2570, %v2566
    %v3495 = vpack.c.b16 %v2571, %v2567
    %v3496 = vpack.c.b16 %v2576, %v2572
    %v3497 = vpack.c.b16 %v2577, %v2573
    %v3498 = vpack.c.b16 %v2578, %v2574
    %v3499 = vpack.c.b16 %v2579, %v2575
    %v3500 = vpack.c.b16 %v2584, %v2580
    %v3501 = vpack.c.b16 %v2585, %v2581
    %v3502 = vpack.c.b16 %v2586, %v2582
    %v3503 = vpack.c.b16 %v2587, %v2583
    %v3504 = vpack.c.b16 %v2592, %v2588
    %v3505 = vpack.c.b16 %v2593, %v2589
    %v3506 = vpack.c.b16 %v2594, %v2590
    %v3507 = vpack.c.b16 %v2595, %v2591
    %v3508 = vpack.c.b16 %v2600, %v2596
    %v3509 = vpack.c.b16 %v2601, %v2597
    %v3510 = vpack.c.b16 %v2602, %v2598
    %v3511 = vpack.c.b16 %v2603, %v2599
    %v3512 = vpack.c.b16 %v2608, %v2604
    %v3513 = vpack.c.b16 %v2609, %v2605
    %v3514 = vpack.c.b16 %v2610, %v2606
    %v3515 = vpack.c.b16 %v2611, %v2607
    %v3516 = vpack.c.b16 %v2616, %v2612
    %v3517 = vpack.c.b16 %v2617, %v2613
    %v3518 = vpack.c.b16 %v2618, %v2614
    %v3519 = vpack.c.b16 %v2619, %v2615
    %v3520 = vpack.c.b16 %v2624, %v2620
    %v3521 = vpack.c.b16 %v2625, %v2621
    %v3522 = vpack.c.b16 %v2626, %v2622
    %v3523 = vpack.c.b16 %v2627, %v2623
    %v3524 = vpack.c.b16 %v2632, %v2628
    %v3525 = vpack.c.b16 %v2633, %v2629
    %v3526 = vpack.c.b16 %v2634, %v2630
    %v3527 = vpack.c.b16 %v2635, %v2631
    %v3528 = vpack.c.b16 %v2640, %v2636
    %v3529 = vpack.c.b16 %v2641, %v2637
    %v3530 = vpack.c.b16 %v2642, %v2638
    %v3531 = vpack.c.b16 %v2643, %v2639
    %v3532 = vpack.c.b16 %v2648, %v2644
    %v3533 = vpack.c.b16 %v2649, %v2645
    %v3534 = vpack.c.b16 %v2650, %v2646
    %v3535 = vpack.c.b16 %v2651, %v2647
    %v3536 = vpack.c.b16 %v2656, %v2652
    %v3537 = vpack.c.b16 %v2657, %v2653
    %v3538 = vpack.c.b16 %v2658, %v2654
    %v3539 = vpack.c.b16 %v2659, %v2655
    %v3540 = vpack.c.b16 %v2664, %v2660
    %v3541 = vpack.c.b16 %v2665, %v2661
    %v3542 = vpack.c.b16 %v2666, %v2662
    %v3543 = vpack.c.b16 %v2667, %v2663
    %v3544 = vpack.c.b16 %v2672, %v2668
    %v3545 = vpack.c.b16 %v2673, %v2669
    %v3546 = vpack.c.b16 %v2674, %v2670
    %v3547 = vpack.c.b16 %v2675, %v2671
    %v3548 = vpack.c.b16 %v2680, %v2676
    %v3549 = vpack.c.b16 %v2681, %v2677
    %v3550 = vpack.c.b16 %v2682, %v2678
    %v3551 = vpack.c.b16 %v2683, %v2679
    %v3552 = vpack.c.b16 %v2688, %v2684
    %v3553 = vpack.c.b16 %v2689, %v2685
    %v3554 = vpack.c.b16 %v2690, %v2686
    %v3555 = vpack.c.b16 %v2691, %v2687
    %v3556 = vpack.c.b16 %v2696, %v2692
    %v3557 = vpack.c.b16 %v2697, %v2693
    %v3558 = vpack.c.b16 %v2698, %v2694
    %v3559 = vpack.c.b16 %v2699, %v2695
    %v3560 = vpack.c.b16 %v2704, %v2700
    %v3561 = vpack.c.b16 %v2705, %v2701
    %v3562 = vpack.c.b16 %v2706, %v2702
    %v3563 = vpack.c.b16 %v2707, %v2703
    %v3564 = vpack.c.b16 %v2712, %v2708
    %v3565 = vpack.c.b16 %v2713, %v2709
    %v3566 = vpack.c.b16 %v2714, %v2710
    %v3567 = vpack.c.b16 %v2715, %v2711
    %v3568 = vpack.c.b16 %v2720, %v2716
    %v3569 = vpack.c.b16 %v2721, %v2717
    %v3570 = vpack.c.b16 %v2722, %v2718
    %v3571 = vpack.c.b16 %v2723, %v2719
    %v3572 = vpack.c.b16 %v2728, %v2724
    %v3573 = vpack.c.b16 %v2729, %v2725
    %v3574 = vpack.c.b16 %v2730, %v2726
    %v3575 = vpack.c.b16 %v2731, %v2727
    %v3576 = vpack.c.b16 %v2736, %v2732
    %v3577 = vpack.c.b16 %v2737, %v2733
    %v3578 = vpack.c.b16 %v2738, %v2734
    %v3579 = vpack.c.b16 %v2739, %v2735
    %v3580 = vpack.c.b16 %v2744, %v2740
    %v3581 = vpack.c.b16 %v2745, %v2741
    %v3582 = vpack.c.b16 %v2746, %v2742
    %v3583 = vpack.c.b16 %v2747, %v2743
    %v3584 = vpack.c.b16 %v2752, %v2748
    %v3585 = vpack.c.b16 %v2753, %v2749
    %v3586 = vpack.c.b16 %v2754, %v2750
    %v3587 = vpack.c.b16 %v2755, %v2751
    %v3588 = vpack.c.b16 %v2760, %v2756
    %v3589 = vpack.c.b16 %v2761, %v2757
    %v3590 = vpack.c.b16 %v2762, %v2758
    %v3591 = vpack.c.b16 %v2763, %v2759
    %v3592 = vpack.c.b16 %v2768, %v2764
    %v3593 = vpack.c.b16 %v2769, %v2765
    %v3594 = vpack.c.b16 %v2770, %v2766
    %v3595 = vpack.c.b16 %v2771, %v2767
    %v3596 = vpack.c.b16 %v2776, %v2772
    %v3597 = vpack.c.b16 %v2777, %v2773
    %v3598 = vpack.c.b16 %v2778, %v2774
    %v3599 = vpack.c.b16 %v2779, %v2775
    %v3600 = vpack.c.b16 %v2784, %v2780
    %v3601 = vpack.c.b16 %v2785, %v2781
    %v3602 = vpack.c.b16 %v2786, %v2782
    %v3603 = vpack.c.b16 %v2787, %v2783
    %v3604 = vpack.c.b16 %v2792, %v2788
    %v3605 = vpack.c.b16 %v2793, %v2789
    %v3606 = vpack.c.b16 %v2794, %v2790
    %v3607 = vpack.c.b16 %v2795, %v2791
    %v3608 = vpack.c.b16 %v2800, %v2796
    %v3609 = vpack.c.b16 %v2801, %v2797
    %v3610 = vpack.c.b16 %v2802, %v2798
    %v3611 = vpack.c.b16 %v2803, %v2799
    %v3612 = vpack.c.b16 %v2808, %v2804
    %v3613 = vpack.c.b16 %v2809, %v2805
    %v3614 = vpack.c.b16 %v2810, %v2806
    %v3615 = vpack.c.b16 %v2811, %v2807
    %v3616 = vpack.c.b16 %v2816, %v2812
    %v3617 = vpack.c.b16 %v2817, %v2813
    %v3618 = vpack.c.b16 %v2818, %v2814
    %v3619 = vpack.c.b16 %v2819, %v2815
    %v3620 = vpack.c.b16 %v2824, %v2820
    %v3621 = vpack.c.b16 %v2825, %v2821
    %v3622 = vpack.c.b16 %v2826, %v2822
    %v3623 = vpack.c.b16 %v2827, %v2823
    %v3624 = vpack.c.b16 %v2832, %v2828
    %v3625 = vpack.c.b16 %v2833, %v2829
    %v3626 = vpack.c.b16 %v2834, %v2830
    %v3627 = vpack.c.b16 %v2835, %v2831
    %v3628 = vpack.c.b16 %v2840, %v2836
    %v3629 = vpack.c.b16 %v2841, %v2837
    %v3630 = vpack.c.b16 %v2842, %v2838
    %v3631 = vpack.c.b16 %v2843, %v2839
    %v3632 = vpack.c.b16 %v2848, %v2844
    %v3633 = vpack.c.b16 %v2849, %v2845
    %v3634 = vpack.c.b16 %v2850, %v2846
    %v3635 = vpack.c.b16 %v2851, %v2847
    %v3636 = vpack.c.b16 %v2856, %v2852
    %v3637 = vpack.c.b16 %v2857, %v2853
    %v3638 = vpack.c.b16 %v2858, %v2854
    %v3639 = vpack.c.b16 %v2859, %v2855
    %v3640 = vpack.c.b16 %v2864, %v2860
    %v3641 = vpack.c.b16 %v2865, %v2861
    %v3642 = vpack.c.b16 %v2866, %v2862
    %v3643 = vpack.c.b16 %v2867, %v2863
    %v3644 = vpack.c.b16 %v2872, %v2868
    %v3645 = vpack.c.b16 %v2873, %v2869
    %v3646 = vpack.c.b16 %v2874, %v2870
    %v3647 = vpack.c.b16 %v2875, %v2871
    %v3648 = vpack.c.b16 %v2880, %v2876
    %v3649 = vpack.c.b16 %v2881, %v2877
    %v3650 = vpack.c.b16 %v2882, %v2878
    %v3651 = vpack.c.b16 %v2883, %v2879
    %v3652 = vpack.c.b16 %v2888, %v2884
    %v3653 = vpack.c.b16 %v2889, %v2885
    %v3654 = vpack.c.b16 %v2890, %v2886
    %v3655 = vpack.c.b16 %v2891, %v2887
    %v3656 = vpack.c.b16 %v2896, %v2892
    %v3657 = vpack.c.b16 %v2897, %v2893
    %v3658 = vpack.c.b16 %v2898, %v2894
    %v3659 = vpack.c.b16 %v2899, %v2895
    %v3660 = vpack.c.b16 %v2904, %v2900
    %v3661 = vpack.c.b16 %v2905, %v2901
    %v3662 = vpack.c.b16 %v2906, %v2902
    %v3663 = vpack.c.b16 %v2907, %v2903
    %v3664 = vpack.c.b16 %v2912, %v2908
    %v3665 = vpack.c.b16 %v2913, %v2909
    %v3666 = vpack.c.b16 %v2914, %v2910
    %v3667 = vpack.c.b16 %v2915, %v2911
    %v3668 = vpack.c.b16 %v2920, %v2916
    %v3669 = vpack.c.b16 %v2921, %v2917
    %v3670 = vpack.c.b16 %v2922, %v2918
    %v3671 = vpack.c.b16 %v2923, %v2919
    %v3672 = vpack.c.b16 %v2928, %v2924
    %v3673 = vpack.c.b16 %v2929, %v2925
    %v3674 = vpack.c.b16 %v2930, %v2926
    %v3675 = vpack.c.b16 %v2931, %v2927
    %v3676 = vpack.c.b16 %v2936, %v2932
    %v3677 = vpack.c.b16 %v2937, %v2933
    %v3678 = vpack.c.b16 %v2938, %v2934
    %v3679 = vpack.c.b16 %v2939, %v2935
    %v3680 = vpack.c.b16 %v2944, %v2940
    %v3681 = vpack.c.b16 %v2945, %v2941
    %v3682 = vpack.c.b16 %v2946, %v2942
    %v3683 = vpack.c.b16 %v2947, %v2943
    %v3684 = vpack.c.b16 %v2952, %v2948
    %v3685 = vpack.c.b16 %v2953, %v2949
    %v3686 = vpack.c.b16 %v2954, %v2950
    %v3687 = vpack.c.b16 %v2955, %v2951
    %v3688 = vpack.c.b16 %v2960, %v2956
    %v3689 = vpack.c.b16 %v2961, %v2957
    %v3690 = vpack.c.b16 %v2962, %v2958
    %v3691 = vpack.c.b16 %v2963, %v2959
    %v3692 = vpack.c.b16 %v2968, %v2964
    %v3693 = vpack.c.b16 %v2969, %v2965
    %v3694 = vpack.c.b16 %v2970, %v2966
    %v3695 = vpack.c.b16 %v2971, %v2967
    %v3696 = vpack.c.b16 %v2976, %v2972
    %v3697 = vpack.c.b16 %v2977, %v2973
    %v3698 = vpack.c.b16 %v2978, %v2974
    %v3699 = vpack.c.b16 %v2979, %v2975
    %v3700 = vpack.c.b16 %v2984, %v2980
    %v3701 = vpack.c.b16 %v2985, %v2981
    %v3702 = vpack.c.b16 %v2986, %v2982
    %v3703 = vpack.c.b16 %v2987, %v2983
    %v3704 = vpack.c.b16 %v2992, %v2988
    %v3705 = vpack.c.b16 %v2993, %v2989
    %v3706 = vpack.c.b16 %v2994, %v2990
    %v3707 = vpack.c.b16 %v2995, %v2991
    %v3708 = vpack.c.b16 %v3000, %v2996
    %v3709 = vpack.c.b16 %v3001, %v2997
    %v3710 = vpack.c.b16 %v3002, %v2998
    %v3711 = vpack.c.b16 %v3003, %v2999
    %v3712 = vpack.c.b16 %v3008, %v3004
    %v3713 = vpack.c.b16 %v3009, %v3005
    %v3714 = vpack.c.b16 %v3010, %v3006
    %v3715 = vpack.c.b16 %v3011, %v3007
    %v3716 = vpack.c.b16 %v3016, %v3012
    %v3717 = vpack.c.b16 %v3017, %v3013
    %v3718 = vpack.c.b16 %v3018, %v3014
    %v3719 = vpack.c.b16 %v3019, %v3015
    %vm4420 = vcmask 916480
    %v4422 = vsel %vm4420, %v197, 0
    %4424 = vmatprep.subr.bf16.mxu0 %v3021
    %4425 = vmatpush1.bf16.msra.mxu0 %v3020
    %4426 = vmatprep.subr.bf16.mxu0 %v3025
    %4427 = vmatpush1.bf16.msra.mxu0 %v3024
    %4428 = vmatprep.subr.bf16.mxu0 %v3029
    %4429 = vmatpush1.bf16.msra.mxu0 %v3028
    %4430 = vmatprep.subr.bf16.mxu0 %v3033
    %4431 = vmatpush1.bf16.msra.mxu0 %v3032
    %4432 = vmatprep.subr.bf16.mxu0 %v3037
    %4433 = vmatpush1.bf16.msra.mxu0 %v3036
    %4434 = vmatprep.subr.bf16.mxu0 %v3041
    %4435 = vmatpush1.bf16.msra.mxu0 %v3040
    %4436 = vmatprep.subr.bf16.mxu0 %v3045
    %4437 = vmatpush1.bf16.msra.mxu0 %v3044
    %4438 = vmatprep.subr.bf16.mxu0 %v3049
    %4439 = vmatpush1.bf16.msra.mxu0 %v3048
    %4440 = vmatprep.subr.bf16.mxu0 %v3053
    %4441 = vmatpush1.bf16.msra.mxu0 %v3052
    %4442 = vmatprep.subr.bf16.mxu0 %v3057
    %4443 = vmatpush1.bf16.msra.mxu0 %v3056
    %4444 = vmatprep.subr.bf16.mxu0 %v3061
    %4445 = vmatpush1.bf16.msra.mxu0 %v3060
    %4446 = vmatprep.subr.bf16.mxu0 %v3065
    %4447 = vmatpush1.bf16.msra.mxu0 %v3064
    %4448 = vmatprep.subr.bf16.mxu0 %v3069
    %4449 = vmatpush1.bf16.msra.mxu0 %v3068
    %4450 = vmatprep.subr.bf16.mxu0 %v3073
    %4451 = vmatpush1.bf16.msra.mxu0 %v3072
    %4452 = vmatprep.subr.bf16.mxu0 %v3077
    %4453 = vmatpush1.bf16.msra.mxu0 %v3076
    %4454 = vmatprep.subr.bf16.mxu0 %v3081
    %4455 = vmatpush1.bf16.msra.mxu0 %v3080
    %4456 = vmatprep.mubr.bf16.mxu0 %v177
    %4457 = vmatmul.mubr.bf16.gmra.mrb[0].mxu0 %v176
    %v4458 = vpop.f32.mrb[0].mxu0
    %v4459 = vadd.f32 %v903, %v4458
    %v4460 = vpop.f32.mrb[0].mxu0
    %v4461 = vadd.f32 %v907, %v4460
    %v4462 = vpop.f32.mrb[0].mxu0
    %v4463 = vpop.f32.mrb[0].mxu0
    %4464 = vdwg.mxu0
    %4465 = vmatprep.subr.bf16.mxu0 %v3085
    %4466 = vmatpush1.bf16.msra.mxu0 %v3084
    %4467 = vmatprep.subr.bf16.mxu0 %v3089
    %4468 = vmatpush1.bf16.msra.mxu0 %v3088
    %4469 = vmatprep.subr.bf16.mxu0 %v3093
    %4470 = vmatpush1.bf16.msra.mxu0 %v3092
    %4471 = vmatprep.subr.bf16.mxu0 %v3097
    %4472 = vmatpush1.bf16.msra.mxu0 %v3096
    %4473 = vmatprep.subr.bf16.mxu0 %v3101
    %4474 = vmatpush1.bf16.msra.mxu0 %v3100
    %4475 = vmatprep.subr.bf16.mxu0 %v3105
    %4476 = vmatpush1.bf16.msra.mxu0 %v3104
    %4477 = vmatprep.subr.bf16.mxu0 %v3109
    %4478 = vmatpush1.bf16.msra.mxu0 %v3108
    %4479 = vmatprep.subr.bf16.mxu0 %v3113
    %4480 = vmatpush1.bf16.msra.mxu0 %v3112
    %4481 = vmatprep.subr.bf16.mxu0 %v3117
    %4482 = vmatpush1.bf16.msra.mxu0 %v3116
    %4483 = vmatprep.subr.bf16.mxu0 %v3121
    %4484 = vmatpush1.bf16.msra.mxu0 %v3120
    %4485 = vmatprep.subr.bf16.mxu0 %v3125
    %4486 = vmatpush1.bf16.msra.mxu0 %v3124
    %4487 = vmatprep.subr.bf16.mxu0 %v3129
    %4488 = vmatpush1.bf16.msra.mxu0 %v3128
    %4489 = vmatprep.subr.bf16.mxu0 %v3133
    %4490 = vmatpush1.bf16.msra.mxu0 %v3132
    %4491 = vmatprep.subr.bf16.mxu0 %v3137
    %4492 = vmatpush1.bf16.msra.mxu0 %v3136
    %4493 = vmatprep.subr.bf16.mxu0 %v3141
    %4494 = vmatpush1.bf16.msra.mxu0 %v3140
    %4495 = vmatprep.subr.bf16.mxu0 %v3145
    %4496 = vmatpush1.bf16.msra.mxu0 %v3144
    %4497 = vmatprep.mubr.bf16.mxu0 %v179
    %4498 = vmatmul.mubr.bf16.gmra.mrb[0].mxu0 %v178
    %v4499 = vpop.f32.mrb[0].mxu0
    %v4500 = vadd.f32 %v4459, %v4499
    %v4501 = vpop.f32.mrb[0].mxu0
    %v4502 = vadd.f32 %v4461, %v4501
    %v4503 = vpop.f32.mrb[0].mxu0
    %v4504 = vpop.f32.mrb[0].mxu0
    %4505 = vdwg.mxu0
    %4506 = vmatprep.subr.bf16.mxu0 %v3149
    %4507 = vmatpush1.bf16.msra.mxu0 %v3148
    %4508 = vmatprep.subr.bf16.mxu0 %v3153
    %4509 = vmatpush1.bf16.msra.mxu0 %v3152
    %4510 = vmatprep.subr.bf16.mxu0 %v3157
    %4511 = vmatpush1.bf16.msra.mxu0 %v3156
    %4512 = vmatprep.subr.bf16.mxu0 %v3161
    %4513 = vmatpush1.bf16.msra.mxu0 %v3160
    %4514 = vmatprep.subr.bf16.mxu0 %v3165
    %4515 = vmatpush1.bf16.msra.mxu0 %v3164
    %4516 = vmatprep.subr.bf16.mxu0 %v3169
    %4517 = vmatpush1.bf16.msra.mxu0 %v3168
    %4518 = vmatprep.subr.bf16.mxu0 %v3173
    %4519 = vmatpush1.bf16.msra.mxu0 %v3172
    %4520 = vmatprep.subr.bf16.mxu0 %v3177
    %4521 = vmatpush1.bf16.msra.mxu0 %v3176
    %4522 = vmatprep.subr.bf16.mxu0 %v3181
    %4523 = vmatpush1.bf16.msra.mxu0 %v3180
    %4524 = vmatprep.subr.bf16.mxu0 %v3185
    %4525 = vmatpush1.bf16.msra.mxu0 %v3184
    %4526 = vmatprep.subr.bf16.mxu0 %v3189
    %4527 = vmatpush1.bf16.msra.mxu0 %v3188
    %4528 = vmatprep.subr.bf16.mxu0 %v3193
    %4529 = vmatpush1.bf16.msra.mxu0 %v3192
    %4530 = vmatprep.subr.bf16.mxu0 %v3197
    %4531 = vmatpush1.bf16.msra.mxu0 %v3196
    %4532 = vmatprep.subr.bf16.mxu0 %v3201
    %4533 = vmatpush1.bf16.msra.mxu0 %v3200
    %4534 = vmatprep.subr.bf16.mxu0 %v3205
    %4535 = vmatpush1.bf16.msra.mxu0 %v3204
    %4536 = vmatprep.subr.bf16.mxu0 %v3209
    %4537 = vmatpush1.bf16.msra.mxu0 %v3208
    %4538 = vmatprep.mubr.bf16.mxu0 %v181
    %4539 = vmatmul.mubr.bf16.gmra.mrb[0].mxu0 %v180
    %v4540 = vpop.f32.mrb[0].mxu0
    %v4541 = vadd.f32 %v4500, %v4540
    %v4542 = vpop.f32.mrb[0].mxu0
    %v4543 = vadd.f32 %v4502, %v4542
    %v4544 = vpop.f32.mrb[0].mxu0
    %v4545 = vpop.f32.mrb[0].mxu0
    %4546 = vdwg.mxu0
    %4547 = vmatprep.subr.bf16.mxu0 %v3213
    %4548 = vmatpush1.bf16.msra.mxu0 %v3212
    %4549 = vmatprep.subr.bf16.mxu0 %v3217
    %4550 = vmatpush1.bf16.msra.mxu0 %v3216
    %4551 = vmatprep.subr.bf16.mxu0 %v3221
    %4552 = vmatpush1.bf16.msra.mxu0 %v3220
    %4553 = vmatprep.subr.bf16.mxu0 %v3225
    %4554 = vmatpush1.bf16.msra.mxu0 %v3224
    %4555 = vmatprep.subr.bf16.mxu0 %v3229
    %4556 = vmatpush1.bf16.msra.mxu0 %v3228
    %4557 = vmatprep.subr.bf16.mxu0 %v3233
    %4558 = vmatpush1.bf16.msra.mxu0 %v3232
    %4559 = vmatprep.subr.bf16.mxu0 %v3237
    %4560 = vmatpush1.bf16.msra.mxu0 %v3236
    %4561 = vmatprep.subr.bf16.mxu0 %v3241
    %4562 = vmatpush1.bf16.msra.mxu0 %v3240
    %4563 = vmatprep.subr.bf16.mxu0 %v3245
    %4564 = vmatpush1.bf16.msra.mxu0 %v3244
    %4565 = vmatprep.subr.bf16.mxu0 %v3249
    %4566 = vmatpush1.bf16.msra.mxu0 %v3248
    %4567 = vmatprep.subr.bf16.mxu0 %v3253
    %4568 = vmatpush1.bf16.msra.mxu0 %v3252
    %4569 = vmatprep.subr.bf16.mxu0 %v3257
    %4570 = vmatpush1.bf16.msra.mxu0 %v3256
    %4571 = vmatprep.subr.bf16.mxu0 %v3261
    %4572 = vmatpush1.bf16.msra.mxu0 %v3260
    %4573 = vmatprep.subr.bf16.mxu0 %v3265
    %4574 = vmatpush1.bf16.msra.mxu0 %v3264
    %4575 = vmatprep.subr.bf16.mxu0 %v3269
    %4576 = vmatpush1.bf16.msra.mxu0 %v3268
    %4577 = vmatprep.subr.bf16.mxu0 %v3273
    %4578 = vmatpush1.bf16.msra.mxu0 %v3272
    %4579 = vmatprep.mubr.bf16.mxu0 %v183
    %4580 = vmatmul.mubr.bf16.gmra.mrb[0].mxu0 %v182
    %v4581 = vpop.f32.mrb[0].mxu0
    %v4582 = vadd.f32 %v4541, %v4581
    %v4583 = vpop.f32.mrb[0].mxu0
    %v4584 = vadd.f32 %v4543, %v4583
    %v4585 = vpop.f32.mrb[0].mxu0
    %v4586 = vpop.f32.mrb[0].mxu0
    %4587 = vdwg.mxu0
    %4588 = vmatprep.subr.bf16.mxu0 %v3277
    %4589 = vmatpush1.bf16.msra.mxu0 %v3276
    %4590 = vmatprep.subr.bf16.mxu0 %v3281
    %4591 = vmatpush1.bf16.msra.mxu0 %v3280
    %4592 = vmatprep.subr.bf16.mxu0 %v3285
    %4593 = vmatpush1.bf16.msra.mxu0 %v3284
    %4594 = vmatprep.subr.bf16.mxu0 %v3289
    %4595 = vmatpush1.bf16.msra.mxu0 %v3288
    %4596 = vmatprep.subr.bf16.mxu0 %v3293
    %4597 = vmatpush1.bf16.msra.mxu0 %v3292
    %4598 = vmatprep.subr.bf16.mxu0 %v3297
    %4599 = vmatpush1.bf16.msra.mxu0 %v3296
    %4600 = vmatprep.subr.bf16.mxu0 %v3301
    %4601 = vmatpush1.bf16.msra.mxu0 %v3300
    %4602 = vmatprep.subr.bf16.mxu0 %v3305
    %4603 = vmatpush1.bf16.msra.mxu0 %v3304
    %4604 = vmatprep.subr.bf16.mxu0 %v3309
    %4605 = vmatpush1.bf16.msra.mxu0 %v3308
    %4606 = vmatprep.subr.bf16.mxu0 %v3313
    %4607 = vmatpush1.bf16.msra.mxu0 %v3312
    %4608 = vmatprep.subr.bf16.mxu0 %v3317
    %4609 = vmatpush1.bf16.msra.mxu0 %v3316
    %4610 = vmatprep.subr.bf16.mxu0 %v3321
    %4611 = vmatpush1.bf16.msra.mxu0 %v3320
    %4612 = vmatprep.subr.bf16.mxu0 %v3325
    %4613 = vmatpush1.bf16.msra.mxu0 %v3324
    %4614 = vmatprep.subr.bf16.mxu0 %v3329
    %4615 = vmatpush1.bf16.msra.mxu0 %v3328
    %4616 = vmatprep.subr.bf16.mxu0 %v3333
    %4617 = vmatpush1.bf16.msra.mxu0 %v3332
    %4618 = vmatprep.subr.bf16.mxu0 %v3337
    %4619 = vmatpush1.bf16.msra.mxu0 %v3336
    %4620 = vmatprep.mubr.bf16.mxu0 %v185
    %4621 = vmatmul.mubr.bf16.gmra.mrb[0].mxu0 %v184
    %v4622 = vpop.f32.mrb[0].mxu0
    %v4623 = vadd.f32 %v4582, %v4622
    %v4624 = vpop.f32.mrb[0].mxu0
    %v4625 = vadd.f32 %v4584, %v4624
    %v4626 = vpop.f32.mrb[0].mxu0
    %v4627 = vpop.f32.mrb[0].mxu0
    %4628 = vdwg.mxu0
    %4629 = vmatprep.subr.bf16.mxu0 %v3341
    %4630 = vmatpush1.bf16.msra.mxu0 %v3340
    %4631 = vmatprep.subr.bf16.mxu0 %v3345
    %4632 = vmatpush1.bf16.msra.mxu0 %v3344
    %4633 = vmatprep.subr.bf16.mxu0 %v3349
    %4634 = vmatpush1.bf16.msra.mxu0 %v3348
    %4635 = vmatprep.subr.bf16.mxu0 %v3353
    %4636 = vmatpush1.bf16.msra.mxu0 %v3352
    %4637 = vmatprep.subr.bf16.mxu0 %v3357
    %4638 = vmatpush1.bf16.msra.mxu0 %v3356
    %4639 = vmatprep.subr.bf16.mxu0 %v3361
    %4640 = vmatpush1.bf16.msra.mxu0 %v3360
    %4641 = vmatprep.subr.bf16.mxu0 %v3365
    %4642 = vmatpush1.bf16.msra.mxu0 %v3364
    %4643 = vmatprep.subr.bf16.mxu0 %v3369
    %4644 = vmatpush1.bf16.msra.mxu0 %v3368
    %4645 = vmatprep.subr.bf16.mxu0 %v3373
    %4646 = vmatpush1.bf16.msra.mxu0 %v3372
    %4647 = vmatprep.subr.bf16.mxu0 %v3377
    %4648 = vmatpush1.bf16.msra.mxu0 %v3376
    %4649 = vmatprep.subr.bf16.mxu0 %v3381
    %4650 = vmatpush1.bf16.msra.mxu0 %v3380
    %4651 = vmatprep.subr.bf16.mxu0 %v3385
    %4652 = vmatpush1.bf16.msra.mxu0 %v3384
    %4653 = vmatprep.subr.bf16.mxu0 %v3389
    %4654 = vmatpush1.bf16.msra.mxu0 %v3388
    %4655 = vmatprep.subr.bf16.mxu0 %v3393
    %4656 = vmatpush1.bf16.msra.mxu0 %v3392
    %4657 = vmatprep.subr.bf16.mxu0 %v3397
    %4658 = vmatpush1.bf16.msra.mxu0 %v3396
    %4659 = vmatprep.subr.bf16.mxu0 %v3401
    %4660 = vmatpush1.bf16.msra.mxu0 %v3400
    %4661 = vmatprep.mubr.bf16.mxu0 %v187
    %4662 = vmatmul.mubr.bf16.gmra.mrb[0].mxu0 %v186
    %v4663 = vpop.f32.mrb[0].mxu0
    %v4664 = vadd.f32 %v4623, %v4663
    %v4665 = vpop.f32.mrb[0].mxu0
    %v4666 = vadd.f32 %v4625, %v4665
    %v4667 = vpop.f32.mrb[0].mxu0
    %v4668 = vpop.f32.mrb[0].mxu0
    %4669 = vdwg.mxu0
    %4670 = vmatprep.subr.bf16.mxu0 %v3405
    %4671 = vmatpush1.bf16.msra.mxu0 %v3404
    %4672 = vmatprep.subr.bf16.mxu0 %v3409
    %4673 = vmatpush1.bf16.msra.mxu0 %v3408
    %4674 = vmatprep.subr.bf16.mxu0 %v3413
    %4675 = vmatpush1.bf16.msra.mxu0 %v3412
    %4676 = vmatprep.subr.bf16.mxu0 %v3417
    %4677 = vmatpush1.bf16.msra.mxu0 %v3416
    %4678 = vmatprep.subr.bf16.mxu0 %v3421
    %4679 = vmatpush1.bf16.msra.mxu0 %v3420
    %4680 = vmatprep.subr.bf16.mxu0 %v3425
    %4681 = vmatpush1.bf16.msra.mxu0 %v3424
    %4682 = vmatprep.subr.bf16.mxu0 %v3429
    %4683 = vmatpush1.bf16.msra.mxu0 %v3428
    %4684 = vmatprep.subr.bf16.mxu0 %v3433
    %4685 = vmatpush1.bf16.msra.mxu0 %v3432
    %4686 = vmatprep.subr.bf16.mxu0 %v3437
    %4687 = vmatpush1.bf16.msra.mxu0 %v3436
    %4688 = vmatprep.subr.bf16.mxu0 %v3441
    %4689 = vmatpush1.bf16.msra.mxu0 %v3440
    %4690 = vmatprep.subr.bf16.mxu0 %v3445
    %4691 = vmatpush1.bf16.msra.mxu0 %v3444
    %4692 = vmatprep.subr.bf16.mxu0 %v3449
    %4693 = vmatpush1.bf16.msra.mxu0 %v3448
    %4694 = vmatprep.subr.bf16.mxu0 %v3453
    %4695 = vmatpush1.bf16.msra.mxu0 %v3452
    %4696 = vmatprep.subr.bf16.mxu0 %v3457
    %4697 = vmatpush1.bf16.msra.mxu0 %v3456
    %4698 = vmatprep.subr.bf16.mxu0 %v3461
    %4699 = vmatpush1.bf16.msra.mxu0 %v3460
    %4700 = vmatprep.subr.bf16.mxu0 %v3465
    %4701 = vmatpush1.bf16.msra.mxu0 %v3464
    %4702 = vmatprep.mubr.bf16.mxu0 %v189
    %4703 = vmatmul.mubr.bf16.gmra.mrb[0].mxu0 %v188
    %v4704 = vpop.f32.mrb[0].mxu0
    %v4705 = vadd.f32 %v4664, %v4704
    %v4706 = vpop.f32.mrb[0].mxu0
    %v4707 = vadd.f32 %v4666, %v4706
    %v4708 = vpop.f32.mrb[0].mxu0
    %v4709 = vpop.f32.mrb[0].mxu0
    %4710 = vdwg.mxu0
    %4711 = vmatprep.subr.bf16.mxu0 %v3469
    %4712 = vmatpush1.bf16.msra.mxu0 %v3468
    %4713 = vmatprep.subr.bf16.mxu0 %v3473
    %4714 = vmatpush1.bf16.msra.mxu0 %v3472
    %4715 = vmatprep.subr.bf16.mxu0 %v3477
    %4716 = vmatpush1.bf16.msra.mxu0 %v3476
    %4717 = vmatprep.subr.bf16.mxu0 %v3481
    %4718 = vmatpush1.bf16.msra.mxu0 %v3480
    %4719 = vmatprep.subr.bf16.mxu0 %v3485
    %4720 = vmatpush1.bf16.msra.mxu0 %v3484
    %4721 = vmatprep.subr.bf16.mxu0 %v3489
    %4722 = vmatpush1.bf16.msra.mxu0 %v3488
    %4723 = vmatprep.subr.bf16.mxu0 %v3493
    %4724 = vmatpush1.bf16.msra.mxu0 %v3492
    %4725 = vmatprep.subr.bf16.mxu0 %v3497
    %4726 = vmatpush1.bf16.msra.mxu0 %v3496
    %4727 = vmatprep.subr.bf16.mxu0 %v3501
    %4728 = vmatpush1.bf16.msra.mxu0 %v3500
    %4729 = vmatprep.subr.bf16.mxu0 %v3505
    %4730 = vmatpush1.bf16.msra.mxu0 %v3504
    %4731 = vmatprep.subr.bf16.mxu0 %v3509
    %4732 = vmatpush1.bf16.msra.mxu0 %v3508
    %4733 = vmatprep.subr.bf16.mxu0 %v3513
    %4734 = vmatpush1.bf16.msra.mxu0 %v3512
    %4735 = vmatprep.subr.bf16.mxu0 %v3517
    %4736 = vmatpush1.bf16.msra.mxu0 %v3516
    %4737 = vmatprep.subr.bf16.mxu0 %v3521
    %4738 = vmatpush1.bf16.msra.mxu0 %v3520
    %4739 = vmatprep.subr.bf16.mxu0 %v3525
    %4740 = vmatpush1.bf16.msra.mxu0 %v3524
    %4741 = vmatprep.subr.bf16.mxu0 %v3529
    %4742 = vmatpush1.bf16.msra.mxu0 %v3528
    %4743 = vmatprep.mubr.bf16.mxu0 %v191
    %4744 = vmatmul.mubr.bf16.gmra.mrb[0].mxu0 %v190
    %v4745 = vpop.f32.mrb[0].mxu0
    %v4746 = vadd.f32 %v4705, %v4745
    %v4747 = vpop.f32.mrb[0].mxu0
    %v4748 = vadd.f32 %v4707, %v4747
    %v4749 = vpop.f32.mrb[0].mxu0
    %v4750 = vpop.f32.mrb[0].mxu0
    %4751 = vdwg.mxu0
    %4752 = vmatprep.subr.bf16.mxu0 %v3533
    %4753 = vmatpush1.bf16.msra.mxu0 %v3532
    %4754 = vmatprep.subr.bf16.mxu0 %v3537
    %4755 = vmatpush1.bf16.msra.mxu0 %v3536
    %4756 = vmatprep.subr.bf16.mxu0 %v3541
    %4757 = vmatpush1.bf16.msra.mxu0 %v3540
    %4758 = vmatprep.subr.bf16.mxu0 %v3545
    %4759 = vmatpush1.bf16.msra.mxu0 %v3544
    %4760 = vmatprep.subr.bf16.mxu0 %v3549
    %4761 = vmatpush1.bf16.msra.mxu0 %v3548
    %4762 = vmatprep.subr.bf16.mxu0 %v3553
    %4763 = vmatpush1.bf16.msra.mxu0 %v3552
    %4764 = vmatprep.subr.bf16.mxu0 %v3557
    %4765 = vmatpush1.bf16.msra.mxu0 %v3556
    %4766 = vmatprep.subr.bf16.mxu0 %v3561
    %4767 = vmatpush1.bf16.msra.mxu0 %v3560
    %4768 = vmatprep.subr.bf16.mxu0 %v3565
    %4769 = vmatpush1.bf16.msra.mxu0 %v3564
    %4770 = vmatprep.subr.bf16.mxu0 %v3569
    %4771 = vmatpush1.bf16.msra.mxu0 %v3568
    %4772 = vmatprep.subr.bf16.mxu0 %v3573
    %4773 = vmatpush1.bf16.msra.mxu0 %v3572
    %4774 = vmatprep.subr.bf16.mxu0 %v3577
    %4775 = vmatpush1.bf16.msra.mxu0 %v3576
    %4776 = vmatprep.subr.bf16.mxu0 %v3581
    %4777 = vmatpush1.bf16.msra.mxu0 %v3580
    %4778 = vmatprep.subr.bf16.mxu0 %v3585
    %4779 = vmatpush1.bf16.msra.mxu0 %v3584
    %4780 = vmatprep.subr.bf16.mxu0 %v3589
    %4781 = vmatpush1.bf16.msra.mxu0 %v3588
    %4782 = vmatprep.subr.bf16.mxu0 %v3593
    %4783 = vmatpush1.bf16.msra.mxu0 %v3592
    %4784 = vmatprep.mubr.bf16.mxu0 %v193
    %4785 = vmatmul.mubr.bf16.gmra.mrb[0].mxu0 %v192
    %v4786 = vpop.f32.mrb[0].mxu0
    %v4787 = vadd.f32 %v4746, %v4786
    %v4788 = vpop.f32.mrb[0].mxu0
    %v4789 = vadd.f32 %v4748, %v4788
    %v4790 = vpop.f32.mrb[0].mxu0
    %v4791 = vpop.f32.mrb[0].mxu0
    %4792 = vdwg.mxu0
    %4793 = vmatprep.subr.bf16.mxu0 %v3597
    %4794 = vmatpush1.bf16.msra.mxu0 %v3596
    %4795 = vmatprep.subr.bf16.mxu0 %v3601
    %4796 = vmatpush1.bf16.msra.mxu0 %v3600
    %4797 = vmatprep.subr.bf16.mxu0 %v3605
    %4798 = vmatpush1.bf16.msra.mxu0 %v3604
    %4799 = vmatprep.subr.bf16.mxu0 %v3609
    %4800 = vmatpush1.bf16.msra.mxu0 %v3608
    %4801 = vmatprep.subr.bf16.mxu0 %v3613
    %4802 = vmatpush1.bf16.msra.mxu0 %v3612
    %4803 = vmatprep.subr.bf16.mxu0 %v3617
    %4804 = vmatpush1.bf16.msra.mxu0 %v3616
    %4805 = vmatprep.subr.bf16.mxu0 %v3621
    %4806 = vmatpush1.bf16.msra.mxu0 %v3620
    %4807 = vmatprep.subr.bf16.mxu0 %v3625
    %4808 = vmatpush1.bf16.msra.mxu0 %v3624
    %4809 = vmatprep.subr.bf16.mxu0 %v3629
    %4810 = vmatpush1.bf16.msra.mxu0 %v3628
    %4811 = vmatprep.subr.bf16.mxu0 %v3633
    %4812 = vmatpush1.bf16.msra.mxu0 %v3632
    %4813 = vmatprep.subr.bf16.mxu0 %v3637
    %4814 = vmatpush1.bf16.msra.mxu0 %v3636
    %4815 = vmatprep.subr.bf16.mxu0 %v3641
    %4816 = vmatpush1.bf16.msra.mxu0 %v3640
    %4817 = vmatprep.subr.bf16.mxu0 %v3645
    %4818 = vmatpush1.bf16.msra.mxu0 %v3644
    %4819 = vmatprep.subr.bf16.mxu0 %v3649
    %4820 = vmatpush1.bf16.msra.mxu0 %v3648
    %4821 = vmatprep.subr.bf16.mxu0 %v3653
    %4822 = vmatpush1.bf16.msra.mxu0 %v3652
    %4823 = vmatprep.subr.bf16.mxu0 %v3657
    %4824 = vmatpush1.bf16.msra.mxu0 %v3656
    %4825 = vmatprep.mubr.bf16.mxu0 %v195
    %4826 = vmatmul.mubr.bf16.gmra.mrb[0].mxu0 %v194
    %v4827 = vpop.f32.mrb[0].mxu0
    %v4828 = vadd.f32 %v4787, %v4827
    %v4829 = vpop.f32.mrb[0].mxu0
    %v4830 = vadd.f32 %v4789, %v4829
    %v4831 = vpop.f32.mrb[0].mxu0
    %v4832 = vpop.f32.mrb[0].mxu0
    %4833 = vdwg.mxu0
    %4834 = vmatprep.subr.bf16.mxu0 %v3661
    %4835 = vmatpush1.bf16.msra.mxu0 %v3660
    %4836 = vmatprep.subr.bf16.mxu0 %v3665
    %4837 = vmatpush1.bf16.msra.mxu0 %v3664
    %4838 = vmatprep.subr.bf16.mxu0 %v3669
    %4839 = vmatpush1.bf16.msra.mxu0 %v3668
    %4840 = vmatprep.subr.bf16.mxu0 %v3673
    %4841 = vmatpush1.bf16.msra.mxu0 %v3672
    %4842 = vmatprep.subr.bf16.mxu0 %v3677
    %4843 = vmatpush1.bf16.msra.mxu0 %v3676
    %4844 = vmatprep.subr.bf16.mxu0 %v3681
    %4845 = vmatpush1.bf16.msra.mxu0 %v3680
    %4846 = vmatprep.subr.bf16.mxu0 %v3685
    %4847 = vmatpush1.bf16.msra.mxu0 %v3684
    %4848 = vmatprep.subr.bf16.mxu0 %v3689
    %4849 = vmatpush1.bf16.msra.mxu0 %v3688
    %4850 = vmatprep.subr.bf16.mxu0 %v3693
    %4851 = vmatpush1.bf16.msra.mxu0 %v3692
    %4852 = vmatprep.subr.bf16.mxu0 %v3697
    %4853 = vmatpush1.bf16.msra.mxu0 %v3696
    %4854 = vmatprep.subr.bf16.mxu0 %v3701
    %4855 = vmatpush1.bf16.msra.mxu0 %v3700
    %4856 = vmatprep.subr.bf16.mxu0 %v3705
    %4857 = vmatpush1.bf16.msra.mxu0 %v3704
    %4858 = vmatprep.subr.bf16.mxu0 %v3709
    %4859 = vmatpush1.bf16.msra.mxu0 %v3708
    %4860 = vmatprep.subr.bf16.mxu0 %v3713
    %4861 = vmatpush1.bf16.msra.mxu0 %v3712
    %4862 = vmatprep.subr.bf16.mxu0 %v3717
    %4863 = vmatpush1.bf16.msra.mxu0 %v3716
    %4864 = vmatprep.subr.bf16.mxu0 0
    %4865 = vmatpush1.bf16.msra.mxu0 0
    %4866 = vmatprep.mubr.bf16.mxu0 %v4422
    %4867 = vmatmul.mubr.bf16.gmra.mrb[0].mxu0 %v196
    %v4868 = vpop.f32.mrb[0].mxu0
    %v4869 = vadd.f32 %v4828, %v4868
    %v4870 = vpop.f32.mrb[0].mxu0
    %v4871 = vadd.f32 %v4830, %v4870
    %v4872 = vpop.f32.mrb[0].mxu0
    %v4873 = vpop.f32.mrb[0].mxu0
    %4874 = vdwg.mxu0
    %4875 = vmatprep.subr.bf16.mxu0 %v3023
    %4876 = vmatpush1.bf16.msra.mxu0 %v3022
    %4877 = vmatprep.subr.bf16.mxu0 %v3027
    %4878 = vmatpush1.bf16.msra.mxu0 %v3026
    %4879 = vmatprep.subr.bf16.mxu0 %v3031
    %4880 = vmatpush1.bf16.msra.mxu0 %v3030
    %4881 = vmatprep.subr.bf16.mxu0 %v3035
    %4882 = vmatpush1.bf16.msra.mxu0 %v3034
    %4883 = vmatprep.subr.bf16.mxu0 %v3039
    %4884 = vmatpush1.bf16.msra.mxu0 %v3038
    %4885 = vmatprep.subr.bf16.mxu0 %v3043
    %4886 = vmatpush1.bf16.msra.mxu0 %v3042
    %4887 = vmatprep.subr.bf16.mxu0 %v3047
    %4888 = vmatpush1.bf16.msra.mxu0 %v3046
    %4889 = vmatprep.subr.bf16.mxu0 %v3051
    %4890 = vmatpush1.bf16.msra.mxu0 %v3050
    %4891 = vmatprep.subr.bf16.mxu0 %v3055
    %4892 = vmatpush1.bf16.msra.mxu0 %v3054
    %4893 = vmatprep.subr.bf16.mxu0 %v3059
    %4894 = vmatpush1.bf16.msra.mxu0 %v3058
    %4895 = vmatprep.subr.bf16.mxu0 %v3063
    %4896 = vmatpush1.bf16.msra.mxu0 %v3062
    %4897 = vmatprep.subr.bf16.mxu0 %v3067
    %4898 = vmatpush1.bf16.msra.mxu0 %v3066
    %4899 = vmatprep.subr.bf16.mxu0 %v3071
    %4900 = vmatpush1.bf16.msra.mxu0 %v3070
    %4901 = vmatprep.subr.bf16.mxu0 %v3075
    %4902 = vmatpush1.bf16.msra.mxu0 %v3074
    %4903 = vmatprep.subr.bf16.mxu0 %v3079
    %4904 = vmatpush1.bf16.msra.mxu0 %v3078
    %4905 = vmatprep.subr.bf16.mxu0 %v3083
    %4906 = vmatpush1.bf16.msra.mxu0 %v3082
    %4907 = vmatprep.mubr.bf16.mxu0 %v177
    %4908 = vmatmul.mubr.bf16.gmra.mrb[0].mxu0 %v176
    %v4909 = vpop.f32.mrb[0].mxu0
    %v4910 = vadd.f32 %v911, %v4909
    %v4911 = vpop.f32.mrb[0].mxu0
    %v4912 = vadd.f32 %v915, %v4911
    %v4913 = vpop.f32.mrb[0].mxu0
    %v4914 = vpop.f32.mrb[0].mxu0
    %4915 = vdwg.mxu0
    %4916 = vmatprep.subr.bf16.mxu0 %v3087
    %4917 = vmatpush1.bf16.msra.mxu0 %v3086
    %4918 = vmatprep.subr.bf16.mxu0 %v3091
    %4919 = vmatpush1.bf16.msra.mxu0 %v3090
    %4920 = vmatprep.subr.bf16.mxu0 %v3095
    %4921 = vmatpush1.bf16.msra.mxu0 %v3094
    %4922 = vmatprep.subr.bf16.mxu0 %v3099
    %4923 = vmatpush1.bf16.msra.mxu0 %v3098
    %4924 = vmatprep.subr.bf16.mxu0 %v3103
    %4925 = vmatpush1.bf16.msra.mxu0 %v3102
    %4926 = vmatprep.subr.bf16.mxu0 %v3107
    %4927 = vmatpush1.bf16.msra.mxu0 %v3106
    %4928 = vmatprep.subr.bf16.mxu0 %v3111
    %4929 = vmatpush1.bf16.msra.mxu0 %v3110
    %4930 = vmatprep.subr.bf16.mxu0 %v3115
    %4931 = vmatpush1.bf16.msra.mxu0 %v3114
    %4932 = vmatprep.subr.bf16.mxu0 %v3119
    %4933 = vmatpush1.bf16.msra.mxu0 %v3118
    %4934 = vmatprep.subr.bf16.mxu0 %v3123
    %4935 = vmatpush1.bf16.msra.mxu0 %v3122
    %4936 = vmatprep.subr.bf16.mxu0 %v3127
    %4937 = vmatpush1.bf16.msra.mxu0 %v3126
    %4938 = vmatprep.subr.bf16.mxu0 %v3131
    %4939 = vmatpush1.bf16.msra.mxu0 %v3130
    %4940 = vmatprep.subr.bf16.mxu0 %v3135
    %4941 = vmatpush1.bf16.msra.mxu0 %v3134
    %4942 = vmatprep.subr.bf16.mxu0 %v3139
    %4943 = vmatpush1.bf16.msra.mxu0 %v3138
    %4944 = vmatprep.subr.bf16.mxu0 %v3143
    %4945 = vmatpush1.bf16.msra.mxu0 %v3142
    %4946 = vmatprep.subr.bf16.mxu0 %v3147
    %4947 = vmatpush1.bf16.msra.mxu0 %v3146
    %4948 = vmatprep.mubr.bf16.mxu0 %v179
    %4949 = vmatmul.mubr.bf16.gmra.mrb[0].mxu0 %v178
    %v4950 = vpop.f32.mrb[0].mxu0
    %v4951 = vadd.f32 %v4910, %v4950
    %v4952 = vpop.f32.mrb[0].mxu0
    %v4953 = vadd.f32 %v4912, %v4952
    %v4954 = vpop.f32.mrb[0].mxu0
    %v4955 = vpop.f32.mrb[0].mxu0
    %4956 = vdwg.mxu0
    %4957 = vmatprep.subr.bf16.mxu0 %v3151
    %4958 = vmatpush1.bf16.msra.mxu0 %v3150
    %4959 = vmatprep.subr.bf16.mxu0 %v3155
    %4960 = vmatpush1.bf16.msra.mxu0 %v3154
    %4961 = vmatprep.subr.bf16.mxu0 %v3159
    %4962 = vmatpush1.bf16.msra.mxu0 %v3158
    %4963 = vmatprep.subr.bf16.mxu0 %v3163
    %4964 = vmatpush1.bf16.msra.mxu0 %v3162
    %4965 = vmatprep.subr.bf16.mxu0 %v3167
    %4966 = vmatpush1.bf16.msra.mxu0 %v3166
    %4967 = vmatprep.subr.bf16.mxu0 %v3171
    %4968 = vmatpush1.bf16.msra.mxu0 %v3170
    %4969 = vmatprep.subr.bf16.mxu0 %v3175
    %4970 = vmatpush1.bf16.msra.mxu0 %v3174
    %4971 = vmatprep.subr.bf16.mxu0 %v3179
    %4972 = vmatpush1.bf16.msra.mxu0 %v3178
    %4973 = vmatprep.subr.bf16.mxu0 %v3183
    %4974 = vmatpush1.bf16.msra.mxu0 %v3182
    %4975 = vmatprep.subr.bf16.mxu0 %v3187
    %4976 = vmatpush1.bf16.msra.mxu0 %v3186
    %4977 = vmatprep.subr.bf16.mxu0 %v3191
    %4978 = vmatpush1.bf16.msra.mxu0 %v3190
    %4979 = vmatprep.subr.bf16.mxu0 %v3195
    %4980 = vmatpush1.bf16.msra.mxu0 %v3194
    %4981 = vmatprep.subr.bf16.mxu0 %v3199
    %4982 = vmatpush1.bf16.msra.mxu0 %v3198
    %4983 = vmatprep.subr.bf16.mxu0 %v3203
    %4984 = vmatpush1.bf16.msra.mxu0 %v3202
    %4985 = vmatprep.subr.bf16.mxu0 %v3207
    %4986 = vmatpush1.bf16.msra.mxu0 %v3206
    %4987 = vmatprep.subr.bf16.mxu0 %v3211
    %4988 = vmatpush1.bf16.msra.mxu0 %v3210
    %4989 = vmatprep.mubr.bf16.mxu0 %v181
    %4990 = vmatmul.mubr.bf16.gmra.mrb[0].mxu0 %v180
    %v4991 = vpop.f32.mrb[0].mxu0
    %v4992 = vadd.f32 %v4951, %v4991
    %v4993 = vpop.f32.mrb[0].mxu0
    %v4994 = vadd.f32 %v4953, %v4993
    %v4995 = vpop.f32.mrb[0].mxu0
    %v4996 = vpop.f32.mrb[0].mxu0
    %4997 = vdwg.mxu0
    %4998 = vmatprep.subr.bf16.mxu0 %v3215
    %4999 = vmatpush1.bf16.msra.mxu0 %v3214
    %5000 = vmatprep.subr.bf16.mxu0 %v3219
    %5001 = vmatpush1.bf16.msra.mxu0 %v3218
    %5002 = vmatprep.subr.bf16.mxu0 %v3223
    %5003 = vmatpush1.bf16.msra.mxu0 %v3222
    %5004 = vmatprep.subr.bf16.mxu0 %v3227
    %5005 = vmatpush1.bf16.msra.mxu0 %v3226
    %5006 = vmatprep.subr.bf16.mxu0 %v3231
    %5007 = vmatpush1.bf16.msra.mxu0 %v3230
    %5008 = vmatprep.subr.bf16.mxu0 %v3235
    %5009 = vmatpush1.bf16.msra.mxu0 %v3234
    %5010 = vmatprep.subr.bf16.mxu0 %v3239
    %5011 = vmatpush1.bf16.msra.mxu0 %v3238
    %5012 = vmatprep.subr.bf16.mxu0 %v3243
    %5013 = vmatpush1.bf16.msra.mxu0 %v3242
    %5014 = vmatprep.subr.bf16.mxu0 %v3247
    %5015 = vmatpush1.bf16.msra.mxu0 %v3246
    %5016 = vmatprep.subr.bf16.mxu0 %v3251
    %5017 = vmatpush1.bf16.msra.mxu0 %v3250
    %5018 = vmatprep.subr.bf16.mxu0 %v3255
    %5019 = vmatpush1.bf16.msra.mxu0 %v3254
    %5020 = vmatprep.subr.bf16.mxu0 %v3259
    %5021 = vmatpush1.bf16.msra.mxu0 %v3258
    %5022 = vmatprep.subr.bf16.mxu0 %v3263
    %5023 = vmatpush1.bf16.msra.mxu0 %v3262
    %5024 = vmatprep.subr.bf16.mxu0 %v3267
    %5025 = vmatpush1.bf16.msra.mxu0 %v3266
    %5026 = vmatprep.subr.bf16.mxu0 %v3271
    %5027 = vmatpush1.bf16.msra.mxu0 %v3270
    %5028 = vmatprep.subr.bf16.mxu0 %v3275
    %5029 = vmatpush1.bf16.msra.mxu0 %v3274
    %5030 = vmatprep.mubr.bf16.mxu0 %v183
    %5031 = vmatmul.mubr.bf16.gmra.mrb[0].mxu0 %v182
    %v5032 = vpop.f32.mrb[0].mxu0
    %v5033 = vadd.f32 %v4992, %v5032
    %v5034 = vpop.f32.mrb[0].mxu0
    %v5035 = vadd.f32 %v4994, %v5034
    %v5036 = vpop.f32.mrb[0].mxu0
    %v5037 = vpop.f32.mrb[0].mxu0
    %5038 = vdwg.mxu0
    %5039 = vmatprep.subr.bf16.mxu0 %v3279
    %5040 = vmatpush1.bf16.msra.mxu0 %v3278
    %5041 = vmatprep.subr.bf16.mxu0 %v3283
    %5042 = vmatpush1.bf16.msra.mxu0 %v3282
    %5043 = vmatprep.subr.bf16.mxu0 %v3287
    %5044 = vmatpush1.bf16.msra.mxu0 %v3286
    %5045 = vmatprep.subr.bf16.mxu0 %v3291
    %5046 = vmatpush1.bf16.msra.mxu0 %v3290
    %5047 = vmatprep.subr.bf16.mxu0 %v3295
    %5048 = vmatpush1.bf16.msra.mxu0 %v3294
    %5049 = vmatprep.subr.bf16.mxu0 %v3299
    %5050 = vmatpush1.bf16.msra.mxu0 %v3298
    %5051 = vmatprep.subr.bf16.mxu0 %v3303
    %5052 = vmatpush1.bf16.msra.mxu0 %v3302
    %5053 = vmatprep.subr.bf16.mxu0 %v3307
    %5054 = vmatpush1.bf16.msra.mxu0 %v3306
    %5055 = vmatprep.subr.bf16.mxu0 %v3311
    %5056 = vmatpush1.bf16.msra.mxu0 %v3310
    %5057 = vmatprep.subr.bf16.mxu0 %v3315
    %5058 = vmatpush1.bf16.msra.mxu0 %v3314
    %5059 = vmatprep.subr.bf16.mxu0 %v3319
    %5060 = vmatpush1.bf16.msra.mxu0 %v3318
    %5061 = vmatprep.subr.bf16.mxu0 %v3323
    %5062 = vmatpush1.bf16.msra.mxu0 %v3322
    %5063 = vmatprep.subr.bf16.mxu0 %v3327
    %5064 = vmatpush1.bf16.msra.mxu0 %v3326
    %5065 = vmatprep.subr.bf16.mxu0 %v3331
    %5066 = vmatpush1.bf16.msra.mxu0 %v3330
    %5067 = vmatprep.subr.bf16.mxu0 %v3335
    %5068 = vmatpush1.bf16.msra.mxu0 %v3334
    %5069 = vmatprep.subr.bf16.mxu0 %v3339
    %5070 = vmatpush1.bf16.msra.mxu0 %v3338
    %5071 = vmatprep.mubr.bf16.mxu0 %v185
    %5072 = vmatmul.mubr.bf16.gmra.mrb[0].mxu0 %v184
    %v5073 = vpop.f32.mrb[0].mxu0
    %v5074 = vadd.f32 %v5033, %v5073
    %v5075 = vpop.f32.mrb[0].mxu0
    %v5076 = vadd.f32 %v5035, %v5075
    %v5077 = vpop.f32.mrb[0].mxu0
    %v5078 = vpop.f32.mrb[0].mxu0
    %5079 = vdwg.mxu0
    %5080 = vmatprep.subr.bf16.mxu0 %v3343
    %5081 = vmatpush1.bf16.msra.mxu0 %v3342
    %5082 = vmatprep.subr.bf16.mxu0 %v3347
    %5083 = vmatpush1.bf16.msra.mxu0 %v3346
    %5084 = vmatprep.subr.bf16.mxu0 %v3351
    %5085 = vmatpush1.bf16.msra.mxu0 %v3350
    %5086 = vmatprep.subr.bf16.mxu0 %v3355
    %5087 = vmatpush1.bf16.msra.mxu0 %v3354
    %5088 = vmatprep.subr.bf16.mxu0 %v3359
    %5089 = vmatpush1.bf16.msra.mxu0 %v3358
    %5090 = vmatprep.subr.bf16.mxu0 %v3363
    %5091 = vmatpush1.bf16.msra.mxu0 %v3362
    %5092 = vmatprep.subr.bf16.mxu0 %v3367
    %5093 = vmatpush1.bf16.msra.mxu0 %v3366
    %5094 = vmatprep.subr.bf16.mxu0 %v3371
    %5095 = vmatpush1.bf16.msra.mxu0 %v3370
    %5096 = vmatprep.subr.bf16.mxu0 %v3375
    %5097 = vmatpush1.bf16.msra.mxu0 %v3374
    %5098 = vmatprep.subr.bf16.mxu0 %v3379
    %5099 = vmatpush1.bf16.msra.mxu0 %v3378
    %5100 = vmatprep.subr.bf16.mxu0 %v3383
    %5101 = vmatpush1.bf16.msra.mxu0 %v3382
    %5102 = vmatprep.subr.bf16.mxu0 %v3387
    %5103 = vmatpush1.bf16.msra.mxu0 %v3386
    %5104 = vmatprep.subr.bf16.mxu0 %v3391
    %5105 = vmatpush1.bf16.msra.mxu0 %v3390
    %5106 = vmatprep.subr.bf16.mxu0 %v3395
    %5107 = vmatpush1.bf16.msra.mxu0 %v3394
    %5108 = vmatprep.subr.bf16.mxu0 %v3399
    %5109 = vmatpush1.bf16.msra.mxu0 %v3398
    %5110 = vmatprep.subr.bf16.mxu0 %v3403
    %5111 = vmatpush1.bf16.msra.mxu0 %v3402
    %5112 = vmatprep.mubr.bf16.mxu0 %v187
    %5113 = vmatmul.mubr.bf16.gmra.mrb[0].mxu0 %v186
    %v5114 = vpop.f32.mrb[0].mxu0
    %v5115 = vadd.f32 %v5074, %v5114
    %v5116 = vpop.f32.mrb[0].mxu0
    %v5117 = vadd.f32 %v5076, %v5116
    %v5118 = vpop.f32.mrb[0].mxu0
    %v5119 = vpop.f32.mrb[0].mxu0
    %5120 = vdwg.mxu0
    %5121 = vmatprep.subr.bf16.mxu0 %v3407
    %5122 = vmatpush1.bf16.msra.mxu0 %v3406
    %5123 = vmatprep.subr.bf16.mxu0 %v3411
    %5124 = vmatpush1.bf16.msra.mxu0 %v3410
    %5125 = vmatprep.subr.bf16.mxu0 %v3415
    %5126 = vmatpush1.bf16.msra.mxu0 %v3414
    %5127 = vmatprep.subr.bf16.mxu0 %v3419
    %5128 = vmatpush1.bf16.msra.mxu0 %v3418
    %5129 = vmatprep.subr.bf16.mxu0 %v3423
    %5130 = vmatpush1.bf16.msra.mxu0 %v3422
    %5131 = vmatprep.subr.bf16.mxu0 %v3427
    %5132 = vmatpush1.bf16.msra.mxu0 %v3426
    %5133 = vmatprep.subr.bf16.mxu0 %v3431
    %5134 = vmatpush1.bf16.msra.mxu0 %v3430
    %5135 = vmatprep.subr.bf16.mxu0 %v3435
    %5136 = vmatpush1.bf16.msra.mxu0 %v3434
    %5137 = vmatprep.subr.bf16.mxu0 %v3439
    %5138 = vmatpush1.bf16.msra.mxu0 %v3438
    %5139 = vmatprep.subr.bf16.mxu0 %v3443
    %5140 = vmatpush1.bf16.msra.mxu0 %v3442
    %5141 = vmatprep.subr.bf16.mxu0 %v3447
    %5142 = vmatpush1.bf16.msra.mxu0 %v3446
    %5143 = vmatprep.subr.bf16.mxu0 %v3451
    %5144 = vmatpush1.bf16.msra.mxu0 %v3450
    %5145 = vmatprep.subr.bf16.mxu0 %v3455
    %5146 = vmatpush1.bf16.msra.mxu0 %v3454
    %5147 = vmatprep.subr.bf16.mxu0 %v3459
    %5148 = vmatpush1.bf16.msra.mxu0 %v3458
    %5149 = vmatprep.subr.bf16.mxu0 %v3463
    %5150 = vmatpush1.bf16.msra.mxu0 %v3462
    %5151 = vmatprep.subr.bf16.mxu0 %v3467
    %5152 = vmatpush1.bf16.msra.mxu0 %v3466
    %5153 = vmatprep.mubr.bf16.mxu0 %v189
    %5154 = vmatmul.mubr.bf16.gmra.mrb[0].mxu0 %v188
    %v5155 = vpop.f32.mrb[0].mxu0
    %v5156 = vadd.f32 %v5115, %v5155
    %v5157 = vpop.f32.mrb[0].mxu0
    %v5158 = vadd.f32 %v5117, %v5157
    %v5159 = vpop.f32.mrb[0].mxu0
    %v5160 = vpop.f32.mrb[0].mxu0
    %5161 = vdwg.mxu0
    %5162 = vmatprep.subr.bf16.mxu0 %v3471
    %5163 = vmatpush1.bf16.msra.mxu0 %v3470
    %5164 = vmatprep.subr.bf16.mxu0 %v3475
    %5165 = vmatpush1.bf16.msra.mxu0 %v3474
    %5166 = vmatprep.subr.bf16.mxu0 %v3479
    %5167 = vmatpush1.bf16.msra.mxu0 %v3478
    %5168 = vmatprep.subr.bf16.mxu0 %v3483
    %5169 = vmatpush1.bf16.msra.mxu0 %v3482
    %5170 = vmatprep.subr.bf16.mxu0 %v3487
    %5171 = vmatpush1.bf16.msra.mxu0 %v3486
    %5172 = vmatprep.subr.bf16.mxu0 %v3491
    %5173 = vmatpush1.bf16.msra.mxu0 %v3490
    %5174 = vmatprep.subr.bf16.mxu0 %v3495
    %5175 = vmatpush1.bf16.msra.mxu0 %v3494
    %5176 = vmatprep.subr.bf16.mxu0 %v3499
    %5177 = vmatpush1.bf16.msra.mxu0 %v3498
    %5178 = vmatprep.subr.bf16.mxu0 %v3503
    %5179 = vmatpush1.bf16.msra.mxu0 %v3502
    %5180 = vmatprep.subr.bf16.mxu0 %v3507
    %5181 = vmatpush1.bf16.msra.mxu0 %v3506
    %5182 = vmatprep.subr.bf16.mxu0 %v3511
    %5183 = vmatpush1.bf16.msra.mxu0 %v3510
    %5184 = vmatprep.subr.bf16.mxu0 %v3515
    %5185 = vmatpush1.bf16.msra.mxu0 %v3514
    %5186 = vmatprep.subr.bf16.mxu0 %v3519
    %5187 = vmatpush1.bf16.msra.mxu0 %v3518
    %5188 = vmatprep.subr.bf16.mxu0 %v3523
    %5189 = vmatpush1.bf16.msra.mxu0 %v3522
    %5190 = vmatprep.subr.bf16.mxu0 %v3527
    %5191 = vmatpush1.bf16.msra.mxu0 %v3526
    %5192 = vmatprep.subr.bf16.mxu0 %v3531
    %5193 = vmatpush1.bf16.msra.mxu0 %v3530
    %5194 = vmatprep.mubr.bf16.mxu0 %v191
    %5195 = vmatmul.mubr.bf16.gmra.mrb[0].mxu0 %v190
    %v5196 = vpop.f32.mrb[0].mxu0
    %v5197 = vadd.f32 %v5156, %v5196
    %v5198 = vpop.f32.mrb[0].mxu0
    %v5199 = vadd.f32 %v5158, %v5198
    %v5200 = vpop.f32.mrb[0].mxu0
    %v5201 = vpop.f32.mrb[0].mxu0
    %5202 = vdwg.mxu0
    %5203 = vmatprep.subr.bf16.mxu0 %v3535
    %5204 = vmatpush1.bf16.msra.mxu0 %v3534
    %5205 = vmatprep.subr.bf16.mxu0 %v3539
    %5206 = vmatpush1.bf16.msra.mxu0 %v3538
    %5207 = vmatprep.subr.bf16.mxu0 %v3543
    %5208 = vmatpush1.bf16.msra.mxu0 %v3542
    %5209 = vmatprep.subr.bf16.mxu0 %v3547
    %5210 = vmatpush1.bf16.msra.mxu0 %v3546
    %5211 = vmatprep.subr.bf16.mxu0 %v3551
    %5212 = vmatpush1.bf16.msra.mxu0 %v3550
    %5213 = vmatprep.subr.bf16.mxu0 %v3555
    %5214 = vmatpush1.bf16.msra.mxu0 %v3554
    %5215 = vmatprep.subr.bf16.mxu0 %v3559
    %5216 = vmatpush1.bf16.msra.mxu0 %v3558
    %5217 = vmatprep.subr.bf16.mxu0 %v3563
    %5218 = vmatpush1.bf16.msra.mxu0 %v3562
    %5219 = vmatprep.subr.bf16.mxu0 %v3567
    %5220 = vmatpush1.bf16.msra.mxu0 %v3566
    %5221 = vmatprep.subr.bf16.mxu0 %v3571
    %5222 = vmatpush1.bf16.msra.mxu0 %v3570
    %5223 = vmatprep.subr.bf16.mxu0 %v3575
    %5224 = vmatpush1.bf16.msra.mxu0 %v3574
    %5225 = vmatprep.subr.bf16.mxu0 %v3579
    %5226 = vmatpush1.bf16.msra.mxu0 %v3578
    %5227 = vmatprep.subr.bf16.mxu0 %v3583
    %5228 = vmatpush1.bf16.msra.mxu0 %v3582
    %5229 = vmatprep.subr.bf16.mxu0 %v3587
    %5230 = vmatpush1.bf16.msra.mxu0 %v3586
    %5231 = vmatprep.subr.bf16.mxu0 %v3591
    %5232 = vmatpush1.bf16.msra.mxu0 %v3590
    %5233 = vmatprep.subr.bf16.mxu0 %v3595
    %5234 = vmatpush1.bf16.msra.mxu0 %v3594
    %5235 = vmatprep.mubr.bf16.mxu0 %v193
    %5236 = vmatmul.mubr.bf16.gmra.mrb[0].mxu0 %v192
    %v5237 = vpop.f32.mrb[0].mxu0
    %v5238 = vadd.f32 %v5197, %v5237
    %v5239 = vpop.f32.mrb[0].mxu0
    %v5240 = vadd.f32 %v5199, %v5239
    %v5241 = vpop.f32.mrb[0].mxu0
    %v5242 = vpop.f32.mrb[0].mxu0
    %5243 = vdwg.mxu0
    %5244 = vmatprep.subr.bf16.mxu0 %v3599
    %5245 = vmatpush1.bf16.msra.mxu0 %v3598
    %5246 = vmatprep.subr.bf16.mxu0 %v3603
    %5247 = vmatpush1.bf16.msra.mxu0 %v3602
    %5248 = vmatprep.subr.bf16.mxu0 %v3607
    %5249 = vmatpush1.bf16.msra.mxu0 %v3606
    %5250 = vmatprep.subr.bf16.mxu0 %v3611
    %5251 = vmatpush1.bf16.msra.mxu0 %v3610
    %5252 = vmatprep.subr.bf16.mxu0 %v3615
    %5253 = vmatpush1.bf16.msra.mxu0 %v3614
    %5254 = vmatprep.subr.bf16.mxu0 %v3619
    %5255 = vmatpush1.bf16.msra.mxu0 %v3618
    %5256 = vmatprep.subr.bf16.mxu0 %v3623
    %5257 = vmatpush1.bf16.msra.mxu0 %v3622
    %5258 = vmatprep.subr.bf16.mxu0 %v3627
    %5259 = vmatpush1.bf16.msra.mxu0 %v3626
    %5260 = vmatprep.subr.bf16.mxu0 %v3631
    %5261 = vmatpush1.bf16.msra.mxu0 %v3630
    %5262 = vmatprep.subr.bf16.mxu0 %v3635
    %5263 = vmatpush1.bf16.msra.mxu0 %v3634
    %5264 = vmatprep.subr.bf16.mxu0 %v3639
    %5265 = vmatpush1.bf16.msra.mxu0 %v3638
    %5266 = vmatprep.subr.bf16.mxu0 %v3643
    %5267 = vmatpush1.bf16.msra.mxu0 %v3642
    %5268 = vmatprep.subr.bf16.mxu0 %v3647
    %5269 = vmatpush1.bf16.msra.mxu0 %v3646
    %5270 = vmatprep.subr.bf16.mxu0 %v3651
    %5271 = vmatpush1.bf16.msra.mxu0 %v3650
    %5272 = vmatprep.subr.bf16.mxu0 %v3655
    %5273 = vmatpush1.bf16.msra.mxu0 %v3654
    %5274 = vmatprep.subr.bf16.mxu0 %v3659
    %5275 = vmatpush1.bf16.msra.mxu0 %v3658
    %5276 = vmatprep.mubr.bf16.mxu0 %v195
    %5277 = vmatmul.mubr.bf16.gmra.mrb[0].mxu0 %v194
    %v5278 = vpop.f32.mrb[0].mxu0
    %v5279 = vadd.f32 %v5238, %v5278
    %v5280 = vpop.f32.mrb[0].mxu0
    %v5281 = vadd.f32 %v5240, %v5280
    %v5282 = vpop.f32.mrb[0].mxu0
    %v5283 = vpop.f32.mrb[0].mxu0
    %5284 = vdwg.mxu0
    %5285 = vmatprep.subr.bf16.mxu0 %v3663
    %5286 = vmatpush1.bf16.msra.mxu0 %v3662
    %5287 = vmatprep.subr.bf16.mxu0 %v3667
    %5288 = vmatpush1.bf16.msra.mxu0 %v3666
    %5289 = vmatprep.subr.bf16.mxu0 %v3671
    %5290 = vmatpush1.bf16.msra.mxu0 %v3670
    %5291 = vmatprep.subr.bf16.mxu0 %v3675
    %5292 = vmatpush1.bf16.msra.mxu0 %v3674
    %5293 = vmatprep.subr.bf16.mxu0 %v3679
    %5294 = vmatpush1.bf16.msra.mxu0 %v3678
    %5295 = vmatprep.subr.bf16.mxu0 %v3683
    %5296 = vmatpush1.bf16.msra.mxu0 %v3682
    %5297 = vmatprep.subr.bf16.mxu0 %v3687
    %5298 = vmatpush1.bf16.msra.mxu0 %v3686
    %5299 = vmatprep.subr.bf16.mxu0 %v3691
    %5300 = vmatpush1.bf16.msra.mxu0 %v3690
    %5301 = vmatprep.subr.bf16.mxu0 %v3695
    %5302 = vmatpush1.bf16.msra.mxu0 %v3694
    %5303 = vmatprep.subr.bf16.mxu0 %v3699
    %5304 = vmatpush1.bf16.msra.mxu0 %v3698
    %5305 = vmatprep.subr.bf16.mxu0 %v3703
    %5306 = vmatpush1.bf16.msra.mxu0 %v3702
    %5307 = vmatprep.subr.bf16.mxu0 %v3707
    %5308 = vmatpush1.bf16.msra.mxu0 %v3706
    %5309 = vmatprep.subr.bf16.mxu0 %v3711
    %5310 = vmatpush1.bf16.msra.mxu0 %v3710
    %5311 = vmatprep.subr.bf16.mxu0 %v3715
    %5312 = vmatpush1.bf16.msra.mxu0 %v3714
    %5313 = vmatprep.subr.bf16.mxu0 %v3719
    %5314 = vmatpush1.bf16.msra.mxu0 %v3718
    %5315 = vmatprep.subr.bf16.mxu0 0
    %5316 = vmatpush1.bf16.msra.mxu0 0
    %5317 = vmatprep.mubr.bf16.mxu0 %v4422
    %5318 = vmatmul.mubr.bf16.gmra.mrb[0].mxu0 %v196
    %v5319 = vpop.f32.mrb[0].mxu0
    %v5320 = vadd.f32 %v5279, %v5319
    %v5321 = vpop.f32.mrb[0].mxu0
    %v5322 = vadd.f32 %v5281, %v5321
    %v5323 = vpop.f32.mrb[0].mxu0
    %v5324 = vpop.f32.mrb[0].mxu0
    %5325 = vdwg.mxu0
    %vm5326 = vcmp.gt.f32.partialorder %v4869, 0.0
    %vm5327 = vcmp.gt.f32.partialorder %v4871, 0.0
    %vm5328 = vcmp.gt.f32.partialorder %v5320, 0.0
    %vm5329 = vcmp.gt.f32.partialorder %v5322, 0.0
    %v5330 = vstv %s151
    %v5331 = vmul.f32 %v5330, %v4869
    %v5332 = vmul.f32 %v5330, %v4871
    %v5333 = vmul.f32 %v5330, %v5320
    %v5334 = vmul.f32 %v5330, %v5322
    %v5335 = vsel %vm5326, %v4869, %v5331
    %v5336 = vsel %vm5327, %v4871, %v5332
    %v5337 = vsel %vm5328, %v5320, %v5333
    %v5338 = vsel %vm5329, %v5322, %v5334
    %v5339 = vpack.c.bf16 %v5335, %v5335
    %v5340 = vpack.c.bf16 %v5336, %v5336
    %v5341 = vpack.c.bf16 %v5337, %v5337
    %v5342 = vpack.c.bf16 %v5338, %v5338
    %v5343 = vld [vmem:[#allocation10] sm:$0xff]
    %v5344 = vld [vmem:[#allocation10 + $0x8] sm:$0xff]
    %v5345 = vld [vmem:[#allocation10 + $0x10] sm:$0xff]
    %v5346 = vld [vmem:[#allocation10 + $0x18] sm:$0xff]
    %v5347 = vld [vmem:[#allocation10 + $0x20] sm:$0xff]
    %v5348 = vld [vmem:[#allocation10 + $0x28] sm:$0xff]
    %v5349 = vld [vmem:[#allocation10 + $0x30] sm:$0xff]
    %v5350 = vld [vmem:[#allocation10 + $0x38] sm:$0xff]
    %v5351 = vld [vmem:[#allocation10 + $0x40] sm:$0xff]
    %v5352 = vld [vmem:[#allocation10 + $0x48] sm:$0xff]
    %v5353 = vld [vmem:[#allocation10 + $0x50] sm:$0xff]
    %v5354 = vld [vmem:[#allocation10 + $0x58] sm:$0xff]
    %v5355 = vld [vmem:[#allocation10 + $0x60] sm:$0xff]
    %v5356 = vld [vmem:[#allocation10 + $0x68] sm:$0xff]
    %v5357 = vld [vmem:[#allocation10 + $0x70] sm:$0xff]
    %v5358 = vld [vmem:[#allocation10 + $0x78] sm:$0xff]
    %v5359 = vld [vmem:[#allocation10 + $0x80] sm:$0xff]
    %v5360 = vld [vmem:[#allocation10 + $0x88] sm:$0xff]
    %v5361 = vld [vmem:[#allocation10 + $0x90] sm:$0xff]
    %v5362 = vld [vmem:[#allocation10 + $0x98] sm:$0xff]
    %v5363 = vld [vmem:[#allocation10 + $0xa0] sm:$0xff]
    %v5364 = vld [vmem:[#allocation10 + $0xa8] sm:$0xff]
    %v5365 = vld [vmem:[#allocation10 + $0xb0] sm:$0xff]
    %v5366 = vld [vmem:[#allocation10 + $0xb8] sm:$0xff]
    %v5367 = vld [vmem:[#allocation10 + $0xc0] sm:$0xff]
    %v5368 = vld [vmem:[#allocation10 + $0xc8] sm:$0xff]
    %v5369 = vld [vmem:[#allocation10 + $0xd0] sm:$0xff]
    %v5370 = vld [vmem:[#allocation10 + $0xd8] sm:$0xff]
    %v5371 = vld [vmem:[#allocation10 + $0xe0] sm:$0xff]
    %v5372 = vld [vmem:[#allocation10 + $0xe8] sm:$0xff]
    %v5373 = vld [vmem:[#allocation10 + $0xf0] sm:$0xff]
    %v5374 = vld [vmem:[#allocation10 + $0xf8] sm:$0xff]
    %v5375 = vld [vmem:[#allocation10 + $0x100] sm:$0xff]
    %v5376 = vld [vmem:[#allocation10 + $0x108] sm:$0xff]
    %v5377 = vld [vmem:[#allocation10 + $0x110] sm:$0xff]
    %v5378 = vld [vmem:[#allocation10 + $0x118] sm:$0xff]
    %v5379 = vld [vmem:[#allocation10 + $0x120] sm:$0xff]
    %v5380 = vld [vmem:[#allocation10 + $0x128] sm:$0xff]
    %v5381 = vld [vmem:[#allocation10 + $0x130] sm:$0xff]
    %v5382 = vld [vmem:[#allocation10 + $0x138] sm:$0xff]
    %v5383 = vld [vmem:[#allocation10 + $0x140] sm:$0xff]
    %v5384 = vld [vmem:[#allocation10 + $0x148] sm:$0xff]
    %v5385 = vld [vmem:[#allocation10 + $0x150] sm:$0xff]
    %v5386 = vld [vmem:[#allocation10 + $0x158] sm:$0xff]
    %v5387 = vld [vmem:[#allocation10 + $0x160] sm:$0xff]
    %v5388 = vld [vmem:[#allocation10 + $0x168] sm:$0xff]
    %v5389 = vld [vmem:[#allocation10 + $0x170] sm:$0xff]
    %v5390 = vld [vmem:[#allocation10 + $0x178] sm:$0xff]
    %v5391 = vld [vmem:[#allocation10 + $0x180] sm:$0xff]
    %v5392 = vld [vmem:[#allocation10 + $0x188] sm:$0xff]
    %v5393 = vld [vmem:[#allocation10 + $0x190] sm:$0xff]
    %v5394 = vld [vmem:[#allocation10 + $0x198] sm:$0xff]
    %v5395 = vld [vmem:[#allocation10 + $0x1a0] sm:$0xff]
    %v5396 = vld [vmem:[#allocation10 + $0x1a8] sm:$0xff]
    %v5397 = vld [vmem:[#allocation10 + $0x1b0] sm:$0xff]
    %v5398 = vld [vmem:[#allocation10 + $0x1b8] sm:$0xff]
    %v5399 = vld [vmem:[#allocation10 + $0x1c0] sm:$0xff]
    %v5400 = vld [vmem:[#allocation10 + $0x1c8] sm:$0xff]
    %v5401 = vld [vmem:[#allocation10 + $0x1d0] sm:$0xff]
    %v5402 = vld [vmem:[#allocation10 + $0x1d8] sm:$0xff]
    %v5403 = vld [vmem:[#allocation10 + $0x1e0] sm:$0xff]
    %v5404 = vld [vmem:[#allocation10 + $0x1e8] sm:$0xff]
    %v5405 = vld [vmem:[#allocation10 + $0x1f0] sm:$0xff]
    %v5406 = vld [vmem:[#allocation10 + $0x1f8] sm:$0xff]
    %v5407 = vld [vmem:[#allocation12] sm:$0x3]
    %v5409 = vlaneseq
    %v5410 = vshrl.u32 %v5409, 7
    %v5411 = vsub.s32 0, %v5410
    %v5412 = vrot.slane %v5407, %v5411
    %v5413 = vlaneseq
    %v5414 = vshrl.u32 %v5413, 7
    %v5415 = vsub.s32 1, %v5414
    %v5416 = vrot.slane %v5407, %v5415
    %v5483 = vunpack.c.l.b16 %v5343
    %v5484 = vunpack.c.h.b16 %v5343
    %v5485 = vunpack.c.l.b16 %v5344
    %v5486 = vunpack.c.h.b16 %v5344
    %v5487 = vunpack.c.l.b16 %v5345
    %v5488 = vunpack.c.h.b16 %v5345
    %v5489 = vunpack.c.l.b16 %v5346
    %v5490 = vunpack.c.h.b16 %v5346
    %v5491 = vunpack.c.l.b16 %v5347
    %v5492 = vunpack.c.h.b16 %v5347
    %v5493 = vunpack.c.l.b16 %v5348
    %v5494 = vunpack.c.h.b16 %v5348
    %v5495 = vunpack.c.l.b16 %v5349
    %v5496 = vunpack.c.h.b16 %v5349
    %v5497 = vunpack.c.l.b16 %v5350
    %v5498 = vunpack.c.h.b16 %v5350
    %v5499 = vunpack.c.l.b16 %v5351
    %v5500 = vunpack.c.h.b16 %v5351
    %v5501 = vunpack.c.l.b16 %v5352
    %v5502 = vunpack.c.h.b16 %v5352
    %v5503 = vunpack.c.l.b16 %v5353
    %v5504 = vunpack.c.h.b16 %v5353
    %v5505 = vunpack.c.l.b16 %v5354
    %v5506 = vunpack.c.h.b16 %v5354
    %v5507 = vunpack.c.l.b16 %v5355
    %v5508 = vunpack.c.h.b16 %v5355
    %v5509 = vunpack.c.l.b16 %v5356
    %v5510 = vunpack.c.h.b16 %v5356
    %v5511 = vunpack.c.l.b16 %v5357
    %v5512 = vunpack.c.h.b16 %v5357
    %v5513 = vunpack.c.l.b16 %v5358
    %v5514 = vunpack.c.h.b16 %v5358
    %v5515 = vunpack.c.l.b16 %v5359
    %v5516 = vunpack.c.h.b16 %v5359
    %v5517 = vunpack.c.l.b16 %v5360
    %v5518 = vunpack.c.h.b16 %v5360
    %v5519 = vunpack.c.l.b16 %v5361
    %v5520 = vunpack.c.h.b16 %v5361
    %v5521 = vunpack.c.l.b16 %v5362
    %v5522 = vunpack.c.h.b16 %v5362
    %v5523 = vunpack.c.l.b16 %v5363
    %v5524 = vunpack.c.h.b16 %v5363
    %v5525 = vunpack.c.l.b16 %v5364
    %v5526 = vunpack.c.h.b16 %v5364
    %v5527 = vunpack.c.l.b16 %v5365
    %v5528 = vunpack.c.h.b16 %v5365
    %v5529 = vunpack.c.l.b16 %v5366
    %v5530 = vunpack.c.h.b16 %v5366
    %v5531 = vunpack.c.l.b16 %v5367
    %v5532 = vunpack.c.h.b16 %v5367
    %v5533 = vunpack.c.l.b16 %v5368
    %v5534 = vunpack.c.h.b16 %v5368
    %v5535 = vunpack.c.l.b16 %v5369
    %v5536 = vunpack.c.h.b16 %v5369
    %v5537 = vunpack.c.l.b16 %v5370
    %v5538 = vunpack.c.h.b16 %v5370
    %v5539 = vunpack.c.l.b16 %v5371
    %v5540 = vunpack.c.h.b16 %v5371
    %v5541 = vunpack.c.l.b16 %v5372
    %v5542 = vunpack.c.h.b16 %v5372
    %v5543 = vunpack.c.l.b16 %v5373
    %v5544 = vunpack.c.h.b16 %v5373
    %v5545 = vunpack.c.l.b16 %v5374
    %v5546 = vunpack.c.h.b16 %v5374
    %v5547 = vunpack.c.l.b16 %v5375
    %v5548 = vunpack.c.h.b16 %v5375
    %v5549 = vunpack.c.l.b16 %v5376
    %v5550 = vunpack.c.h.b16 %v5376
    %v5551 = vunpack.c.l.b16 %v5377
    %v5552 = vunpack.c.h.b16 %v5377
    %v5553 = vunpack.c.l.b16 %v5378
    %v5554 = vunpack.c.h.b16 %v5378
    %v5555 = vunpack.c.l.b16 %v5379
    %v5556 = vunpack.c.h.b16 %v5379
    %v5557 = vunpack.c.l.b16 %v5380
    %v5558 = vunpack.c.h.b16 %v5380
    %v5559 = vunpack.c.l.b16 %v5381
    %v5560 = vunpack.c.h.b16 %v5381
    %v5561 = vunpack.c.l.b16 %v5382
    %v5562 = vunpack.c.h.b16 %v5382
    %v5563 = vunpack.c.l.b16 %v5383
    %v5564 = vunpack.c.h.b16 %v5383
    %v5565 = vunpack.c.l.b16 %v5384
    %v5566 = vunpack.c.h.b16 %v5384
    %v5567 = vunpack.c.l.b16 %v5385
    %v5568 = vunpack.c.h.b16 %v5385
    %v5569 = vunpack.c.l.b16 %v5386
    %v5570 = vunpack.c.h.b16 %v5386
    %v5571 = vunpack.c.l.b16 %v5387
    %v5572 = vunpack.c.h.b16 %v5387
    %v5573 = vunpack.c.l.b16 %v5388
    %v5574 = vunpack.c.h.b16 %v5388
    %v5575 = vunpack.c.l.b16 %v5389
    %v5576 = vunpack.c.h.b16 %v5389
    %v5577 = vunpack.c.l.b16 %v5390
    %v5578 = vunpack.c.h.b16 %v5390
    %v5579 = vunpack.c.l.b16 %v5391
    %v5580 = vunpack.c.h.b16 %v5391
    %v5581 = vunpack.c.l.b16 %v5392
    %v5582 = vunpack.c.h.b16 %v5392
    %v5583 = vunpack.c.l.b16 %v5393
    %v5584 = vunpack.c.h.b16 %v5393
    %v5585 = vunpack.c.l.b16 %v5394
    %v5586 = vunpack.c.h.b16 %v5394
    %v5587 = vunpack.c.l.b16 %v5395
    %v5588 = vunpack.c.h.b16 %v5395
    %v5589 = vunpack.c.l.b16 %v5396
    %v5590 = vunpack.c.h.b16 %v5396
    %v5591 = vunpack.c.l.b16 %v5397
    %v5592 = vunpack.c.h.b16 %v5397
    %v5593 = vunpack.c.l.b16 %v5398
    %v5594 = vunpack.c.h.b16 %v5398
    %v5595 = vunpack.c.l.b16 %v5399
    %v5596 = vunpack.c.h.b16 %v5399
    %v5597 = vunpack.c.l.b16 %v5400
    %v5598 = vunpack.c.h.b16 %v5400
    %v5599 = vunpack.c.l.b16 %v5401
    %v5600 = vunpack.c.h.b16 %v5401
    %v5601 = vunpack.c.l.b16 %v5402
    %v5602 = vunpack.c.h.b16 %v5402
    %v5603 = vunpack.c.l.b16 %v5403
    %v5604 = vunpack.c.h.b16 %v5403
    %v5605 = vunpack.c.l.b16 %v5404
    %v5606 = vunpack.c.h.b16 %v5404
    %v5607 = vunpack.c.l.b16 %v5405
    %v5608 = vunpack.c.h.b16 %v5405
    %v5609 = vunpack.c.l.b16 %v5406
    %v5610 = vunpack.c.h.b16 %v5406
    %v5611 = vpack.c.b16 %v5485, %v5483
    %v5612 = vpack.c.b16 %v5486, %v5484
    %v5613 = vpack.c.b16 %v5489, %v5487
    %v5614 = vpack.c.b16 %v5490, %v5488
    %v5615 = vpack.c.b16 %v5493, %v5491
    %v5616 = vpack.c.b16 %v5494, %v5492
    %v5617 = vpack.c.b16 %v5497, %v5495
    %v5618 = vpack.c.b16 %v5498, %v5496
    %v5619 = vpack.c.b16 %v5501, %v5499
    %v5620 = vpack.c.b16 %v5502, %v5500
    %v5621 = vpack.c.b16 %v5505, %v5503
    %v5622 = vpack.c.b16 %v5506, %v5504
    %v5623 = vpack.c.b16 %v5509, %v5507
    %v5624 = vpack.c.b16 %v5510, %v5508
    %v5625 = vpack.c.b16 %v5513, %v5511
    %v5626 = vpack.c.b16 %v5514, %v5512
    %v5627 = vpack.c.b16 %v5517, %v5515
    %v5628 = vpack.c.b16 %v5518, %v5516
    %v5629 = vpack.c.b16 %v5521, %v5519
    %v5630 = vpack.c.b16 %v5522, %v5520
    %v5631 = vpack.c.b16 %v5525, %v5523
    %v5632 = vpack.c.b16 %v5526, %v5524
    %v5633 = vpack.c.b16 %v5529, %v5527
    %v5634 = vpack.c.b16 %v5530, %v5528
    %v5635 = vpack.c.b16 %v5533, %v5531
    %v5636 = vpack.c.b16 %v5534, %v5532
    %v5637 = vpack.c.b16 %v5537, %v5535
    %v5638 = vpack.c.b16 %v5538, %v5536
    %v5639 = vpack.c.b16 %v5541, %v5539
    %v5640 = vpack.c.b16 %v5542, %v5540
    %v5641 = vpack.c.b16 %v5545, %v5543
    %v5642 = vpack.c.b16 %v5546, %v5544
    %v5643 = vpack.c.b16 %v5549, %v5547
    %v5644 = vpack.c.b16 %v5550, %v5548
    %v5645 = vpack.c.b16 %v5553, %v5551
    %v5646 = vpack.c.b16 %v5554, %v5552
    %v5647 = vpack.c.b16 %v5557, %v5555
    %v5648 = vpack.c.b16 %v5558, %v5556
    %v5649 = vpack.c.b16 %v5561, %v5559
    %v5650 = vpack.c.b16 %v5562, %v5560
    %v5651 = vpack.c.b16 %v5565, %v5563
    %v5652 = vpack.c.b16 %v5566, %v5564
    %v5653 = vpack.c.b16 %v5569, %v5567
    %v5654 = vpack.c.b16 %v5570, %v5568
    %v5655 = vpack.c.b16 %v5573, %v5571
    %v5656 = vpack.c.b16 %v5574, %v5572
    %v5657 = vpack.c.b16 %v5577, %v5575
    %v5658 = vpack.c.b16 %v5578, %v5576
    %v5659 = vpack.c.b16 %v5581, %v5579
    %v5660 = vpack.c.b16 %v5582, %v5580
    %v5661 = vpack.c.b16 %v5585, %v5583
    %v5662 = vpack.c.b16 %v5586, %v5584
    %v5663 = vpack.c.b16 %v5589, %v5587
    %v5664 = vpack.c.b16 %v5590, %v5588
    %v5665 = vpack.c.b16 %v5593, %v5591
    %v5666 = vpack.c.b16 %v5594, %v5592
    %v5667 = vpack.c.b16 %v5597, %v5595
    %v5668 = vpack.c.b16 %v5598, %v5596
    %v5669 = vpack.c.b16 %v5601, %v5599
    %v5670 = vpack.c.b16 %v5602, %v5600
    %v5671 = vpack.c.b16 %v5605, %v5603
    %v5672 = vpack.c.b16 %v5606, %v5604
    %v5673 = vpack.c.b16 %v5609, %v5607
    %v5674 = vpack.c.b16 %v5610, %v5608
    %5739 = vmatprep.subr.bf16.mxu0 %v5612
    %5740 = vmatpush1.bf16.msra.mxu0 %v5611
    %5741 = vmatprep.subr.bf16.mxu0 %v5614
    %5742 = vmatpush1.bf16.msra.mxu0 %v5613
    %5743 = vmatprep.subr.bf16.mxu0 %v5616
    %5744 = vmatpush1.bf16.msra.mxu0 %v5615
    %5745 = vmatprep.subr.bf16.mxu0 %v5618
    %5746 = vmatpush1.bf16.msra.mxu0 %v5617
    %5747 = vmatprep.subr.bf16.mxu0 %v5620
    %5748 = vmatpush1.bf16.msra.mxu0 %v5619
    %5749 = vmatprep.subr.bf16.mxu0 %v5622
    %5750 = vmatpush1.bf16.msra.mxu0 %v5621
    %5751 = vmatprep.subr.bf16.mxu0 %v5624
    %5752 = vmatpush1.bf16.msra.mxu0 %v5623
    %5753 = vmatprep.subr.bf16.mxu0 %v5626
    %5754 = vmatpush1.bf16.msra.mxu0 %v5625
    %5755 = vmatprep.subr.bf16.mxu0 %v5628
    %5756 = vmatpush1.bf16.msra.mxu0 %v5627
    %5757 = vmatprep.subr.bf16.mxu0 %v5630
    %5758 = vmatpush1.bf16.msra.mxu0 %v5629
    %5759 = vmatprep.subr.bf16.mxu0 %v5632
    %5760 = vmatpush1.bf16.msra.mxu0 %v5631
    %5761 = vmatprep.subr.bf16.mxu0 %v5634
    %5762 = vmatpush1.bf16.msra.mxu0 %v5633
    %5763 = vmatprep.subr.bf16.mxu0 %v5636
    %5764 = vmatpush1.bf16.msra.mxu0 %v5635
    %5765 = vmatprep.subr.bf16.mxu0 %v5638
    %5766 = vmatpush1.bf16.msra.mxu0 %v5637
    %5767 = vmatprep.subr.bf16.mxu0 %v5640
    %5768 = vmatpush1.bf16.msra.mxu0 %v5639
    %5769 = vmatprep.subr.bf16.mxu0 %v5642
    %5770 = vmatpush1.bf16.msra.mxu0 %v5641
    %5771 = vmatprep.mubr.bf16.mxu0 %v5340
    %5772 = vmatmul.mubr.bf16.gmra.mrb[0].mxu0 %v5339
    %v5773 = vpop.f32.mrb[0].mxu0
    %v5774 = vadd.f32 %v5412, %v5773
    %v5775 = vpop.f32.mrb[0].mxu0
    %v5776 = vadd.f32 %v5416, %v5775
    %v5777 = vpop.f32.mrb[0].mxu0
    %v5778 = vpop.f32.mrb[0].mxu0
    %5779 = vdwg.mxu0
    %5780 = vmatprep.subr.bf16.mxu0 %v5644
    %5781 = vmatpush1.bf16.msra.mxu0 %v5643
    %5782 = vmatprep.subr.bf16.mxu0 %v5646
    %5783 = vmatpush1.bf16.msra.mxu0 %v5645
    %5784 = vmatprep.subr.bf16.mxu0 %v5648
    %5785 = vmatpush1.bf16.msra.mxu0 %v5647
    %5786 = vmatprep.subr.bf16.mxu0 %v5650
    %5787 = vmatpush1.bf16.msra.mxu0 %v5649
    %5788 = vmatprep.subr.bf16.mxu0 %v5652
    %5789 = vmatpush1.bf16.msra.mxu0 %v5651
    %5790 = vmatprep.subr.bf16.mxu0 %v5654
    %5791 = vmatpush1.bf16.msra.mxu0 %v5653
    %5792 = vmatprep.subr.bf16.mxu0 %v5656
    %5793 = vmatpush1.bf16.msra.mxu0 %v5655
    %5794 = vmatprep.subr.bf16.mxu0 %v5658
    %5795 = vmatpush1.bf16.msra.mxu0 %v5657
    %5796 = vmatprep.subr.bf16.mxu0 %v5660
    %5797 = vmatpush1.bf16.msra.mxu0 %v5659
    %5798 = vmatprep.subr.bf16.mxu0 %v5662
    %5799 = vmatpush1.bf16.msra.mxu0 %v5661
    %5800 = vmatprep.subr.bf16.mxu0 %v5664
    %5801 = vmatpush1.bf16.msra.mxu0 %v5663
    %5802 = vmatprep.subr.bf16.mxu0 %v5666
    %5803 = vmatpush1.bf16.msra.mxu0 %v5665
    %5804 = vmatprep.subr.bf16.mxu0 %v5668
    %5805 = vmatpush1.bf16.msra.mxu0 %v5667
    %5806 = vmatprep.subr.bf16.mxu0 %v5670
    %5807 = vmatpush1.bf16.msra.mxu0 %v5669
    %5808 = vmatprep.subr.bf16.mxu0 %v5672
    %5809 = vmatpush1.bf16.msra.mxu0 %v5671
    %5810 = vmatprep.subr.bf16.mxu0 %v5674
    %5811 = vmatpush1.bf16.msra.mxu0 %v5673
    %5812 = vmatprep.mubr.bf16.mxu0 %v5342
    %5813 = vmatmul.mubr.bf16.gmra.mrb[0].mxu0 %v5341
    %v5814 = vpop.f32.mrb[0].mxu0
    %v5815 = vadd.f32 %v5774, %v5814
    %v5816 = vpop.f32.mrb[0].mxu0
    %v5817 = vadd.f32 %v5776, %v5816
    %v5818 = vpop.f32.mrb[0].mxu0
    %v5819 = vpop.f32.mrb[0].mxu0
    %5820 = vdwg.mxu0
    %vm5821 = vcmp.gt.f32.partialorder %v5815, 0.0
    %vm5822 = vcmp.gt.f32.partialorder %v5817, 0.0
    %v5823 = vstv %s152
    %v5824 = vmul.f32 %v5823, %v5815
    %v5825 = vmul.f32 %v5823, %v5817
    %v5826 = vsel %vm5821, %v5815, %v5824
    %v5827 = vsel %vm5822, %v5817, %v5825
    %v5828 = vpack.c.bf16 %v5826, %v5826
    %v5829 = vpack.c.bf16 %v5827, %v5827
    %v5830 = vld [vmem:[#allocation13] sm:$0xf]
    %v5831 = vld [vmem:[#allocation13 + $0x4] sm:$0xf]
    %v5832 = vld [vmem:[#allocation13 + $0x8] sm:$0xf]
    %v5833 = vld [vmem:[#allocation13 + $0xc] sm:$0xf]
    %v5834 = vld [vmem:[#allocation13 + $0x10] sm:$0xf]
    %v5835 = vld [vmem:[#allocation13 + $0x14] sm:$0xf]
    %v5836 = vld [vmem:[#allocation13 + $0x18] sm:$0xf]
    %v5837 = vld [vmem:[#allocation13 + $0x1c] sm:$0xf]
    %v5838 = vld [vmem:[#allocation13 + $0x20] sm:$0xf]
    %v5839 = vld [vmem:[#allocation13 + $0x24] sm:$0xf]
    %v5840 = vld [vmem:[#allocation13 + $0x28] sm:$0xf]
    %v5841 = vld [vmem:[#allocation13 + $0x2c] sm:$0xf]
    %v5842 = vld [vmem:[#allocation13 + $0x30] sm:$0xf]
    %v5843 = vld [vmem:[#allocation13 + $0x34] sm:$0xf]
    %v5844 = vld [vmem:[#allocation13 + $0x38] sm:$0xf]
    %v5845 = vld [vmem:[#allocation13 + $0x3c] sm:$0xf]
    %v5846 = vld [vmem:[#allocation13 + $0x40] sm:$0xf]
    %v5847 = vld [vmem:[#allocation13 + $0x44] sm:$0xf]
    %v5848 = vld [vmem:[#allocation13 + $0x48] sm:$0xf]
    %v5849 = vld [vmem:[#allocation13 + $0x4c] sm:$0xf]
    %v5850 = vld [vmem:[#allocation13 + $0x50] sm:$0xf]
    %v5851 = vld [vmem:[#allocation13 + $0x54] sm:$0xf]
    %v5852 = vld [vmem:[#allocation13 + $0x58] sm:$0xf]
    %v5853 = vld [vmem:[#allocation13 + $0x5c] sm:$0xf]
    %v5854 = vld [vmem:[#allocation13 + $0x60] sm:$0xf]
    %v5855 = vld [vmem:[#allocation13 + $0x64] sm:$0xf]
    %v5856 = vld [vmem:[#allocation13 + $0x68] sm:$0xf]
    %v5857 = vld [vmem:[#allocation13 + $0x6c] sm:$0xf]
    %v5858 = vld [vmem:[#allocation13 + $0x70] sm:$0xf]
    %v5859 = vld [vmem:[#allocation13 + $0x74] sm:$0xf]
    %v5860 = vld [vmem:[#allocation13 + $0x78] sm:$0xf]
    %v5861 = vld [vmem:[#allocation13 + $0x7c] sm:$0xf]
    %v5862 = vld [vmem:[#allocation15] sm:$0x1]
    %v5864 = vlaneseq
    %v5865 = vshrl.u32 %v5864, 7
    %v5866 = vsub.s32 0, %v5865
    %v5867 = vrot.slane %v5862, %v5866
    %v5901 = vunpack.c.l.b16 %v5830
    %v5902 = vunpack.c.l.b16 %v5831
    %v5903 = vunpack.c.l.b16 %v5832
    %v5904 = vunpack.c.l.b16 %v5833
    %v5905 = vunpack.c.l.b16 %v5834
    %v5906 = vunpack.c.l.b16 %v5835
    %v5907 = vunpack.c.l.b16 %v5836
    %v5908 = vunpack.c.l.b16 %v5837
    %v5909 = vunpack.c.l.b16 %v5838
    %v5910 = vunpack.c.l.b16 %v5839
    %v5911 = vunpack.c.l.b16 %v5840
    %v5912 = vunpack.c.l.b16 %v5841
    %v5913 = vunpack.c.l.b16 %v5842
    %v5914 = vunpack.c.l.b16 %v5843
    %v5915 = vunpack.c.l.b16 %v5844
    %v5916 = vunpack.c.l.b16 %v5845
    %v5917 = vunpack.c.l.b16 %v5846
    %v5918 = vunpack.c.l.b16 %v5847
    %v5919 = vunpack.c.l.b16 %v5848
    %v5920 = vunpack.c.l.b16 %v5849
    %v5921 = vunpack.c.l.b16 %v5850
    %v5922 = vunpack.c.l.b16 %v5851
    %v5923 = vunpack.c.l.b16 %v5852
    %v5924 = vunpack.c.l.b16 %v5853
    %v5925 = vunpack.c.l.b16 %v5854
    %v5926 = vunpack.c.l.b16 %v5855
    %v5927 = vunpack.c.l.b16 %v5856
    %v5928 = vunpack.c.l.b16 %v5857
    %v5929 = vunpack.c.l.b16 %v5858
    %v5930 = vunpack.c.l.b16 %v5859
    %v5931 = vunpack.c.l.b16 %v5860
    %v5932 = vunpack.c.l.b16 %v5861
    %v5933 = vpack.c.b16 %v5902, %v5901
    %v5934 = vpack.c.b16 %v5904, %v5903
    %v5935 = vpack.c.b16 %v5906, %v5905
    %v5936 = vpack.c.b16 %v5908, %v5907
    %v5937 = vpack.c.b16 %v5910, %v5909
    %v5938 = vpack.c.b16 %v5912, %v5911
    %v5939 = vpack.c.b16 %v5914, %v5913
    %v5940 = vpack.c.b16 %v5916, %v5915
    %v5941 = vpack.c.b16 %v5918, %v5917
    %v5942 = vpack.c.b16 %v5920, %v5919
    %v5943 = vpack.c.b16 %v5922, %v5921
    %v5944 = vpack.c.b16 %v5924, %v5923
    %v5945 = vpack.c.b16 %v5926, %v5925
    %v5946 = vpack.c.b16 %v5928, %v5927
    %v5947 = vpack.c.b16 %v5930, %v5929
    %v5948 = vpack.c.b16 %v5932, %v5931
    %5965 = vmatprep.subr.bf16.mxu0 0
    %5966 = vmatpush1.bf16.msra.mxu0 %v5933
    %5967 = vmatprep.subr.bf16.mxu0 0
    %5968 = vmatpush1.bf16.msra.mxu0 %v5934
    %5969 = vmatprep.subr.bf16.mxu0 0
    %5970 = vmatpush1.bf16.msra.mxu0 %v5935
    %5971 = vmatprep.subr.bf16.mxu0 0
    %5972 = vmatpush1.bf16.msra.mxu0 %v5936
    %5973 = vmatprep.subr.bf16.mxu0 0
    %5974 = vmatpush1.bf16.msra.mxu0 %v5937
    %5975 = vmatprep.subr.bf16.mxu0 0
    %5976 = vmatpush1.bf16.msra.mxu0 %v5938
    %5977 = vmatprep.subr.bf16.mxu0 0
    %5978 = vmatpush1.bf16.msra.mxu0 %v5939
    %5979 = vmatprep.subr.bf16.mxu0 0
    %5980 = vmatpush1.bf16.msra.mxu0 %v5940
    %5981 = vmatprep.subr.bf16.mxu0 0
    %5982 = vmatpush1.bf16.msra.mxu0 %v5941
    %5983 = vmatprep.subr.bf16.mxu0 0
    %5984 = vmatpush1.bf16.msra.mxu0 %v5942
    %5985 = vmatprep.subr.bf16.mxu0 0
    %5986 = vmatpush1.bf16.msra.mxu0 %v5943
    %5987 = vmatprep.subr.bf16.mxu0 0
    %5988 = vmatpush1.bf16.msra.mxu0 %v5944
    %5989 = vmatprep.subr.bf16.mxu0 0
    %5990 = vmatpush1.bf16.msra.mxu0 %v5945
    %5991 = vmatprep.subr.bf16.mxu0 0
    %5992 = vmatpush1.bf16.msra.mxu0 %v5946
    %5993 = vmatprep.subr.bf16.mxu0 0
    %5994 = vmatpush1.bf16.msra.mxu0 %v5947
    %5995 = vmatprep.subr.bf16.mxu0 0
    %5996 = vmatpush1.bf16.msra.mxu0 %v5948
    %5997 = vmatprep.mubr.bf16.mxu0 %v5829
    %5998 = vmatmul.mubr.bf16.gmra.mrb[0].mxu0 %v5828
    %v5999 = vpop.f32.mrb[0].mxu0
    %v6000 = vadd.f32 %v5867, %v5999
    %v6001 = vpop.f32.mrb[0].mxu0
    %v6002 = vpop.f32.mrb[0].mxu0
    %v6003 = vpop.f32.mrb[0].mxu0
    %6004 = vdwg.mxu0
    %vm6005 = vcmp.gt.f32.partialorder %v6000, 0.0
    %v6006 = vstv %s153
    %v6007 = vmul.f32 %v6006, %v6000
    %v6008 = vsel %vm6005, %v6000, %v6007
    %v6009 = vpack.c.bf16 %v6008, %v6008
    %v6010 = vld [vmem:[#allocation16] sm:$0xf]
    %v6011 = vld [vmem:[#allocation16 + $0x4] sm:$0xf]
    %v6012 = vld [vmem:[#allocation16 + $0x8] sm:$0xf]
    %v6013 = vld [vmem:[#allocation16 + $0xc] sm:$0xf]
    %v6014 = vld [vmem:[#allocation16 + $0x10] sm:$0xf]
    %v6015 = vld [vmem:[#allocation16 + $0x14] sm:$0xf]
    %v6016 = vld [vmem:[#allocation16 + $0x18] sm:$0xf]
    %v6017 = vld [vmem:[#allocation16 + $0x1c] sm:$0xf]
    %v6018 = vld [vmem:[#allocation16 + $0x20] sm:$0xf]
    %v6019 = vld [vmem:[#allocation16 + $0x24] sm:$0xf]
    %v6020 = vld [vmem:[#allocation16 + $0x28] sm:$0xf]
    %v6021 = vld [vmem:[#allocation16 + $0x2c] sm:$0xf]
    %v6022 = vld [vmem:[#allocation16 + $0x30] sm:$0xf]
    %v6023 = vld [vmem:[#allocation16 + $0x34] sm:$0xf]
    %v6024 = vld [vmem:[#allocation16 + $0x38] sm:$0xf]
    %v6025 = vld [vmem:[#allocation16 + $0x3c] sm:$0xf]
    %v6026 = vld [vmem:[#allocation18] sm:$0x1]
    %v6028 = vlaneseq
    %v6029 = vshrl.u32 %v6028, 7
    %v6030 = vsub.s32 0, %v6029
    %v6031 = vrot.slane %v6026, %v6030
    %v6049 = vunpack.c.l.b16 %v6010
    %v6050 = vunpack.c.l.b16 %v6011
    %v6051 = vunpack.c.l.b16 %v6012
    %v6052 = vunpack.c.l.b16 %v6013
    %v6053 = vunpack.c.l.b16 %v6014
    %v6054 = vunpack.c.l.b16 %v6015
    %v6055 = vunpack.c.l.b16 %v6016
    %v6056 = vunpack.c.l.b16 %v6017
    %v6057 = vunpack.c.l.b16 %v6018
    %v6058 = vunpack.c.l.b16 %v6019
    %v6059 = vunpack.c.l.b16 %v6020
    %v6060 = vunpack.c.l.b16 %v6021
    %v6061 = vunpack.c.l.b16 %v6022
    %v6062 = vunpack.c.l.b16 %v6023
    %v6063 = vunpack.c.l.b16 %v6024
    %v6064 = vunpack.c.l.b16 %v6025
    %v6065 = vpack.c.b16 %v6050, %v6049
    %v6066 = vpack.c.b16 %v6052, %v6051
    %v6067 = vpack.c.b16 %v6054, %v6053
    %v6068 = vpack.c.b16 %v6056, %v6055
    %v6069 = vpack.c.b16 %v6058, %v6057
    %v6070 = vpack.c.b16 %v6060, %v6059
    %v6071 = vpack.c.b16 %v6062, %v6061
    %v6072 = vpack.c.b16 %v6064, %v6063
    %6081 = vmatprep.subr.bf16.mxu0 0
    %6082 = vmatpush1.bf16.msra.mxu0 %v6065
    %6083 = vmatprep.subr.bf16.mxu0 0
    %6084 = vmatpush1.bf16.msra.mxu0 %v6066
    %6085 = vmatprep.subr.bf16.mxu0 0
    %6086 = vmatpush1.bf16.msra.mxu0 %v6067
    %6087 = vmatprep.subr.bf16.mxu0 0
    %6088 = vmatpush1.bf16.msra.mxu0 %v6068
    %6089 = vmatprep.subr.bf16.mxu0 0
    %6090 = vmatpush1.bf16.msra.mxu0 %v6069
    %6091 = vmatprep.subr.bf16.mxu0 0
    %6092 = vmatpush1.bf16.msra.mxu0 %v6070
    %6093 = vmatprep.subr.bf16.mxu0 0
    %6094 = vmatpush1.bf16.msra.mxu0 %v6071
    %6095 = vmatprep.subr.bf16.mxu0 0
    %6096 = vmatpush1.bf16.msra.mxu0 %v6072
    %6097 = vmatprep.subr.bf16.mxu0 0
    %6098 = vmatpush1.bf16.msra.mxu0 0
    %6099 = vmatprep.subr.bf16.mxu0 0
    %6100 = vmatpush1.bf16.msra.mxu0 0
    %6101 = vmatprep.subr.bf16.mxu0 0
    %6102 = vmatpush1.bf16.msra.mxu0 0
    %6103 = vmatprep.subr.bf16.mxu0 0
    %6104 = vmatpush1.bf16.msra.mxu0 0
    %6105 = vmatprep.subr.bf16.mxu0 0
    %6106 = vmatpush1.bf16.msra.mxu0 0
    %6107 = vmatprep.subr.bf16.mxu0 0
    %6108 = vmatpush1.bf16.msra.mxu0 0
    %6109 = vmatprep.subr.bf16.mxu0 0
    %6110 = vmatpush1.bf16.msra.mxu0 0
    %6111 = vmatprep.subr.bf16.mxu0 0
    %6112 = vmatpush1.bf16.msra.mxu0 0
    %6113 = vmatprep.mubr.bf16.mxu0 0
    %6114 = vmatmul.mubr.bf16.gmra.mrb[0].mxu0 %v6009
    %v6115 = vpop.f32.mrb[0].mxu0
    %v6116 = vadd.f32 %v6031, %v6115
    %v6117 = vpop.f32.mrb[0].mxu0
    %v6118 = vpop.f32.mrb[0].mxu0
    %v6119 = vpop.f32.mrb[0].mxu0
    %6120 = vdwg.mxu0
    %6121 = vst [vmem:[#allocation19] sm:$0xff] %v6116
    // Predicated region
    $region74: #{tpu_custom_call.1} parent=1 // pred_check
      _
    $region75: #{tpu_custom_call.1} parent=1 // pred_check_branch
      %6123 = sbr.rel (0) target = $region77
    $region76: #{tpu_custom_call.1} parent=1 // pred_region
      %s6125 = ssub.s32 128, 128
      %6126 = vsyncadd [#allocation6], %s6125
      %s6128 = sshll.u32 [#allocation19], 4
      %s6129 = int_to_ptr.vmem [resolvable:$true] %s6128
      %6131 = dma.vmem_to_hbm [thread:$0]  %s6129, 128, %s10, [#allocation6]
    $region77: #{tpu_custom_call.1} parent=1 // pred_fallthru
      _
    // Predicated region
    $region78: #{tpu_custom_call.1} parent=1 // pred_check
      _
    $region79: #{tpu_custom_call.1} parent=1 // pred_check_branch
      %6133 = sbr.rel (0) target = $region81
    $region80: #{tpu_custom_call.1} parent=1 // pred_region
      %6134 = dma.done [#allocation6], 128
    $region81: #{tpu_custom_call.1} parent=1 // pred_fallthru
      _
    %6135 = vsyncpa [#allocation5], 1
    %6136 = vsyncpa [#allocation8], 1
    %6137 = vsyncpa [#allocation11], 1
    %6138 = vsyncpa [#allocation14], 1
    %6139 = vsyncpa [#allocation17], 1
    %6140 = vsyncpa [#allocation6], 1

</llo_original>
